<compile_context>
chip_gen: v7x
topology: tpu7x:2x2x1
jax: 0.10.0
libtpu: 0.0.40
codegen_flags: <defaults>
</compile_context>

<pallas_src>
import functools

import jax
import jax.numpy as jnp
from jax import lax
from jax.experimental import pallas as pl
from jax.experimental.pallas import tpu as pltpu


# --------------------------------------------------------------------------
# In-kernel helpers
# --------------------------------------------------------------------------
def _im2col_3x3(xpad, stride, h_out, w_out):
    """xpad: (B, Hp, Wp, C) f32 value (zero halo included).

    Returns the im2col patch matrix (B*h_out*w_out, 9*C), tap-major /
    channel-minor so it matches an HWIO weight reshaped to (9*C, Cout).
    """
    b, _, _, c = xpad.shape
    taps = []
    for kh in range(3):
        for kw in range(3):
            if stride == 1:
                patch = xpad[:, kh:kh + h_out, kw:kw + w_out, :]
            else:
                # NOTE: strided slice (stride=2 path) is correct but not
                # optimal on TPU; tests below use stride=1.
                patch = lax.slice(
                    xpad, (0, kh, kw, 0),
                    (b, kh + stride * (h_out - 1) + 1,
                     kw + stride * (w_out - 1) + 1, c),
                    strides=(1, stride, stride, 1))
            taps.append(patch)
    patches = jnp.concatenate(taps, axis=-1)          # (B, ho, wo, 9*C)
    return patches.reshape(b * h_out * w_out, 9 * c)


# --------------------------------------------------------------------------
# Fused BasicBlock kernel: relu(bn2(conv2(relu(bn1(conv1 x)))) + shortcut(x))
# --------------------------------------------------------------------------
def _fused_block_kernel(*refs, stride, h, w, cin, cout, h_out, w_out,
                        b_blk, has_shortcut, use_bf16):
    if has_shortcut:
        (x_ref, w1_ref, b1_ref, w2_ref, b2_ref, wsc_ref, bsc_ref,
         o_ref, xpad_ref, ypad_ref) = refs
    else:
        (x_ref, w1_ref, b1_ref, w2_ref, b2_ref,
         o_ref, xpad_ref, ypad_ref) = refs
        wsc_ref = bsc_ref = None

    mm_dtype = jnp.bfloat16 if use_bf16 else jnp.float32

    # Zero the padded scratch (establishes the zero halo).  Cheap (a few KiB);
    # done every step so it is safe under megacore grid partitioning.
    xpad_ref[...] = jnp.zeros_like(xpad_ref)
    ypad_ref[...] = jnp.zeros_like(ypad_ref)

    # Input block, and its copy into the padded scratch interior.
    x = x_ref[...].astype(jnp.float32)                       # (B, H, W, Cin)
    xpad_ref[:, 1:h + 1, 1:w + 1, :] = x

    m = b_blk * h_out * w_out

    # ---- conv1 (3x3, stride) + BN1 (scale pre-folded into w1) + ReLU ------
    p1 = _im2col_3x3(xpad_ref[...], stride, h_out, w_out)     # (M, 9*Cin)
    acc1 = jnp.dot(p1.astype(mm_dtype), w1_ref[...].astype(mm_dtype),
                   preferred_element_type=jnp.float32)        # (M, Cout)
    out1 = jnp.maximum(acc1 + b1_ref[...], 0.0)
    ypad_ref[:, 1:h_out + 1, 1:w_out + 1, :] = out1.reshape(
        b_blk, h_out, w_out, cout)

    # ---- shortcut ----------------------------------------------------------
    if has_shortcut:
        if stride == 1:
            xs = x
        else:
            xs = lax.slice(x, (0, 0, 0, 0),
                           (b_blk, stride * (h_out - 1) + 1,
                            stride * (w_out - 1) + 1, cin),
                           strides=(1, stride, stride, 1))
        res = jnp.dot(xs.reshape(m, cin).astype(mm_dtype),
                      wsc_ref[...].astype(mm_dtype),
                      preferred_element_type=jnp.float32) + bsc_ref[...]
    else:
        # identity shortcut: requires stride == 1 and cin == cout
        res = x.reshape(m, cout)

    # ---- conv2 (3x3, stride 1) + BN2 + residual add + ReLU -----------------
    p2 = _im2col_3x3(ypad_ref[...], 1, h_out, w_out)          # (M, 9*Cout)
    acc2 = jnp.dot(p2.astype(mm_dtype), w2_ref[...].astype(mm_dtype),
                   preferred_element_type=jnp.float32)
    out = jnp.maximum(acc2 + b2_ref[...] + res, 0.0)

    o_ref[...] = out.reshape(b_blk, h_out, w_out, cout).astype(o_ref.dtype)


# --------------------------------------------------------------------------
# Wrapper
# --------------------------------------------------------------------------
def _pick_batch_block(batch, max_blk=8):
    """Largest divisor of batch <= max_blk keeping >= 2 grid steps (v7x has
    2 TensorCores; a 1-step grid would idle one of them)."""
    best = 1
    for b in range(1, min(batch, max_blk) + 1):
        if batch % b == 0 and (batch // b >= 2 or batch == b == 1):
            best = b
    return best


def basic_block_forward(x_nchw, params, stride=1, use_bf16_matmul=True):
    """Forward pass of BasicBlock.  x is NCHW (PyTorch layout)."""
    x = jnp.transpose(x_nchw, (0, 2, 3, 1))                  # NCHW -> NHWC
    batch, h, w, cin = x.shape
    cout = params["s1"].shape[0]
    h_out = (h - 1) // stride + 1
    w_out = (w - 1) // stride + 1
    has_shortcut = params.get("wscf") is not None
    if not has_shortcut:
        assert stride == 1 and cin == cout, "identity shortcut shape mismatch"

    b_blk = _pick_batch_block(batch)
    grid = (batch // b_blk,)

    kernel = functools.partial(
        _fused_block_kernel, stride=stride, h=h, w=w, cin=cin, cout=cout,
        h_out=h_out, w_out=w_out, b_blk=b_blk,
        has_shortcut=has_shortcut, use_bf16=use_bf16_matmul)

    def replicated(shape):
        return pl.BlockSpec(shape, lambda b, _s=shape: (0,) * len(_s))

    in_specs = [
        pl.BlockSpec((b_blk, h, w, cin), lambda b: (b, 0, 0, 0)),   # x
        replicated((9 * cin, cout)),                                # w1 folded
        replicated((1, cout)),                                      # bias1
        replicated((9 * cout, cout)),                               # w2 folded
        replicated((1, cout)),                                      # bias2
    ]
    args = [x, params["w1f"], params["b1f"], params["w2f"], params["b2f"]]
    if has_shortcut:
        in_specs += [replicated((cin, cout)), replicated((1, cout))]
        args += [params["wscf"], params["bscf"]]

    out = pl.pallas_call(
        kernel,
        out_shape=jax.ShapeDtypeStruct((batch, h_out, w_out, cout), x.dtype),
        grid_spec=pltpu.PrefetchScalarGridSpec(
            num_scalar_prefetch=0,
            grid=grid,
            in_specs=in_specs,
            out_specs=pl.BlockSpec((b_blk, h_out, w_out, cout),
                                   lambda b: (b, 0, 0, 0)),
            scratch_shapes=[
                # padded input and padded conv1 activation, VMEM-resident
                pltpu.VMEM((b_blk, h + 2, w + 2, cin), jnp.float32),
                pltpu.VMEM((b_blk, h_out + 2, w_out + 2, cout), jnp.float32),
            ]),
        compiler_params=pltpu.CompilerParams(
            dimension_semantics=("parallel",),
            # Tiny blocks; 32 MiB is safely below every generation's physical
            # VMEM (incl. v7x's 64 MiB) while lifting v5e's 16 MiB default.
            vmem_limit_bytes=32 * 1024 * 1024),
    )(*args)
    return jnp.transpose(out, (0, 3, 1, 2))                  # NHWC -> NCHW


# --------------------------------------------------------------------------
# Deterministic parameter init (shapes from the module's __init__)
# BN scale is folded into the conv weights here, once, on the host.
# --------------------------------------------------------------------------
def init_basic_block_params(key, in_planes, planes, stride=1, eps=1e-5):
    keys = jax.random.split(key, 6)

    def conv_w(k, cin, cout, ksize):
        w_oihw = 0.1 * jax.random.normal(k, (cout, cin, ksize, ksize),
                                         jnp.float32)
        return jnp.transpose(w_oihw, (2, 3, 1, 0))  # -> HWIO

    def bn_fold(k, c):
        gamma = 1.0 + 0.1 * jax.random.normal(k, (c,), jnp.float32)
        beta = 0.05 * jnp.arange(c, dtype=jnp.float32)
        mean = 0.01 * jnp.arange(c, dtype=jnp.float32)
        var = 1.0 + 0.1 * jnp.abs(
            jax.random.normal(jax.random.fold_in(k, 1), (c,), jnp.float32))
        scale = gamma / jnp.sqrt(var + eps)
        bias = beta - mean * scale
        return scale, bias

    w1 = conv_w(keys[0], in_planes, planes, 3)
    w2 = conv_w(keys[1], planes, planes, 3)
    s1, b1 = bn_fold(keys[2], planes)
    s2, b2 = bn_fold(keys[3], planes)

    params = {
        # raw (for the lax.conv reference)
        "w1_hwio": w1, "s1": s1, "b1": b1,
        "w2_hwio": w2, "s2": s2, "b2": b2,
        # BN scale folded into conv weights, reshaped for im2col (9*Cin, Cout)
        "w1f": (w1 * s1).reshape(9 * in_planes, planes),
        "b1f": b1.reshape(1, planes),
        "w2f": (w2 * s2).reshape(9 * planes, planes),
        "b2f": b2.reshape(1, planes),
        "wscf": None,
    }
    if stride != 1 or in_planes != planes:
        wsc = conv_w(keys[4], in_planes, planes, 1)
        ssc, bsc = bn_fold(keys[5], planes)
        params.update({
            "w_sc_hwio": wsc, "s_sc": ssc, "b_sc": bsc,
            "wscf": (wsc * ssc).reshape(in_planes, planes),
            "bscf": bsc.reshape(1, planes),
        })
    return params


# --------------------------------------------------------------------------
# Pure-JAX reference for correctness check
# --------------------------------------------------------------------------
def ref_basic_block(x_nchw, params, stride=1):
    x = jnp.transpose(x_nchw, (0, 2, 3, 1))

    def conv(xi, w_hwio, s, pad):
        return lax.conv_general_dilated(
            xi, w_hwio, (s, s), pad,
            dimension_numbers=("NHWC", "HWIO", "NHWC"))

    out = conv(x, params["w1_hwio"], stride,
               [(1, 1), (1, 1)]) * params["s1"] + params["b1"]
    out = jnp.maximum(out, 0.0)
    out = conv(out, params["w2_hwio"], 1,
               [(1, 1), (1, 1)]) * params["s2"] + params["b2"]
    if params.get("wscf") is not None:
        res = conv(x, params["w_sc_hwio"], stride,
                   [(0, 0), (0, 0)]) * params["s_sc"] + params["b_sc"]
    else:
        res = x
    out = jnp.maximum(out + res, 0.0)
    return jnp.transpose(out, (0, 3, 1, 2))


if __name__ == "__main__":
    key = jax.random.PRNGKey(0)
    kx, kp1, kp2 = jax.random.split(key, 3)

    # Case 1: projection shortcut (in_planes != planes), stride=1
    x1 = jax.random.normal(kx, (2, 4, 16, 16), jnp.float32)
    p1 = init_basic_block_params(kp1, in_planes=4, planes=8, stride=1)
    r1 = ref_basic_block(x1, p1, stride=1)

    # f32 MXU path: bit-for-bit-grade check against the lax.conv reference.
    y1 = jax.block_until_ready(
        basic_block_forward(x1, p1, stride=1, use_bf16_matmul=False))
    assert y1.shape == (2, 8, 16, 16)
    assert jnp.allclose(y1, r1, atol=1e-4, rtol=1e-4), "case 1 (f32) mismatch"

    # bf16 MXU-operand path (f32 accumulation + f32 epilogue): looser tol.
    y1b = jax.block_until_ready(
        basic_block_forward(x1, p1, stride=1, use_bf16_matmul=True))
    assert y1b.shape == (2, 8, 16, 16)
    assert jnp.allclose(y1b, r1, atol=5e-2, rtol=5e-2), "case 1 (bf16) mismatch"

    # Case 2: identity shortcut (in_planes == planes), stride=1
    x2 = jax.random.normal(jax.random.fold_in(kx, 1), (2, 8, 16, 16),
                           jnp.float32)
    p2 = init_basic_block_params(kp2, in_planes=8, planes=8, stride=1)
    r2 = ref_basic_block(x2, p2, stride=1)
    y2 = jax.block_until_ready(
        basic_block_forward(x2, p2, stride=1, use_bf16_matmul=False))
    assert y2.shape == (2, 8, 16, 16)
    assert jnp.allclose(y2, r2, atol=1e-4, rtol=1e-4), "case 2 (f32) mismatch"

    print("KERNEL_OK")
</pallas_src>

<mosaic_0001>
module attributes {stable_mosaic.version = 11 : i64} {
  func.func @_fused_block_kernel(%arg0: i32, %arg1: memref<1x16x16x4xf32, #tpu.memory_space<vmem>>, %arg2: memref<36x8xf32, #tpu.memory_space<vmem>>, %arg3: memref<1x8xf32, #tpu.memory_space<vmem>>, %arg4: memref<72x8xf32, #tpu.memory_space<vmem>>, %arg5: memref<1x8xf32, #tpu.memory_space<vmem>>, %arg6: memref<4x8xf32, #tpu.memory_space<vmem>>, %arg7: memref<1x8xf32, #tpu.memory_space<vmem>>, %arg8: memref<1x16x16x8xf32, #tpu.memory_space<vmem>>, %arg9: memref<1x18x18x4xf32, #tpu.memory_space<vmem>>, %arg10: memref<1x18x18x8xf32, #tpu.memory_space<vmem>>) attributes {dimension_semantics = [#tpu.dimension_semantics<parallel>], iteration_bounds = array<i64: 2>, scalar_prefetch = 0 : i64, scratch_operands = 2 : i64, tpu.core_type = #tpu.core_type<tc>, window_params = [{transform_indices = @transform_0, window_bounds = array<i64: 1, 16, 16, 4>}, {pipeline_mode = #tpu.pipeline_mode<synchronous>, transform_indices = @transform_1, window_bounds = array<i64: 36, 8>}, {pipeline_mode = #tpu.pipeline_mode<synchronous>, transform_indices = @transform_2, window_bounds = array<i64: 1, 8>}, {pipeline_mode = #tpu.pipeline_mode<synchronous>, transform_indices = @transform_3, window_bounds = array<i64: 72, 8>}, {pipeline_mode = #tpu.pipeline_mode<synchronous>, transform_indices = @transform_4, window_bounds = array<i64: 1, 8>}, {pipeline_mode = #tpu.pipeline_mode<synchronous>, transform_indices = @transform_5, window_bounds = array<i64: 4, 8>}, {pipeline_mode = #tpu.pipeline_mode<synchronous>, transform_indices = @transform_6, window_bounds = array<i64: 1, 8>}, {transform_indices = @transform_7, window_bounds = array<i64: 1, 16, 16, 8>}]} {
    %cst = arith.constant 0.000000e+00 : f32
    %0 = vector.broadcast %cst : f32 to vector<1x18x18x4xf32>
    %c0 = arith.constant 0 : index
    %c0_0 = arith.constant 0 : index
    %c0_1 = arith.constant 0 : index
    %c0_2 = arith.constant 0 : index
    %1 = vector.load %arg9[%c0, %c0_0, %c0_1, %c0_2] : memref<1x18x18x4xf32, #tpu.memory_space<vmem>>, vector<1x18x18x4xf32>
    tpu.vector_store %arg9[%c0, %c0_0, %c0_1, %c0_2], %0 {strides = array<i32>} : memref<1x18x18x4xf32, #tpu.memory_space<vmem>>, vector<1x18x18x4xf32>,
    %cst_3 = arith.constant 0.000000e+00 : f32
    %2 = vector.broadcast %cst_3 : f32 to vector<1x18x18x8xf32>
    %c0_4 = arith.constant 0 : index
    %c0_5 = arith.constant 0 : index
    %c0_6 = arith.constant 0 : index
    %c0_7 = arith.constant 0 : index
    %3 = vector.load %arg10[%c0_4, %c0_5, %c0_6, %c0_7] : memref<1x18x18x8xf32, #tpu.memory_space<vmem>>, vector<1x18x18x8xf32>
    tpu.vector_store %arg10[%c0_4, %c0_5, %c0_6, %c0_7], %2 {strides = array<i32>} : memref<1x18x18x8xf32, #tpu.memory_space<vmem>>, vector<1x18x18x8xf32>,
    %c0_8 = arith.constant 0 : index
    %c0_9 = arith.constant 0 : index
    %c0_10 = arith.constant 0 : index
    %c0_11 = arith.constant 0 : index
    %4 = vector.load %arg1[%c0_8, %c0_9, %c0_10, %c0_11] : memref<1x16x16x4xf32, #tpu.memory_space<vmem>>, vector<1x16x16x4xf32>
    %c0_12 = arith.constant 0 : index
    %c1 = arith.constant 1 : index
    %c1_13 = arith.constant 1 : index
    %c0_14 = arith.constant 0 : index
    %5 = vector.load %arg9[%c0_12, %c1, %c1_13, %c0_14] : memref<1x18x18x4xf32, #tpu.memory_space<vmem>>, vector<1x16x16x4xf32>
    tpu.vector_store %arg9[%c0_12, %c1, %c1_13, %c0_14], %4 {strides = array<i32>} : memref<1x18x18x4xf32, #tpu.memory_space<vmem>>, vector<1x16x16x4xf32>,
    %c0_15 = arith.constant 0 : index
    %c0_16 = arith.constant 0 : index
    %c0_17 = arith.constant 0 : index
    %c0_18 = arith.constant 0 : index
    %6 = vector.load %arg9[%c0_15, %c0_16, %c0_17, %c0_18] : memref<1x18x18x4xf32, #tpu.memory_space<vmem>>, vector<1x18x18x4xf32>
    %7 = vector.extract_strided_slice %6 {offsets = [0, 0, 0, 0], sizes = [1, 16, 16, 4], strides = [1, 1, 1, 1]} : vector<1x18x18x4xf32> to vector<1x16x16x4xf32>
    %8 = vector.extract_strided_slice %6 {offsets = [0, 0, 1, 0], sizes = [1, 16, 16, 4], strides = [1, 1, 1, 1]} : vector<1x18x18x4xf32> to vector<1x16x16x4xf32>
    %9 = vector.extract_strided_slice %6 {offsets = [0, 0, 2, 0], sizes = [1, 16, 16, 4], strides = [1, 1, 1, 1]} : vector<1x18x18x4xf32> to vector<1x16x16x4xf32>
    %10 = vector.extract_strided_slice %6 {offsets = [0, 1, 0, 0], sizes = [1, 16, 16, 4], strides = [1, 1, 1, 1]} : vector<1x18x18x4xf32> to vector<1x16x16x4xf32>
    %11 = vector.extract_strided_slice %6 {offsets = [0, 1, 1, 0], sizes = [1, 16, 16, 4], strides = [1, 1, 1, 1]} : vector<1x18x18x4xf32> to vector<1x16x16x4xf32>
    %12 = vector.extract_strided_slice %6 {offsets = [0, 1, 2, 0], sizes = [1, 16, 16, 4], strides = [1, 1, 1, 1]} : vector<1x18x18x4xf32> to vector<1x16x16x4xf32>
    %13 = vector.extract_strided_slice %6 {offsets = [0, 2, 0, 0], sizes = [1, 16, 16, 4], strides = [1, 1, 1, 1]} : vector<1x18x18x4xf32> to vector<1x16x16x4xf32>
    %14 = vector.extract_strided_slice %6 {offsets = [0, 2, 1, 0], sizes = [1, 16, 16, 4], strides = [1, 1, 1, 1]} : vector<1x18x18x4xf32> to vector<1x16x16x4xf32>
    %15 = vector.extract_strided_slice %6 {offsets = [0, 2, 2, 0], sizes = [1, 16, 16, 4], strides = [1, 1, 1, 1]} : vector<1x18x18x4xf32> to vector<1x16x16x4xf32>
    %16 = tpu.concatenate %7, %8, %9, %10, %11, %12, %13, %14, %15 in 3 : vector<1x16x16x4xf32>, vector<1x16x16x4xf32>, vector<1x16x16x4xf32>, vector<1x16x16x4xf32>, vector<1x16x16x4xf32>, vector<1x16x16x4xf32>, vector<1x16x16x4xf32>, vector<1x16x16x4xf32>, vector<1x16x16x4xf32> -> vector<1x16x16x36xf32>
    %17 = vector.shape_cast %16 : vector<1x16x16x36xf32> to vector<256x36xf32>
    %c0_19 = arith.constant 0 : index
    %c0_20 = arith.constant 0 : index
    %18 = vector.load %arg2[%c0_19, %c0_20] : memref<36x8xf32, #tpu.memory_space<vmem>>, vector<36x8xf32>
    %cst_21 = arith.constant dense<0.000000e+00> : vector<256x8xf32>
    %19 = tpu.matmul %17, %18, %cst_21 {dimension_numbers = #tpu.dot_dimension_numbers<[1], [0], [0], [1], [0, 0, 1, 1], [], []>} : vector<256x36xf32>, vector<36x8xf32>, vector<256x8xf32> -> vector<256x8xf32>
    %c0_22 = arith.constant 0 : index
    %c0_23 = arith.constant 0 : index
    %20 = vector.load %arg3[%c0_22, %c0_23] : memref<1x8xf32, #tpu.memory_space<vmem>>, vector<1x8xf32>
    %21 = vector.broadcast %20 : vector<1x8xf32> to vector<256x8xf32>
    %22 = arith.addf %19, %21 : vector<256x8xf32>
    %cst_24 = arith.constant 0.000000e+00 : f32
    %23 = vector.broadcast %cst_24 : f32 to vector<256x8xf32>
    %24 = arith.maximumf %22, %23 : vector<256x8xf32>
    %25 = vector.shape_cast %24 : vector<256x8xf32> to vector<1x16x16x8xf32>
    %c0_25 = arith.constant 0 : index
    %c1_26 = arith.constant 1 : index
    %c1_27 = arith.constant 1 : index
    %c0_28 = arith.constant 0 : index
    %26 = vector.load %arg10[%c0_25, %c1_26, %c1_27, %c0_28] : memref<1x18x18x8xf32, #tpu.memory_space<vmem>>, vector<1x16x16x8xf32>
    tpu.vector_store %arg10[%c0_25, %c1_26, %c1_27, %c0_28], %25 {strides = array<i32>} : memref<1x18x18x8xf32, #tpu.memory_space<vmem>>, vector<1x16x16x8xf32>,
    %27 = vector.shape_cast %4 : vector<1x16x16x4xf32> to vector<256x4xf32>
    %c0_29 = arith.constant 0 : index
    %c0_30 = arith.constant 0 : index
    %28 = vector.load %arg6[%c0_29, %c0_30] : memref<4x8xf32, #tpu.memory_space<vmem>>, vector<4x8xf32>
    %cst_31 = arith.constant dense<0.000000e+00> : vector<256x8xf32>
    %29 = tpu.matmul %27, %28, %cst_31 {dimension_numbers = #tpu.dot_dimension_numbers<[1], [0], [0], [1], [0, 0, 1, 1], [], []>} : vector<256x4xf32>, vector<4x8xf32>, vector<256x8xf32> -> vector<256x8xf32>
    %c0_32 = arith.constant 0 : index
    %c0_33 = arith.constant 0 : index
    %30 = vector.load %arg7[%c0_32, %c0_33] : memref<1x8xf32, #tpu.memory_space<vmem>>, vector<1x8xf32>
    %31 = vector.broadcast %30 : vector<1x8xf32> to vector<256x8xf32>
    %32 = arith.addf %29, %31 : vector<256x8xf32>
    %c0_34 = arith.constant 0 : index
    %c0_35 = arith.constant 0 : index
    %c0_36 = arith.constant 0 : index
    %c0_37 = arith.constant 0 : index
    %33 = vector.load %arg10[%c0_34, %c0_35, %c0_36, %c0_37] : memref<1x18x18x8xf32, #tpu.memory_space<vmem>>, vector<1x18x18x8xf32>
    %34 = vector.extract_strided_slice %33 {offsets = [0, 0, 0, 0], sizes = [1, 16, 16, 8], strides = [1, 1, 1, 1]} : vector<1x18x18x8xf32> to vector<1x16x16x8xf32>
    %35 = vector.extract_strided_slice %33 {offsets = [0, 0, 1, 0], sizes = [1, 16, 16, 8], strides = [1, 1, 1, 1]} : vector<1x18x18x8xf32> to vector<1x16x16x8xf32>
    %36 = vector.extract_strided_slice %33 {offsets = [0, 0, 2, 0], sizes = [1, 16, 16, 8], strides = [1, 1, 1, 1]} : vector<1x18x18x8xf32> to vector<1x16x16x8xf32>
    %37 = vector.extract_strided_slice %33 {offsets = [0, 1, 0, 0], sizes = [1, 16, 16, 8], strides = [1, 1, 1, 1]} : vector<1x18x18x8xf32> to vector<1x16x16x8xf32>
    %38 = vector.extract_strided_slice %33 {offsets = [0, 1, 1, 0], sizes = [1, 16, 16, 8], strides = [1, 1, 1, 1]} : vector<1x18x18x8xf32> to vector<1x16x16x8xf32>
    %39 = vector.extract_strided_slice %33 {offsets = [0, 1, 2, 0], sizes = [1, 16, 16, 8], strides = [1, 1, 1, 1]} : vector<1x18x18x8xf32> to vector<1x16x16x8xf32>
    %40 = vector.extract_strided_slice %33 {offsets = [0, 2, 0, 0], sizes = [1, 16, 16, 8], strides = [1, 1, 1, 1]} : vector<1x18x18x8xf32> to vector<1x16x16x8xf32>
    %41 = vector.extract_strided_slice %33 {offsets = [0, 2, 1, 0], sizes = [1, 16, 16, 8], strides = [1, 1, 1, 1]} : vector<1x18x18x8xf32> to vector<1x16x16x8xf32>
    %42 = vector.extract_strided_slice %33 {offsets = [0, 2, 2, 0], sizes = [1, 16, 16, 8], strides = [1, 1, 1, 1]} : vector<1x18x18x8xf32> to vector<1x16x16x8xf32>
    %43 = tpu.concatenate %34, %35, %36, %37, %38, %39, %40, %41, %42 in 3 : vector<1x16x16x8xf32>, vector<1x16x16x8xf32>, vector<1x16x16x8xf32>, vector<1x16x16x8xf32>, vector<1x16x16x8xf32>, vector<1x16x16x8xf32>, vector<1x16x16x8xf32>, vector<1x16x16x8xf32>, vector<1x16x16x8xf32> -> vector<1x16x16x72xf32>
    %44 = vector.shape_cast %43 : vector<1x16x16x72xf32> to vector<256x72xf32>
    %c0_38 = arith.constant 0 : index
    %c0_39 = arith.constant 0 : index
    %45 = vector.load %arg4[%c0_38, %c0_39] : memref<72x8xf32, #tpu.memory_space<vmem>>, vector<72x8xf32>
    %cst_40 = arith.constant dense<0.000000e+00> : vector<256x8xf32>
    %46 = tpu.matmul %44, %45, %cst_40 {dimension_numbers = #tpu.dot_dimension_numbers<[1], [0], [0], [1], [0, 0, 1, 1], [], []>} : vector<256x72xf32>, vector<72x8xf32>, vector<256x8xf32> -> vector<256x8xf32>
    %c0_41 = arith.constant 0 : index
    %c0_42 = arith.constant 0 : index
    %47 = vector.load %arg5[%c0_41, %c0_42] : memref<1x8xf32, #tpu.memory_space<vmem>>, vector<1x8xf32>
    %48 = vector.broadcast %47 : vector<1x8xf32> to vector<256x8xf32>
    %49 = arith.addf %46, %48 : vector<256x8xf32>
    %50 = arith.addf %49, %32 : vector<256x8xf32>
    %cst_43 = arith.constant 0.000000e+00 : f32
    %51 = vector.broadcast %cst_43 : f32 to vector<256x8xf32>
    %52 = arith.maximumf %50, %51 : vector<256x8xf32>
    %53 = vector.shape_cast %52 : vector<256x8xf32> to vector<1x16x16x8xf32>
    %c0_44 = arith.constant 0 : index
    %c0_45 = arith.constant 0 : index
    %c0_46 = arith.constant 0 : index
    %c0_47 = arith.constant 0 : index
    %54 = vector.load %arg8[%c0_44, %c0_45, %c0_46, %c0_47] : memref<1x16x16x8xf32, #tpu.memory_space<vmem>>, vector<1x16x16x8xf32>
    tpu.vector_store %arg8[%c0_44, %c0_45, %c0_46, %c0_47], %53 {strides = array<i32>} : memref<1x16x16x8xf32, #tpu.memory_space<vmem>>, vector<1x16x16x8xf32>,
    return
  }
  func.func @transform_0(%arg0: i32) -> (i32, i32, i32, i32) {
    %c0_i32 = arith.constant 0 : i32
    %c0_i32_0 = arith.constant 0 : i32
    %c0_i32_1 = arith.constant 0 : i32
    %c0_i32_2 = arith.constant 0 : i32
    return %arg0, %c0_i32, %c0_i32_0, %c0_i32_1 : i32, i32, i32, i32
  }
  func.func @transform_1(%arg0: i32) -> (i32, i32) {
    %c0_i32 = arith.constant 0 : i32
    %c0_i32_0 = arith.constant 0 : i32
    %c0_i32_1 = arith.constant 0 : i32
    return %c0_i32, %c0_i32_0 : i32, i32
  }
  func.func @transform_2(%arg0: i32) -> (i32, i32) {
    %c0_i32 = arith.constant 0 : i32
    %c0_i32_0 = arith.constant 0 : i32
    %c0_i32_1 = arith.constant 0 : i32
    return %c0_i32, %c0_i32_0 : i32, i32
  }
  func.func @transform_3(%arg0: i32) -> (i32, i32) {
    %c0_i32 = arith.constant 0 : i32
    %c0_i32_0 = arith.constant 0 : i32
    %c0_i32_1 = arith.constant 0 : i32
    return %c0_i32, %c0_i32_0 : i32, i32
  }
  func.func @transform_4(%arg0: i32) -> (i32, i32) {
    %c0_i32 = arith.constant 0 : i32
    %c0_i32_0 = arith.constant 0 : i32
    %c0_i32_1 = arith.constant 0 : i32
    return %c0_i32, %c0_i32_0 : i32, i32
  }
  func.func @transform_5(%arg0: i32) -> (i32, i32) {
    %c0_i32 = arith.constant 0 : i32
    %c0_i32_0 = arith.constant 0 : i32
    %c0_i32_1 = arith.constant 0 : i32
    return %c0_i32, %c0_i32_0 : i32, i32
  }
  func.func @transform_6(%arg0: i32) -> (i32, i32) {
    %c0_i32 = arith.constant 0 : i32
    %c0_i32_0 = arith.constant 0 : i32
    %c0_i32_1 = arith.constant 0 : i32
    return %c0_i32, %c0_i32_0 : i32, i32
  }
  func.func @transform_7(%arg0: i32) -> (i32, i32, i32, i32) {
    %c0_i32 = arith.constant 0 : i32
    %c0_i32_0 = arith.constant 0 : i32
    %c0_i32_1 = arith.constant 0 : i32
    %c0_i32_2 = arith.constant 0 : i32
    return %arg0, %c0_i32, %c0_i32_0, %c0_i32_1 : i32, i32, i32, i32
  }
}

</mosaic_0001>

<llo_original>
// kernel: tpu_custom_call.1
$region0: #{tpu_custom_call.1}
  #allocation0 [shape = 'u32[]', space=smem, size = 0x4, offset = 0x4, fixed_abs, tag = 'smem constant byte address 0x4 - core index']
  #allocation1 [shape = 'u32[144,128]{1,0:T(1,128)}', space=vmem, size = 0x12000, scoped, tag = 'internal scratch']
  #allocation2 [shape = 'f32[1,18,18,4]{3,2,1,0:T(8,128)}', space=vmem, size = 0x36000, scoped, tag = 'scratch operand']
  #allocation3 [shape = 'f32[1,18,18,8]{3,2,1,0:T(8,128)}', space=vmem, size = 0x36000, scoped, tag = 'scratch operand']
  %s0 = inlined_call_operand.vmem [shape: f32[2,16,16,4], index: 0, kind: input, shape index: {}]
  %s1 = inlined_call_operand.vmem [shape: f32[36,8], index: 1, kind: input, shape index: {}]
  %s2 = inlined_call_operand.vmem [shape: f32[1,8], index: 2, kind: input, shape index: {}]
  %s3 = inlined_call_operand.vmem [shape: f32[72,8], index: 3, kind: input, shape index: {}]
  %s4 = inlined_call_operand.vmem [shape: f32[1,8], index: 4, kind: input, shape index: {}]
  %s5 = inlined_call_operand.vmem [shape: f32[4,8], index: 5, kind: input, shape index: {}]
  %s6 = inlined_call_operand.vmem [shape: f32[1,8], index: 6, kind: input, shape index: {}]
  %s7 = inlined_call_operand.vmem [shape: f32[2,16,16,8], index: 7, kind: output, shape index: {}]
  %s8 = sld [smem:[#allocation0]]
  $region61: #{tpu_custom_call.1} parent=0
    _
  %s10 = ssub.s32 1, %s8
  %s11 = scalar_select 0, %s10, %s8
  loop: start=0, step=1, limit=4
  $region2: #{tpu_custom_call.1} parent=0 // loop_pre_header
    _
  $region3: #{tpu_custom_call.1} parent=0 // loop_header
    %s13 = sphi 0, %s17
    %p14 = scmp.ge.s32.totalorder %s13, 4
    %s23 = sphi 0, %s25
    %s26 = sphi 0, %s23
    %s27 = sphi 0, %s26
    %s43 = sphi 0, %s27
    %s47 = sphi 0, %s47
    %s49 = sphi 0, %s47
    %s50 = sphi 0, %s49
    %s64 = sphi 0, %s50
    %s68 = sphi 0, %s68
    %s70 = sphi 0, %s68
    %s71 = sphi 0, %s70
    %s85 = sphi 0, %s71
    %s89 = sphi 0, %s89
    %s91 = sphi 0, %s89
    %s92 = sphi 0, %s91
    %s106 = sphi 0, %s92
    %s110 = sphi 0, %s110
    %s112 = sphi 0, %s110
    %s113 = sphi 0, %s112
    %s127 = sphi 0, %s113
    %s131 = sphi 0, %s131
    %s133 = sphi 0, %s131
    %s134 = sphi 0, %s133
    %s148 = sphi 0, %s134
    %s152 = sphi 0, %s152
    %s154 = sphi 0, %s152
    %s155 = sphi 0, %s154
    %s169 = sphi 0, %s155
    %s175 = sphi 0, %s177
    %s178 = sphi 0, %s175
    %s179 = sphi 0, %s178
    %s195 = sphi 0, %s179
  $region4: #{tpu_custom_call.1} parent=0 // loop_header_branch
    %16 = sbr.rel (%p14) target = $region8
  $region5: #{tpu_custom_call.1} parent=0 // loop_body
    %s18 = ssub.s32 %s13, 1
    %s19 = ssub.s32 %s13, 2
    %s20 = sadd.s32 %s13, 1
    %s21 = ssub.s32 %s13, %s20
    %p22 = scmp.eq.s32.totalorder %s21, 0
    %s24 = sadd.s32 %s23, 1
    %s25 = scalar_select %p22, %s23, %s24
    %p28 = pneg %p22
    %p29 = scmp.eq.s32.totalorder %s13, 1
    %p30 = por %p28, %p29
    %p31 = scmp.ne.s32.totalorder %s23, %s26
    %p32 = scmp.eq.s32.totalorder %s13, 0
    %p33 = por %p31, %p32
    %p34 = scmp.ne.s32.totalorder %s23, %s26
    %p35 = scmp.eq.s32.totalorder %s18, 1
    %p36 = por %p34, %p35
    %p37 = scmp.ne.s32.totalorder %s26, %s27
    %p38 = scmp.eq.s32.totalorder %s18, 0
    %p39 = por %p37, %p38
    %p40 = scmp.ne.s32.totalorder %s26, %s27
    %p41 = scmp.eq.s32.totalorder %s19, 1
    %p42 = por %p40, %p41
    %p44 = scmp.ne.s32.totalorder %s27, %s43
    %p45 = scmp.eq.s32.totalorder %s19, 0
    %p46 = por %p44, %p45
    %s48 = sadd.s32 %s47, 1
    %p51 = scmp.eq.s32.totalorder %s13, 1
    %p52 = scmp.ne.s32.totalorder %s47, %s49
    %p53 = scmp.eq.s32.totalorder %s13, 0
    %p54 = por %p52, %p53
    %p55 = scmp.ne.s32.totalorder %s47, %s49
    %p56 = scmp.eq.s32.totalorder %s18, 1
    %p57 = por %p55, %p56
    %p58 = scmp.ne.s32.totalorder %s49, %s50
    %p59 = scmp.eq.s32.totalorder %s18, 0
    %p60 = por %p58, %p59
    %p61 = scmp.ne.s32.totalorder %s49, %s50
    %p62 = scmp.eq.s32.totalorder %s19, 1
    %p63 = por %p61, %p62
    %p65 = scmp.ne.s32.totalorder %s50, %s64
    %p66 = scmp.eq.s32.totalorder %s19, 0
    %p67 = por %p65, %p66
    %s69 = sadd.s32 %s68, 1
    %p72 = scmp.eq.s32.totalorder %s13, 1
    %p73 = scmp.ne.s32.totalorder %s68, %s70
    %p74 = scmp.eq.s32.totalorder %s13, 0
    %p75 = por %p73, %p74
    %p76 = scmp.ne.s32.totalorder %s68, %s70
    %p77 = scmp.eq.s32.totalorder %s18, 1
    %p78 = por %p76, %p77
    %p79 = scmp.ne.s32.totalorder %s70, %s71
    %p80 = scmp.eq.s32.totalorder %s18, 0
    %p81 = por %p79, %p80
    %p82 = scmp.ne.s32.totalorder %s70, %s71
    %p83 = scmp.eq.s32.totalorder %s19, 1
    %p84 = por %p82, %p83
    %p86 = scmp.ne.s32.totalorder %s71, %s85
    %p87 = scmp.eq.s32.totalorder %s19, 0
    %p88 = por %p86, %p87
    %s90 = sadd.s32 %s89, 1
    %p93 = scmp.eq.s32.totalorder %s13, 1
    %p94 = scmp.ne.s32.totalorder %s89, %s91
    %p95 = scmp.eq.s32.totalorder %s13, 0
    %p96 = por %p94, %p95
    %p97 = scmp.ne.s32.totalorder %s89, %s91
    %p98 = scmp.eq.s32.totalorder %s18, 1
    %p99 = por %p97, %p98
    %p100 = scmp.ne.s32.totalorder %s91, %s92
    %p101 = scmp.eq.s32.totalorder %s18, 0
    %p102 = por %p100, %p101
    %p103 = scmp.ne.s32.totalorder %s91, %s92
    %p104 = scmp.eq.s32.totalorder %s19, 1
    %p105 = por %p103, %p104
    %p107 = scmp.ne.s32.totalorder %s92, %s106
    %p108 = scmp.eq.s32.totalorder %s19, 0
    %p109 = por %p107, %p108
    %s111 = sadd.s32 %s110, 1
    %p114 = scmp.eq.s32.totalorder %s13, 1
    %p115 = scmp.ne.s32.totalorder %s110, %s112
    %p116 = scmp.eq.s32.totalorder %s13, 0
    %p117 = por %p115, %p116
    %p118 = scmp.ne.s32.totalorder %s110, %s112
    %p119 = scmp.eq.s32.totalorder %s18, 1
    %p120 = por %p118, %p119
    %p121 = scmp.ne.s32.totalorder %s112, %s113
    %p122 = scmp.eq.s32.totalorder %s18, 0
    %p123 = por %p121, %p122
    %p124 = scmp.ne.s32.totalorder %s112, %s113
    %p125 = scmp.eq.s32.totalorder %s19, 1
    %p126 = por %p124, %p125
    %p128 = scmp.ne.s32.totalorder %s113, %s127
    %p129 = scmp.eq.s32.totalorder %s19, 0
    %p130 = por %p128, %p129
    %s132 = sadd.s32 %s131, 1
    %p135 = scmp.eq.s32.totalorder %s13, 1
    %p136 = scmp.ne.s32.totalorder %s131, %s133
    %p137 = scmp.eq.s32.totalorder %s13, 0
    %p138 = por %p136, %p137
    %p139 = scmp.ne.s32.totalorder %s131, %s133
    %p140 = scmp.eq.s32.totalorder %s18, 1
    %p141 = por %p139, %p140
    %p142 = scmp.ne.s32.totalorder %s133, %s134
    %p143 = scmp.eq.s32.totalorder %s18, 0
    %p144 = por %p142, %p143
    %p145 = scmp.ne.s32.totalorder %s133, %s134
    %p146 = scmp.eq.s32.totalorder %s19, 1
    %p147 = por %p145, %p146
    %p149 = scmp.ne.s32.totalorder %s134, %s148
    %p150 = scmp.eq.s32.totalorder %s19, 0
    %p151 = por %p149, %p150
    %s153 = sadd.s32 %s152, 1
    %p156 = scmp.eq.s32.totalorder %s13, 1
    %p157 = scmp.ne.s32.totalorder %s152, %s154
    %p158 = scmp.eq.s32.totalorder %s13, 0
    %p159 = por %p157, %p158
    %p160 = scmp.ne.s32.totalorder %s152, %s154
    %p161 = scmp.eq.s32.totalorder %s18, 1
    %p162 = por %p160, %p161
    %p163 = scmp.ne.s32.totalorder %s154, %s155
    %p164 = scmp.eq.s32.totalorder %s18, 0
    %p165 = por %p163, %p164
    %p166 = scmp.ne.s32.totalorder %s154, %s155
    %p167 = scmp.eq.s32.totalorder %s19, 1
    %p168 = por %p166, %p167
    %p170 = scmp.ne.s32.totalorder %s155, %s169
    %p171 = scmp.eq.s32.totalorder %s19, 0
    %p172 = por %p170, %p171
    %s173 = ssub.s32 %s13, %s20
    %p174 = scmp.eq.s32.totalorder %s173, 0
    %s176 = sadd.s32 %s175, 1
    %s177 = scalar_select %p174, %s175, %s176
    %p180 = pneg %p174
    %p181 = scmp.eq.s32.totalorder %s13, 1
    %p182 = por %p180, %p181
    %p183 = scmp.ne.s32.totalorder %s175, %s178
    %p184 = scmp.eq.s32.totalorder %s13, 0
    %p185 = por %p183, %p184
    %p186 = scmp.ne.s32.totalorder %s175, %s178
    %p187 = scmp.eq.s32.totalorder %s18, 1
    %p188 = por %p186, %p187
    %p189 = scmp.ne.s32.totalorder %s178, %s179
    %p190 = scmp.eq.s32.totalorder %s18, 0
    %p191 = por %p189, %p190
    %p192 = scmp.ne.s32.totalorder %s178, %s179
    %p193 = scmp.eq.s32.totalorder %s19, 1
    %p194 = por %p192, %p193
    %p196 = scmp.ne.s32.totalorder %s179, %s195
    %p197 = scmp.eq.s32.totalorder %s19, 0
    %p198 = por %p196, %p197
    %p199 = scmp.le.s32.totalorder 1, %s13
    %p200 = scmp.lt.s32.totalorder %s13, 3
    %p201 = pnand %p199, %p200
    %p202 = pneg %p201
    // Predicated region
    $region9: #{tpu_custom_call.1} parent=5 // pred_check
      _
    $region10: #{tpu_custom_call.1} parent=5 // pred_check_branch
      %204 = sbr.rel (%p201) target = $region12
    $region11: #{tpu_custom_call.1} parent=5 // pred_region
      %s205 = ssub.s32 %s13, 1
      // Predicated region
      $region13: #{tpu_custom_call.1} parent=11 // pred_check
        %p206 = pneg %p60
      $region14: #{tpu_custom_call.1} parent=11 // pred_check_branch
        %208 = sbr.rel (%p206) target = $region16
      $region15: #{tpu_custom_call.1} parent=11 // pred_region
        _
      $region16: #{tpu_custom_call.1} parent=11 // pred_fallthru
        _
      // Predicated region
      $region17: #{tpu_custom_call.1} parent=11 // pred_check
        %p209 = pneg %p81
      $region18: #{tpu_custom_call.1} parent=11 // pred_check_branch
        %211 = sbr.rel (%p209) target = $region20
      $region19: #{tpu_custom_call.1} parent=11 // pred_region
        _
      $region20: #{tpu_custom_call.1} parent=11 // pred_fallthru
        _
      // Predicated region
      $region21: #{tpu_custom_call.1} parent=11 // pred_check
        %p212 = pneg %p102
      $region22: #{tpu_custom_call.1} parent=11 // pred_check_branch
        %214 = sbr.rel (%p212) target = $region24
      $region23: #{tpu_custom_call.1} parent=11 // pred_region
        _
      $region24: #{tpu_custom_call.1} parent=11 // pred_fallthru
        _
      // Predicated region
      $region25: #{tpu_custom_call.1} parent=11 // pred_check
        %p215 = pneg %p123
      $region26: #{tpu_custom_call.1} parent=11 // pred_check_branch
        %217 = sbr.rel (%p215) target = $region28
      $region27: #{tpu_custom_call.1} parent=11 // pred_region
        _
      $region28: #{tpu_custom_call.1} parent=11 // pred_fallthru
        _
      // Predicated region
      $region29: #{tpu_custom_call.1} parent=11 // pred_check
        %p218 = pneg %p144
      $region30: #{tpu_custom_call.1} parent=11 // pred_check_branch
        %220 = sbr.rel (%p218) target = $region32
      $region31: #{tpu_custom_call.1} parent=11 // pred_region
        _
      $region32: #{tpu_custom_call.1} parent=11 // pred_fallthru
        _
      // Predicated region
      $region33: #{tpu_custom_call.1} parent=11 // pred_check
        %p221 = pneg %p165
      $region34: #{tpu_custom_call.1} parent=11 // pred_check_branch
        %223 = sbr.rel (%p221) target = $region36
      $region35: #{tpu_custom_call.1} parent=11 // pred_region
        _
      $region36: #{tpu_custom_call.1} parent=11 // pred_fallthru
        _
    $region12: #{tpu_custom_call.1} parent=5 // pred_fallthru
      _
    %p224 = scmp.lt.s32.totalorder %s13, 2
    // Predicated region
    $region37: #{tpu_custom_call.1} parent=5 // pred_check
      %p225 = pneg %p224
    $region38: #{tpu_custom_call.1} parent=5 // pred_check_branch
      %227 = sbr.rel (%p225) target = $region40
    $region39: #{tpu_custom_call.1} parent=5 // pred_region
      // Predicated region
      $region41: #{tpu_custom_call.1} parent=39 // pred_check
        %p228 = pneg %p33
      $region42: #{tpu_custom_call.1} parent=39 // pred_check_branch
        %230 = sbr.rel (%p228) target = $region44
      $region43: #{tpu_custom_call.1} parent=39 // pred_region
        %p231 = scmp.lt.s32.totalorder %s13, 1
        %s232 = scalar_select %p231, %s13, 1
        %s233 = smul.addr %s232, 32
        %s234 = smul.addr %s233, 8
        %s235 = scalar_lea.vmem %s0, %s234
      $region44: #{tpu_custom_call.1} parent=39 // pred_fallthru
        _
    $region40: #{tpu_custom_call.1} parent=5 // pred_fallthru
      _
    %p236 = scmp.le.s32.totalorder 1, %s13
    %p237 = scmp.lt.s32.totalorder %s13, 3
    %p238 = pnand %p236, %p237
    %p239 = pneg %p238
    // Predicated region
    $region45: #{tpu_custom_call.1} parent=5 // pred_check
      _
    $region46: #{tpu_custom_call.1} parent=5 // pred_check_branch
      %241 = sbr.rel (%p238) target = $region48
    $region47: #{tpu_custom_call.1} parent=5 // pred_region
      %s242 = ssub.s32 %s13, 1
      %p243 = scmp.lt.s32.totalorder %s18, 1
      %s244 = scalar_select %p243, %s18, 1
      %s245 = smul.addr %s244, 32
      %s246 = smul.addr %s245, 8
      %s247 = scalar_lea.vmem %s0, %s246
      %p248 = pneg %p39
      %p249 = pneg %p36
      %p250 = pneg %p60
      %p251 = pneg %p57
      %p252 = pneg %p81
      %p253 = pneg %p78
      %p254 = pneg %p102
      %p255 = pneg %p99
      %p256 = pneg %p123
      %p257 = pneg %p120
      %p258 = pneg %p144
      %p259 = pneg %p141
      %p260 = pneg %p165
      %p261 = pneg %p162
      %p262 = pneg %p191
      %p263 = pneg %p188
      %p264 = scmp.lt.s32.totalorder %s18, 1
      %s265 = scalar_select %p264, %s18, 1
      %s266 = smul.addr %s265, 32
      %s267 = smul.addr %s266, 8
      %s268 = scalar_lea.vmem %s7, %s267
      %p269 = scmp.lt.s32.totalorder %s18, 1
      %s270 = scalar_select %p269, %s18, 1
      %s271 = smul.addr %s270, 32
      %s272 = smul.addr %s271, 8
      %s273 = scalar_lea.vmem %s0, %s272
      %p274 = scmp.lt.s32.totalorder %s18, 1
      %s275 = scalar_select %p274, %s18, 1
      %s276 = smul.addr %s275, 32
      %s277 = smul.addr %s276, 8
      %s278 = scalar_lea.vmem %s7, %s277
      %vm279 = vcmask 31744
      %280 = vst.msk [vmem:[#allocation2] sm:$0xff] %vm279, 0.0
      %281 = vst.msk [vmem:[#allocation2 + $0x8] sm:$0xff] %vm279, 0.0
      %vm282 = vcmask 25600
      %283 = vst.msk [vmem:[#allocation2 + $0x10] sm:$0x3] %vm282, 0.0
      %284 = vst.msk [vmem:[#allocation2 + $0x18] sm:$0xff] %vm279, 0.0
      %285 = vst.msk [vmem:[#allocation2 + $0x20] sm:$0xff] %vm279, 0.0
      %286 = vst.msk [vmem:[#allocation2 + $0x28] sm:$0x3] %vm282, 0.0
      %287 = vst.msk [vmem:[#allocation2 + $0x30] sm:$0xff] %vm279, 0.0
      %288 = vst.msk [vmem:[#allocation2 + $0x38] sm:$0xff] %vm279, 0.0
      %289 = vst.msk [vmem:[#allocation2 + $0x40] sm:$0x3] %vm282, 0.0
      %290 = vst.msk [vmem:[#allocation2 + $0x48] sm:$0xff] %vm279, 0.0
      %291 = vst.msk [vmem:[#allocation2 + $0x50] sm:$0xff] %vm279, 0.0
      %292 = vst.msk [vmem:[#allocation2 + $0x58] sm:$0x3] %vm282, 0.0
      %293 = vst.msk [vmem:[#allocation2 + $0x60] sm:$0xff] %vm279, 0.0
      %294 = vst.msk [vmem:[#allocation2 + $0x68] sm:$0xff] %vm279, 0.0
      %295 = vst.msk [vmem:[#allocation2 + $0x70] sm:$0x3] %vm282, 0.0
      %296 = vst.msk [vmem:[#allocation2 + $0x78] sm:$0xff] %vm279, 0.0
      %297 = vst.msk [vmem:[#allocation2 + $0x80] sm:$0xff] %vm279, 0.0
      %298 = vst.msk [vmem:[#allocation2 + $0x88] sm:$0x3] %vm282, 0.0
      %299 = vst.msk [vmem:[#allocation2 + $0x90] sm:$0xff] %vm279, 0.0
      %300 = vst.msk [vmem:[#allocation2 + $0x98] sm:$0xff] %vm279, 0.0
      %301 = vst.msk [vmem:[#allocation2 + $0xa0] sm:$0x3] %vm282, 0.0
      %302 = vst.msk [vmem:[#allocation2 + $0xa8] sm:$0xff] %vm279, 0.0
      %303 = vst.msk [vmem:[#allocation2 + $0xb0] sm:$0xff] %vm279, 0.0
      %304 = vst.msk [vmem:[#allocation2 + $0xb8] sm:$0x3] %vm282, 0.0
      %305 = vst.msk [vmem:[#allocation2 + $0xc0] sm:$0xff] %vm279, 0.0
      %306 = vst.msk [vmem:[#allocation2 + $0xc8] sm:$0xff] %vm279, 0.0
      %307 = vst.msk [vmem:[#allocation2 + $0xd0] sm:$0x3] %vm282, 0.0
      %308 = vst.msk [vmem:[#allocation2 + $0xd8] sm:$0xff] %vm279, 0.0
      %309 = vst.msk [vmem:[#allocation2 + $0xe0] sm:$0xff] %vm279, 0.0
      %310 = vst.msk [vmem:[#allocation2 + $0xe8] sm:$0x3] %vm282, 0.0
      %311 = vst.msk [vmem:[#allocation2 + $0xf0] sm:$0xff] %vm279, 0.0
      %312 = vst.msk [vmem:[#allocation2 + $0xf8] sm:$0xff] %vm279, 0.0
      %313 = vst.msk [vmem:[#allocation2 + $0x100] sm:$0x3] %vm282, 0.0
      %314 = vst.msk [vmem:[#allocation2 + $0x108] sm:$0xff] %vm279, 0.0
      %315 = vst.msk [vmem:[#allocation2 + $0x110] sm:$0xff] %vm279, 0.0
      %316 = vst.msk [vmem:[#allocation2 + $0x118] sm:$0x3] %vm282, 0.0
      %317 = vst.msk [vmem:[#allocation2 + $0x120] sm:$0xff] %vm279, 0.0
      %318 = vst.msk [vmem:[#allocation2 + $0x128] sm:$0xff] %vm279, 0.0
      %319 = vst.msk [vmem:[#allocation2 + $0x130] sm:$0x3] %vm282, 0.0
      %320 = vst.msk [vmem:[#allocation2 + $0x138] sm:$0xff] %vm279, 0.0
      %321 = vst.msk [vmem:[#allocation2 + $0x140] sm:$0xff] %vm279, 0.0
      %322 = vst.msk [vmem:[#allocation2 + $0x148] sm:$0x3] %vm282, 0.0
      %323 = vst.msk [vmem:[#allocation2 + $0x150] sm:$0xff] %vm279, 0.0
      %324 = vst.msk [vmem:[#allocation2 + $0x158] sm:$0xff] %vm279, 0.0
      %325 = vst.msk [vmem:[#allocation2 + $0x160] sm:$0x3] %vm282, 0.0
      %326 = vst.msk [vmem:[#allocation2 + $0x168] sm:$0xff] %vm279, 0.0
      %327 = vst.msk [vmem:[#allocation2 + $0x170] sm:$0xff] %vm279, 0.0
      %328 = vst.msk [vmem:[#allocation2 + $0x178] sm:$0x3] %vm282, 0.0
      %329 = vst.msk [vmem:[#allocation2 + $0x180] sm:$0xff] %vm279, 0.0
      %330 = vst.msk [vmem:[#allocation2 + $0x188] sm:$0xff] %vm279, 0.0
      %331 = vst.msk [vmem:[#allocation2 + $0x190] sm:$0x3] %vm282, 0.0
      %332 = vst.msk [vmem:[#allocation2 + $0x198] sm:$0xff] %vm279, 0.0
      %333 = vst.msk [vmem:[#allocation2 + $0x1a0] sm:$0xff] %vm279, 0.0
      %334 = vst.msk [vmem:[#allocation2 + $0x1a8] sm:$0x3] %vm282, 0.0
      %vm335 = vcmask 64512
      %336 = vst.msk [vmem:[#allocation3] sm:$0xff] %vm335, 0.0
      %337 = vst.msk [vmem:[#allocation3 + $0x8] sm:$0xff] %vm335, 0.0
      %vm338 = vcmask 58368
      %339 = vst.msk [vmem:[#allocation3 + $0x10] sm:$0x3] %vm338, 0.0
      %340 = vst.msk [vmem:[#allocation3 + $0x18] sm:$0xff] %vm335, 0.0
      %341 = vst.msk [vmem:[#allocation3 + $0x20] sm:$0xff] %vm335, 0.0
      %342 = vst.msk [vmem:[#allocation3 + $0x28] sm:$0x3] %vm338, 0.0
      %343 = vst.msk [vmem:[#allocation3 + $0x30] sm:$0xff] %vm335, 0.0
      %344 = vst.msk [vmem:[#allocation3 + $0x38] sm:$0xff] %vm335, 0.0
      %345 = vst.msk [vmem:[#allocation3 + $0x40] sm:$0x3] %vm338, 0.0
      %346 = vst.msk [vmem:[#allocation3 + $0x48] sm:$0xff] %vm335, 0.0
      %347 = vst.msk [vmem:[#allocation3 + $0x50] sm:$0xff] %vm335, 0.0
      %348 = vst.msk [vmem:[#allocation3 + $0x58] sm:$0x3] %vm338, 0.0
      %349 = vst.msk [vmem:[#allocation3 + $0x60] sm:$0xff] %vm335, 0.0
      %350 = vst.msk [vmem:[#allocation3 + $0x68] sm:$0xff] %vm335, 0.0
      %351 = vst.msk [vmem:[#allocation3 + $0x70] sm:$0x3] %vm338, 0.0
      %352 = vst.msk [vmem:[#allocation3 + $0x78] sm:$0xff] %vm335, 0.0
      %353 = vst.msk [vmem:[#allocation3 + $0x80] sm:$0xff] %vm335, 0.0
      %354 = vst.msk [vmem:[#allocation3 + $0x88] sm:$0x3] %vm338, 0.0
      %355 = vst.msk [vmem:[#allocation3 + $0x90] sm:$0xff] %vm335, 0.0
      %356 = vst.msk [vmem:[#allocation3 + $0x98] sm:$0xff] %vm335, 0.0
      %357 = vst.msk [vmem:[#allocation3 + $0xa0] sm:$0x3] %vm338, 0.0
      %358 = vst.msk [vmem:[#allocation3 + $0xa8] sm:$0xff] %vm335, 0.0
      %359 = vst.msk [vmem:[#allocation3 + $0xb0] sm:$0xff] %vm335, 0.0
      %360 = vst.msk [vmem:[#allocation3 + $0xb8] sm:$0x3] %vm338, 0.0
      %361 = vst.msk [vmem:[#allocation3 + $0xc0] sm:$0xff] %vm335, 0.0
      %362 = vst.msk [vmem:[#allocation3 + $0xc8] sm:$0xff] %vm335, 0.0
      %363 = vst.msk [vmem:[#allocation3 + $0xd0] sm:$0x3] %vm338, 0.0
      %364 = vst.msk [vmem:[#allocation3 + $0xd8] sm:$0xff] %vm335, 0.0
      %365 = vst.msk [vmem:[#allocation3 + $0xe0] sm:$0xff] %vm335, 0.0
      %366 = vst.msk [vmem:[#allocation3 + $0xe8] sm:$0x3] %vm338, 0.0
      %367 = vst.msk [vmem:[#allocation3 + $0xf0] sm:$0xff] %vm335, 0.0
      %368 = vst.msk [vmem:[#allocation3 + $0xf8] sm:$0xff] %vm335, 0.0
      %369 = vst.msk [vmem:[#allocation3 + $0x100] sm:$0x3] %vm338, 0.0
      %370 = vst.msk [vmem:[#allocation3 + $0x108] sm:$0xff] %vm335, 0.0
      %371 = vst.msk [vmem:[#allocation3 + $0x110] sm:$0xff] %vm335, 0.0
      %372 = vst.msk [vmem:[#allocation3 + $0x118] sm:$0x3] %vm338, 0.0
      %373 = vst.msk [vmem:[#allocation3 + $0x120] sm:$0xff] %vm335, 0.0
      %374 = vst.msk [vmem:[#allocation3 + $0x128] sm:$0xff] %vm335, 0.0
      %375 = vst.msk [vmem:[#allocation3 + $0x130] sm:$0x3] %vm338, 0.0
      %376 = vst.msk [vmem:[#allocation3 + $0x138] sm:$0xff] %vm335, 0.0
      %377 = vst.msk [vmem:[#allocation3 + $0x140] sm:$0xff] %vm335, 0.0
      %378 = vst.msk [vmem:[#allocation3 + $0x148] sm:$0x3] %vm338, 0.0
      %379 = vst.msk [vmem:[#allocation3 + $0x150] sm:$0xff] %vm335, 0.0
      %380 = vst.msk [vmem:[#allocation3 + $0x158] sm:$0xff] %vm335, 0.0
      %381 = vst.msk [vmem:[#allocation3 + $0x160] sm:$0x3] %vm338, 0.0
      %382 = vst.msk [vmem:[#allocation3 + $0x168] sm:$0xff] %vm335, 0.0
      %383 = vst.msk [vmem:[#allocation3 + $0x170] sm:$0xff] %vm335, 0.0
      %384 = vst.msk [vmem:[#allocation3 + $0x178] sm:$0x3] %vm338, 0.0
      %385 = vst.msk [vmem:[#allocation3 + $0x180] sm:$0xff] %vm335, 0.0
      %386 = vst.msk [vmem:[#allocation3 + $0x188] sm:$0xff] %vm335, 0.0
      %387 = vst.msk [vmem:[#allocation3 + $0x190] sm:$0x3] %vm338, 0.0
      %388 = vst.msk [vmem:[#allocation3 + $0x198] sm:$0xff] %vm335, 0.0
      %389 = vst.msk [vmem:[#allocation3 + $0x1a0] sm:$0xff] %vm335, 0.0
      %390 = vst.msk [vmem:[#allocation3 + $0x1a8] sm:$0x3] %vm338, 0.0
      %v391 = vld [vmem:[%s273] sm:$0xff]
      %v392 = vld [vmem:[%s273 + $0x8] sm:$0xff]
      %v393 = vld [vmem:[%s273 + $0x10] sm:$0xff]
      %v394 = vld [vmem:[%s273 + $0x18] sm:$0xff]
      %v395 = vld [vmem:[%s273 + $0x20] sm:$0xff]
      %v396 = vld [vmem:[%s273 + $0x28] sm:$0xff]
      %v397 = vld [vmem:[%s273 + $0x30] sm:$0xff]
      %v398 = vld [vmem:[%s273 + $0x38] sm:$0xff]
      %v399 = vld [vmem:[%s273 + $0x40] sm:$0xff]
      %v400 = vld [vmem:[%s273 + $0x48] sm:$0xff]
      %v401 = vld [vmem:[%s273 + $0x50] sm:$0xff]
      %v402 = vld [vmem:[%s273 + $0x58] sm:$0xff]
      %v403 = vld [vmem:[%s273 + $0x60] sm:$0xff]
      %v404 = vld [vmem:[%s273 + $0x68] sm:$0xff]
      %v405 = vld [vmem:[%s273 + $0x70] sm:$0xff]
      %v406 = vld [vmem:[%s273 + $0x78] sm:$0xff]
      %v407 = vld [vmem:[%s273 + $0x80] sm:$0xff]
      %v408 = vld [vmem:[%s273 + $0x88] sm:$0xff]
      %v409 = vld [vmem:[%s273 + $0x90] sm:$0xff]
      %v410 = vld [vmem:[%s273 + $0x98] sm:$0xff]
      %v411 = vld [vmem:[%s273 + $0xa0] sm:$0xff]
      %v412 = vld [vmem:[%s273 + $0xa8] sm:$0xff]
      %v413 = vld [vmem:[%s273 + $0xb0] sm:$0xff]
      %v414 = vld [vmem:[%s273 + $0xb8] sm:$0xff]
      %v415 = vld [vmem:[%s273 + $0xc0] sm:$0xff]
      %v416 = vld [vmem:[%s273 + $0xc8] sm:$0xff]
      %v417 = vld [vmem:[%s273 + $0xd0] sm:$0xff]
      %v418 = vld [vmem:[%s273 + $0xd8] sm:$0xff]
      %v419 = vld [vmem:[%s273 + $0xe0] sm:$0xff]
      %v420 = vld [vmem:[%s273 + $0xe8] sm:$0xff]
      %v421 = vld [vmem:[%s273 + $0xf0] sm:$0xff]
      %v422 = vld [vmem:[%s273 + $0xf8] sm:$0xff]
      %s423 = scalar_lea.vmem [#allocation2], 24
      %424 = vst.msk [vmem:[%s423 + $0x1] sm:$0xff] %vm279, %v391
      %425 = vst.msk [vmem:[%s423 + $0x9] sm:$0xff] %vm279, %v392
      %426 = vst.msk [vmem:[%s423 + $0x19] sm:$0xff] %vm279, %v393
      %427 = vst.msk [vmem:[%s423 + $0x21] sm:$0xff] %vm279, %v394
      %428 = vst.msk [vmem:[%s423 + $0x31] sm:$0xff] %vm279, %v395
      %429 = vst.msk [vmem:[%s423 + $0x39] sm:$0xff] %vm279, %v396
      %430 = vst.msk [vmem:[%s423 + $0x49] sm:$0xff] %vm279, %v397
      %431 = vst.msk [vmem:[%s423 + $0x51] sm:$0xff] %vm279, %v398
      %432 = vst.msk [vmem:[%s423 + $0x61] sm:$0xff] %vm279, %v399
      %433 = vst.msk [vmem:[%s423 + $0x69] sm:$0xff] %vm279, %v400
      %434 = vst.msk [vmem:[%s423 + $0x79] sm:$0xff] %vm279, %v401
      %435 = vst.msk [vmem:[%s423 + $0x81] sm:$0xff] %vm279, %v402
      %436 = vst.msk [vmem:[%s423 + $0x91] sm:$0xff] %vm279, %v403
      %437 = vst.msk [vmem:[%s423 + $0x99] sm:$0xff] %vm279, %v404
      %438 = vst.msk [vmem:[%s423 + $0xa9] sm:$0xff] %vm279, %v405
      %439 = vst.msk [vmem:[%s423 + $0xb1] sm:$0xff] %vm279, %v406
      %440 = vst.msk [vmem:[%s423 + $0xc1] sm:$0xff] %vm279, %v407
      %441 = vst.msk [vmem:[%s423 + $0xc9] sm:$0xff] %vm279, %v408
      %442 = vst.msk [vmem:[%s423 + $0xd9] sm:$0xff] %vm279, %v409
      %443 = vst.msk [vmem:[%s423 + $0xe1] sm:$0xff] %vm279, %v410
      %444 = vst.msk [vmem:[%s423 + $0xf1] sm:$0xff] %vm279, %v411
      %445 = vst.msk [vmem:[%s423 + $0xf9] sm:$0xff] %vm279, %v412
      %446 = vst.msk [vmem:[%s423 + $0x109] sm:$0xff] %vm279, %v413
      %447 = vst.msk [vmem:[%s423 + $0x111] sm:$0xff] %vm279, %v414
      %448 = vst.msk [vmem:[%s423 + $0x121] sm:$0xff] %vm279, %v415
      %449 = vst.msk [vmem:[%s423 + $0x129] sm:$0xff] %vm279, %v416
      %450 = vst.msk [vmem:[%s423 + $0x139] sm:$0xff] %vm279, %v417
      %451 = vst.msk [vmem:[%s423 + $0x141] sm:$0xff] %vm279, %v418
      %452 = vst.msk [vmem:[%s423 + $0x151] sm:$0xff] %vm279, %v419
      %453 = vst.msk [vmem:[%s423 + $0x159] sm:$0xff] %vm279, %v420
      %454 = vst.msk [vmem:[%s423 + $0x169] sm:$0xff] %vm279, %v421
      %455 = vst.msk [vmem:[%s423 + $0x171] sm:$0xff] %vm279, %v422
      %v456 = vld [vmem:[#allocation2] sm:$0xff]
      %v457 = vld [vmem:[#allocation2 + $0x8] sm:$0xff]
      %v458 = vld [vmem:[#allocation2 + $0x10] sm:$0x3]
      %v459 = vld [vmem:[#allocation2 + $0x18] sm:$0xff]
      %v460 = vld [vmem:[#allocation2 + $0x20] sm:$0xff]
      %v461 = vld [vmem:[#allocation2 + $0x28] sm:$0x3]
      %v462 = vld [vmem:[#allocation2 + $0x30] sm:$0xff]
      %v463 = vld [vmem:[#allocation2 + $0x38] sm:$0xff]
      %v464 = vld [vmem:[#allocation2 + $0x40] sm:$0x3]
      %v465 = vld [vmem:[#allocation2 + $0x48] sm:$0xff]
      %v466 = vld [vmem:[#allocation2 + $0x50] sm:$0xff]
      %v467 = vld [vmem:[#allocation2 + $0x58] sm:$0x3]
      %v468 = vld [vmem:[#allocation2 + $0x60] sm:$0xff]
      %v469 = vld [vmem:[#allocation2 + $0x68] sm:$0xff]
      %v470 = vld [vmem:[#allocation2 + $0x70] sm:$0x3]
      %v471 = vld [vmem:[#allocation2 + $0x78] sm:$0xff]
      %v472 = vld [vmem:[#allocation2 + $0x80] sm:$0xff]
      %v473 = vld [vmem:[#allocation2 + $0x88] sm:$0x3]
      %v474 = vld [vmem:[#allocation2 + $0x90] sm:$0xff]
      %v475 = vld [vmem:[#allocation2 + $0x98] sm:$0xff]
      %v476 = vld [vmem:[#allocation2 + $0xa0] sm:$0x3]
      %v477 = vld [vmem:[#allocation2 + $0xa8] sm:$0xff]
      %v478 = vld [vmem:[#allocation2 + $0xb0] sm:$0xff]
      %v479 = vld [vmem:[#allocation2 + $0xb8] sm:$0x3]
      %v480 = vld [vmem:[#allocation2 + $0xc0] sm:$0xff]
      %v481 = vld [vmem:[#allocation2 + $0xc8] sm:$0xff]
      %v482 = vld [vmem:[#allocation2 + $0xd0] sm:$0x3]
      %v483 = vld [vmem:[#allocation2 + $0xd8] sm:$0xff]
      %v484 = vld [vmem:[#allocation2 + $0xe0] sm:$0xff]
      %v485 = vld [vmem:[#allocation2 + $0xe8] sm:$0x3]
      %v486 = vld [vmem:[#allocation2 + $0xf0] sm:$0xff]
      %v487 = vld [vmem:[#allocation2 + $0xf8] sm:$0xff]
      %v488 = vld [vmem:[#allocation2 + $0x100] sm:$0x3]
      %v489 = vld [vmem:[#allocation2 + $0x108] sm:$0xff]
      %v490 = vld [vmem:[#allocation2 + $0x110] sm:$0xff]
      %v491 = vld [vmem:[#allocation2 + $0x118] sm:$0x3]
      %v492 = vld [vmem:[#allocation2 + $0x120] sm:$0xff]
      %v493 = vld [vmem:[#allocation2 + $0x128] sm:$0xff]
      %v494 = vld [vmem:[#allocation2 + $0x130] sm:$0x3]
      %v495 = vld [vmem:[#allocation2 + $0x138] sm:$0xff]
      %v496 = vld [vmem:[#allocation2 + $0x140] sm:$0xff]
      %v497 = vld [vmem:[#allocation2 + $0x148] sm:$0x3]
      %v498 = vld [vmem:[#allocation2 + $0x150] sm:$0xff]
      %v499 = vld [vmem:[#allocation2 + $0x158] sm:$0xff]
      %v500 = vld [vmem:[#allocation2 + $0x160] sm:$0x3]
      %v501 = vld [vmem:[#allocation2 + $0x168] sm:$0xff]
      %v502 = vld [vmem:[#allocation2 + $0x170] sm:$0xff]
      %v503 = vld [vmem:[#allocation2 + $0x178] sm:$0x3]
      %v504 = vld [vmem:[#allocation2 + $0x180] sm:$0xff]
      %v505 = vld [vmem:[#allocation2 + $0x188] sm:$0xff]
      %v506 = vld [vmem:[#allocation2 + $0x190] sm:$0x3]
      %v507 = vld [vmem:[#allocation2 + $0x198] sm:$0xff]
      %v508 = vld [vmem:[#allocation2 + $0x1a0] sm:$0xff]
      %v509 = vld [vmem:[#allocation2 + $0x1a8] sm:$0x3]
      %vm558 = vcmask 1046528
      %v559 = vrot.slane %v456, 1
      %v560 = vrot.slane %v457, 1
      %v561 = vsel %vm558, %v559, %v560
      %v562 = vrot.slane %v458, 1
      %v563 = vsel %vm558, %v560, %v562
      %v564 = vrot.slane %v459, 1
      %v565 = vrot.slane %v460, 1
      %v566 = vsel %vm558, %v564, %v565
      %v567 = vrot.slane %v461, 1
      %v568 = vsel %vm558, %v565, %v567
      %v569 = vrot.slane %v462, 1
      %v570 = vrot.slane %v463, 1
      %v571 = vsel %vm558, %v569, %v570
      %v572 = vrot.slane %v464, 1
      %v573 = vsel %vm558, %v570, %v572
      %v574 = vrot.slane %v465, 1
      %v575 = vrot.slane %v466, 1
      %v576 = vsel %vm558, %v574, %v575
      %v577 = vrot.slane %v467, 1
      %v578 = vsel %vm558, %v575, %v577
      %v579 = vrot.slane %v468, 1
      %v580 = vrot.slane %v469, 1
      %v581 = vsel %vm558, %v579, %v580
      %v582 = vrot.slane %v470, 1
      %v583 = vsel %vm558, %v580, %v582
      %v584 = vrot.slane %v471, 1
      %v585 = vrot.slane %v472, 1
      %v586 = vsel %vm558, %v584, %v585
      %v587 = vrot.slane %v473, 1
      %v588 = vsel %vm558, %v585, %v587
      %v589 = vrot.slane %v474, 1
      %v590 = vrot.slane %v475, 1
      %v591 = vsel %vm558, %v589, %v590
      %v592 = vrot.slane %v476, 1
      %v593 = vsel %vm558, %v590, %v592
      %v594 = vrot.slane %v477, 1
      %v595 = vrot.slane %v478, 1
      %v596 = vsel %vm558, %v594, %v595
      %v597 = vrot.slane %v479, 1
      %v598 = vsel %vm558, %v595, %v597
      %v599 = vrot.slane %v480, 1
      %v600 = vrot.slane %v481, 1
      %v601 = vsel %vm558, %v599, %v600
      %v602 = vrot.slane %v482, 1
      %v603 = vsel %vm558, %v600, %v602
      %v604 = vrot.slane %v483, 1
      %v605 = vrot.slane %v484, 1
      %v606 = vsel %vm558, %v604, %v605
      %v607 = vrot.slane %v485, 1
      %v608 = vsel %vm558, %v605, %v607
      %v609 = vrot.slane %v486, 1
      %v610 = vrot.slane %v487, 1
      %v611 = vsel %vm558, %v609, %v610
      %v612 = vrot.slane %v488, 1
      %v613 = vsel %vm558, %v610, %v612
      %v614 = vrot.slane %v489, 1
      %v615 = vrot.slane %v490, 1
      %v616 = vsel %vm558, %v614, %v615
      %v617 = vrot.slane %v491, 1
      %v618 = vsel %vm558, %v615, %v617
      %v619 = vrot.slane %v492, 1
      %v620 = vrot.slane %v493, 1
      %v621 = vsel %vm558, %v619, %v620
      %v622 = vrot.slane %v494, 1
      %v623 = vsel %vm558, %v620, %v622
      %v624 = vrot.slane %v495, 1
      %v625 = vrot.slane %v496, 1
      %v626 = vsel %vm558, %v624, %v625
      %v627 = vrot.slane %v497, 1
      %v628 = vsel %vm558, %v625, %v627
      %v629 = vrot.slane %v498, 1
      %v630 = vrot.slane %v499, 1
      %v631 = vsel %vm558, %v629, %v630
      %v632 = vrot.slane %v500, 1
      %v633 = vsel %vm558, %v630, %v632
      %v634 = vrot.slane %v501, 1
      %v635 = vrot.slane %v502, 1
      %v636 = vsel %vm558, %v634, %v635
      %v637 = vrot.slane %v503, 1
      %v638 = vsel %vm558, %v635, %v637
      %639 = vrot.lane.b32.xlu0 %v561, 4
      %v640 = vpop.permute.xlu0 %639
      %641 = vrot.lane.b32.xlu0 %v563, 4
      %v642 = vpop.permute.xlu0 %641
      %643 = vrot.lane.b32.xlu0 %v566, 4
      %v644 = vpop.permute.xlu0 %643
      %645 = vrot.lane.b32.xlu0 %v568, 4
      %v646 = vpop.permute.xlu0 %645
      %647 = vrot.lane.b32.xlu0 %v571, 4
      %v648 = vpop.permute.xlu0 %647
      %649 = vrot.lane.b32.xlu0 %v573, 4
      %v650 = vpop.permute.xlu0 %649
      %651 = vrot.lane.b32.xlu0 %v576, 4
      %v652 = vpop.permute.xlu0 %651
      %653 = vrot.lane.b32.xlu0 %v578, 4
      %v654 = vpop.permute.xlu0 %653
      %655 = vrot.lane.b32.xlu0 %v581, 4
      %v656 = vpop.permute.xlu0 %655
      %657 = vrot.lane.b32.xlu0 %v583, 4
      %v658 = vpop.permute.xlu0 %657
      %659 = vrot.lane.b32.xlu0 %v586, 4
      %v660 = vpop.permute.xlu0 %659
      %661 = vrot.lane.b32.xlu0 %v588, 4
      %v662 = vpop.permute.xlu0 %661
      %663 = vrot.lane.b32.xlu0 %v591, 4
      %v664 = vpop.permute.xlu0 %663
      %665 = vrot.lane.b32.xlu0 %v593, 4
      %v666 = vpop.permute.xlu0 %665
      %667 = vrot.lane.b32.xlu0 %v596, 4
      %v668 = vpop.permute.xlu0 %667
      %669 = vrot.lane.b32.xlu0 %v598, 4
      %v670 = vpop.permute.xlu0 %669
      %671 = vrot.lane.b32.xlu0 %v601, 4
      %v672 = vpop.permute.xlu0 %671
      %673 = vrot.lane.b32.xlu0 %v603, 4
      %v674 = vpop.permute.xlu0 %673
      %675 = vrot.lane.b32.xlu0 %v606, 4
      %v676 = vpop.permute.xlu0 %675
      %677 = vrot.lane.b32.xlu0 %v608, 4
      %v678 = vpop.permute.xlu0 %677
      %679 = vrot.lane.b32.xlu0 %v611, 4
      %v680 = vpop.permute.xlu0 %679
      %681 = vrot.lane.b32.xlu0 %v613, 4
      %v682 = vpop.permute.xlu0 %681
      %683 = vrot.lane.b32.xlu0 %v616, 4
      %v684 = vpop.permute.xlu0 %683
      %685 = vrot.lane.b32.xlu0 %v618, 4
      %v686 = vpop.permute.xlu0 %685
      %687 = vrot.lane.b32.xlu0 %v621, 4
      %v688 = vpop.permute.xlu0 %687
      %689 = vrot.lane.b32.xlu0 %v623, 4
      %v690 = vpop.permute.xlu0 %689
      %691 = vrot.lane.b32.xlu0 %v626, 4
      %v692 = vpop.permute.xlu0 %691
      %693 = vrot.lane.b32.xlu0 %v628, 4
      %v694 = vpop.permute.xlu0 %693
      %695 = vrot.lane.b32.xlu0 %v631, 4
      %v696 = vpop.permute.xlu0 %695
      %697 = vrot.lane.b32.xlu0 %v633, 4
      %v698 = vpop.permute.xlu0 %697
      %699 = vrot.lane.b32.xlu0 %v636, 4
      %v700 = vpop.permute.xlu0 %699
      %701 = vrot.lane.b32.xlu0 %v638, 4
      %v702 = vpop.permute.xlu0 %701
      %vm735 = vcmask 1045504
      %v736 = vrot.slane %v456, 2
      %v737 = vrot.slane %v457, 2
      %v738 = vsel %vm735, %v736, %v737
      %v739 = vrot.slane %v458, 2
      %v740 = vsel %vm735, %v737, %v739
      %v741 = vrot.slane %v459, 2
      %v742 = vrot.slane %v460, 2
      %v743 = vsel %vm735, %v741, %v742
      %v744 = vrot.slane %v461, 2
      %v745 = vsel %vm735, %v742, %v744
      %v746 = vrot.slane %v462, 2
      %v747 = vrot.slane %v463, 2
      %v748 = vsel %vm735, %v746, %v747
      %v749 = vrot.slane %v464, 2
      %v750 = vsel %vm735, %v747, %v749
      %v751 = vrot.slane %v465, 2
      %v752 = vrot.slane %v466, 2
      %v753 = vsel %vm735, %v751, %v752
      %v754 = vrot.slane %v467, 2
      %v755 = vsel %vm735, %v752, %v754
      %v756 = vrot.slane %v468, 2
      %v757 = vrot.slane %v469, 2
      %v758 = vsel %vm735, %v756, %v757
      %v759 = vrot.slane %v470, 2
      %v760 = vsel %vm735, %v757, %v759
      %v761 = vrot.slane %v471, 2
      %v762 = vrot.slane %v472, 2
      %v763 = vsel %vm735, %v761, %v762
      %v764 = vrot.slane %v473, 2
      %v765 = vsel %vm735, %v762, %v764
      %v766 = vrot.slane %v474, 2
      %v767 = vrot.slane %v475, 2
      %v768 = vsel %vm735, %v766, %v767
      %v769 = vrot.slane %v476, 2
      %v770 = vsel %vm735, %v767, %v769
      %v771 = vrot.slane %v477, 2
      %v772 = vrot.slane %v478, 2
      %v773 = vsel %vm735, %v771, %v772
      %v774 = vrot.slane %v479, 2
      %v775 = vsel %vm735, %v772, %v774
      %v776 = vrot.slane %v480, 2
      %v777 = vrot.slane %v481, 2
      %v778 = vsel %vm735, %v776, %v777
      %v779 = vrot.slane %v482, 2
      %v780 = vsel %vm735, %v777, %v779
      %v781 = vrot.slane %v483, 2
      %v782 = vrot.slane %v484, 2
      %v783 = vsel %vm735, %v781, %v782
      %v784 = vrot.slane %v485, 2
      %v785 = vsel %vm735, %v782, %v784
      %v786 = vrot.slane %v486, 2
      %v787 = vrot.slane %v487, 2
      %v788 = vsel %vm735, %v786, %v787
      %v789 = vrot.slane %v488, 2
      %v790 = vsel %vm735, %v787, %v789
      %v791 = vrot.slane %v489, 2
      %v792 = vrot.slane %v490, 2
      %v793 = vsel %vm735, %v791, %v792
      %v794 = vrot.slane %v491, 2
      %v795 = vsel %vm735, %v792, %v794
      %v796 = vrot.slane %v492, 2
      %v797 = vrot.slane %v493, 2
      %v798 = vsel %vm735, %v796, %v797
      %v799 = vrot.slane %v494, 2
      %v800 = vsel %vm735, %v797, %v799
      %v801 = vrot.slane %v495, 2
      %v802 = vrot.slane %v496, 2
      %v803 = vsel %vm735, %v801, %v802
      %v804 = vrot.slane %v497, 2
      %v805 = vsel %vm735, %v802, %v804
      %v806 = vrot.slane %v498, 2
      %v807 = vrot.slane %v499, 2
      %v808 = vsel %vm735, %v806, %v807
      %v809 = vrot.slane %v500, 2
      %v810 = vsel %vm735, %v807, %v809
      %v811 = vrot.slane %v501, 2
      %v812 = vrot.slane %v502, 2
      %v813 = vsel %vm735, %v811, %v812
      %v814 = vrot.slane %v503, 2
      %v815 = vsel %vm735, %v812, %v814
      %816 = vrot.lane.b32.xlu0 %v738, 8
      %v817 = vpop.permute.xlu0 %816
      %818 = vrot.lane.b32.xlu0 %v740, 8
      %v819 = vpop.permute.xlu0 %818
      %820 = vrot.lane.b32.xlu0 %v743, 8
      %v821 = vpop.permute.xlu0 %820
      %822 = vrot.lane.b32.xlu0 %v745, 8
      %v823 = vpop.permute.xlu0 %822
      %824 = vrot.lane.b32.xlu0 %v748, 8
      %v825 = vpop.permute.xlu0 %824
      %826 = vrot.lane.b32.xlu0 %v750, 8
      %v827 = vpop.permute.xlu0 %826
      %828 = vrot.lane.b32.xlu0 %v753, 8
      %v829 = vpop.permute.xlu0 %828
      %830 = vrot.lane.b32.xlu0 %v755, 8
      %v831 = vpop.permute.xlu0 %830
      %832 = vrot.lane.b32.xlu0 %v758, 8
      %v833 = vpop.permute.xlu0 %832
      %834 = vrot.lane.b32.xlu0 %v760, 8
      %v835 = vpop.permute.xlu0 %834
      %836 = vrot.lane.b32.xlu0 %v763, 8
      %v837 = vpop.permute.xlu0 %836
      %838 = vrot.lane.b32.xlu0 %v765, 8
      %v839 = vpop.permute.xlu0 %838
      %840 = vrot.lane.b32.xlu0 %v768, 8
      %v841 = vpop.permute.xlu0 %840
      %842 = vrot.lane.b32.xlu0 %v770, 8
      %v843 = vpop.permute.xlu0 %842
      %844 = vrot.lane.b32.xlu0 %v773, 8
      %v845 = vpop.permute.xlu0 %844
      %846 = vrot.lane.b32.xlu0 %v775, 8
      %v847 = vpop.permute.xlu0 %846
      %848 = vrot.lane.b32.xlu0 %v778, 8
      %v849 = vpop.permute.xlu0 %848
      %850 = vrot.lane.b32.xlu0 %v780, 8
      %v851 = vpop.permute.xlu0 %850
      %852 = vrot.lane.b32.xlu0 %v783, 8
      %v853 = vpop.permute.xlu0 %852
      %854 = vrot.lane.b32.xlu0 %v785, 8
      %v855 = vpop.permute.xlu0 %854
      %856 = vrot.lane.b32.xlu0 %v788, 8
      %v857 = vpop.permute.xlu0 %856
      %858 = vrot.lane.b32.xlu0 %v790, 8
      %v859 = vpop.permute.xlu0 %858
      %860 = vrot.lane.b32.xlu0 %v793, 8
      %v861 = vpop.permute.xlu0 %860
      %862 = vrot.lane.b32.xlu0 %v795, 8
      %v863 = vpop.permute.xlu0 %862
      %864 = vrot.lane.b32.xlu0 %v798, 8
      %v865 = vpop.permute.xlu0 %864
      %866 = vrot.lane.b32.xlu0 %v800, 8
      %v867 = vpop.permute.xlu0 %866
      %868 = vrot.lane.b32.xlu0 %v803, 8
      %v869 = vpop.permute.xlu0 %868
      %870 = vrot.lane.b32.xlu0 %v805, 8
      %v871 = vpop.permute.xlu0 %870
      %872 = vrot.lane.b32.xlu0 %v808, 8
      %v873 = vpop.permute.xlu0 %872
      %874 = vrot.lane.b32.xlu0 %v810, 8
      %v875 = vpop.permute.xlu0 %874
      %876 = vrot.lane.b32.xlu0 %v813, 8
      %v877 = vpop.permute.xlu0 %876
      %878 = vrot.lane.b32.xlu0 %v815, 8
      %v879 = vpop.permute.xlu0 %878
      %914 = vrot.lane.b32.xlu0 %v459, 12
      %v915 = vpop.permute.xlu0 %914
      %916 = vrot.lane.b32.xlu0 %v460, 12
      %v917 = vpop.permute.xlu0 %916
      %918 = vrot.lane.b32.xlu0 %v462, 12
      %v919 = vpop.permute.xlu0 %918
      %920 = vrot.lane.b32.xlu0 %v463, 12
      %v921 = vpop.permute.xlu0 %920
      %922 = vrot.lane.b32.xlu0 %v465, 12
      %v923 = vpop.permute.xlu0 %922
      %924 = vrot.lane.b32.xlu0 %v466, 12
      %v925 = vpop.permute.xlu0 %924
      %926 = vrot.lane.b32.xlu0 %v468, 12
      %v927 = vpop.permute.xlu0 %926
      %928 = vrot.lane.b32.xlu0 %v469, 12
      %v929 = vpop.permute.xlu0 %928
      %930 = vrot.lane.b32.xlu0 %v471, 12
      %v931 = vpop.permute.xlu0 %930
      %932 = vrot.lane.b32.xlu0 %v472, 12
      %v933 = vpop.permute.xlu0 %932
      %934 = vrot.lane.b32.xlu0 %v474, 12
      %v935 = vpop.permute.xlu0 %934
      %936 = vrot.lane.b32.xlu0 %v475, 12
      %v937 = vpop.permute.xlu0 %936
      %938 = vrot.lane.b32.xlu0 %v477, 12
      %v939 = vpop.permute.xlu0 %938
      %940 = vrot.lane.b32.xlu0 %v478, 12
      %v941 = vpop.permute.xlu0 %940
      %942 = vrot.lane.b32.xlu0 %v480, 12
      %v943 = vpop.permute.xlu0 %942
      %944 = vrot.lane.b32.xlu0 %v481, 12
      %v945 = vpop.permute.xlu0 %944
      %946 = vrot.lane.b32.xlu0 %v483, 12
      %v947 = vpop.permute.xlu0 %946
      %948 = vrot.lane.b32.xlu0 %v484, 12
      %v949 = vpop.permute.xlu0 %948
      %950 = vrot.lane.b32.xlu0 %v486, 12
      %v951 = vpop.permute.xlu0 %950
      %952 = vrot.lane.b32.xlu0 %v487, 12
      %v953 = vpop.permute.xlu0 %952
      %954 = vrot.lane.b32.xlu0 %v489, 12
      %v955 = vpop.permute.xlu0 %954
      %956 = vrot.lane.b32.xlu0 %v490, 12
      %v957 = vpop.permute.xlu0 %956
      %958 = vrot.lane.b32.xlu0 %v492, 12
      %v959 = vpop.permute.xlu0 %958
      %960 = vrot.lane.b32.xlu0 %v493, 12
      %v961 = vpop.permute.xlu0 %960
      %962 = vrot.lane.b32.xlu0 %v495, 12
      %v963 = vpop.permute.xlu0 %962
      %964 = vrot.lane.b32.xlu0 %v496, 12
      %v965 = vpop.permute.xlu0 %964
      %966 = vrot.lane.b32.xlu0 %v498, 12
      %v967 = vpop.permute.xlu0 %966
      %968 = vrot.lane.b32.xlu0 %v499, 12
      %v969 = vpop.permute.xlu0 %968
      %970 = vrot.lane.b32.xlu0 %v501, 12
      %v971 = vpop.permute.xlu0 %970
      %972 = vrot.lane.b32.xlu0 %v502, 12
      %v973 = vpop.permute.xlu0 %972
      %974 = vrot.lane.b32.xlu0 %v504, 12
      %v975 = vpop.permute.xlu0 %974
      %976 = vrot.lane.b32.xlu0 %v505, 12
      %v977 = vpop.permute.xlu0 %976
      %v1011 = vrot.slane %v504, 1
      %v1012 = vrot.slane %v505, 1
      %v1013 = vsel %vm558, %v1011, %v1012
      %v1014 = vrot.slane %v506, 1
      %v1015 = vsel %vm558, %v1012, %v1014
      %1016 = vrot.lane.b32.xlu0 %v566, 16
      %v1017 = vpop.permute.xlu0 %1016
      %1018 = vrot.lane.b32.xlu0 %v568, 16
      %v1019 = vpop.permute.xlu0 %1018
      %1020 = vrot.lane.b32.xlu0 %v571, 16
      %v1021 = vpop.permute.xlu0 %1020
      %1022 = vrot.lane.b32.xlu0 %v573, 16
      %v1023 = vpop.permute.xlu0 %1022
      %1024 = vrot.lane.b32.xlu0 %v576, 16
      %v1025 = vpop.permute.xlu0 %1024
      %1026 = vrot.lane.b32.xlu0 %v578, 16
      %v1027 = vpop.permute.xlu0 %1026
      %1028 = vrot.lane.b32.xlu0 %v581, 16
      %v1029 = vpop.permute.xlu0 %1028
      %1030 = vrot.lane.b32.xlu0 %v583, 16
      %v1031 = vpop.permute.xlu0 %1030
      %1032 = vrot.lane.b32.xlu0 %v586, 16
      %v1033 = vpop.permute.xlu0 %1032
      %1034 = vrot.lane.b32.xlu0 %v588, 16
      %v1035 = vpop.permute.xlu0 %1034
      %1036 = vrot.lane.b32.xlu0 %v591, 16
      %v1037 = vpop.permute.xlu0 %1036
      %1038 = vrot.lane.b32.xlu0 %v593, 16
      %v1039 = vpop.permute.xlu0 %1038
      %1040 = vrot.lane.b32.xlu0 %v596, 16
      %v1041 = vpop.permute.xlu0 %1040
      %1042 = vrot.lane.b32.xlu0 %v598, 16
      %v1043 = vpop.permute.xlu0 %1042
      %1044 = vrot.lane.b32.xlu0 %v601, 16
      %v1045 = vpop.permute.xlu0 %1044
      %1046 = vrot.lane.b32.xlu0 %v603, 16
      %v1047 = vpop.permute.xlu0 %1046
      %1048 = vrot.lane.b32.xlu0 %v606, 16
      %v1049 = vpop.permute.xlu0 %1048
      %1050 = vrot.lane.b32.xlu0 %v608, 16
      %v1051 = vpop.permute.xlu0 %1050
      %1052 = vrot.lane.b32.xlu0 %v611, 16
      %v1053 = vpop.permute.xlu0 %1052
      %1054 = vrot.lane.b32.xlu0 %v613, 16
      %v1055 = vpop.permute.xlu0 %1054
      %1056 = vrot.lane.b32.xlu0 %v616, 16
      %v1057 = vpop.permute.xlu0 %1056
      %1058 = vrot.lane.b32.xlu0 %v618, 16
      %v1059 = vpop.permute.xlu0 %1058
      %1060 = vrot.lane.b32.xlu0 %v621, 16
      %v1061 = vpop.permute.xlu0 %1060
      %1062 = vrot.lane.b32.xlu0 %v623, 16
      %v1063 = vpop.permute.xlu0 %1062
      %1064 = vrot.lane.b32.xlu0 %v626, 16
      %v1065 = vpop.permute.xlu0 %1064
      %1066 = vrot.lane.b32.xlu0 %v628, 16
      %v1067 = vpop.permute.xlu0 %1066
      %1068 = vrot.lane.b32.xlu0 %v631, 16
      %v1069 = vpop.permute.xlu0 %1068
      %1070 = vrot.lane.b32.xlu0 %v633, 16
      %v1071 = vpop.permute.xlu0 %1070
      %1072 = vrot.lane.b32.xlu0 %v636, 16
      %v1073 = vpop.permute.xlu0 %1072
      %1074 = vrot.lane.b32.xlu0 %v638, 16
      %v1075 = vpop.permute.xlu0 %1074
      %1076 = vrot.lane.b32.xlu0 %v1013, 16
      %v1077 = vpop.permute.xlu0 %1076
      %1078 = vrot.lane.b32.xlu0 %v1015, 16
      %v1079 = vpop.permute.xlu0 %1078
      %v1112 = vrot.slane %v504, 2
      %v1113 = vrot.slane %v505, 2
      %v1114 = vsel %vm735, %v1112, %v1113
      %v1115 = vrot.slane %v506, 2
      %v1116 = vsel %vm735, %v1113, %v1115
      %1117 = vrot.lane.b32.xlu0 %v743, 20
      %v1118 = vpop.permute.xlu0 %1117
      %1119 = vrot.lane.b32.xlu0 %v745, 20
      %v1120 = vpop.permute.xlu0 %1119
      %1121 = vrot.lane.b32.xlu0 %v748, 20
      %v1122 = vpop.permute.xlu0 %1121
      %1123 = vrot.lane.b32.xlu0 %v750, 20
      %v1124 = vpop.permute.xlu0 %1123
      %1125 = vrot.lane.b32.xlu0 %v753, 20
      %v1126 = vpop.permute.xlu0 %1125
      %1127 = vrot.lane.b32.xlu0 %v755, 20
      %v1128 = vpop.permute.xlu0 %1127
      %1129 = vrot.lane.b32.xlu0 %v758, 20
      %v1130 = vpop.permute.xlu0 %1129
      %1131 = vrot.lane.b32.xlu0 %v760, 20
      %v1132 = vpop.permute.xlu0 %1131
      %1133 = vrot.lane.b32.xlu0 %v763, 20
      %v1134 = vpop.permute.xlu0 %1133
      %1135 = vrot.lane.b32.xlu0 %v765, 20
      %v1136 = vpop.permute.xlu0 %1135
      %1137 = vrot.lane.b32.xlu0 %v768, 20
      %v1138 = vpop.permute.xlu0 %1137
      %1139 = vrot.lane.b32.xlu0 %v770, 20
      %v1140 = vpop.permute.xlu0 %1139
      %1141 = vrot.lane.b32.xlu0 %v773, 20
      %v1142 = vpop.permute.xlu0 %1141
      %1143 = vrot.lane.b32.xlu0 %v775, 20
      %v1144 = vpop.permute.xlu0 %1143
      %1145 = vrot.lane.b32.xlu0 %v778, 20
      %v1146 = vpop.permute.xlu0 %1145
      %1147 = vrot.lane.b32.xlu0 %v780, 20
      %v1148 = vpop.permute.xlu0 %1147
      %1149 = vrot.lane.b32.xlu0 %v783, 20
      %v1150 = vpop.permute.xlu0 %1149
      %1151 = vrot.lane.b32.xlu0 %v785, 20
      %v1152 = vpop.permute.xlu0 %1151
      %1153 = vrot.lane.b32.xlu0 %v788, 20
      %v1154 = vpop.permute.xlu0 %1153
      %1155 = vrot.lane.b32.xlu0 %v790, 20
      %v1156 = vpop.permute.xlu0 %1155
      %1157 = vrot.lane.b32.xlu0 %v793, 20
      %v1158 = vpop.permute.xlu0 %1157
      %1159 = vrot.lane.b32.xlu0 %v795, 20
      %v1160 = vpop.permute.xlu0 %1159
      %1161 = vrot.lane.b32.xlu0 %v798, 20
      %v1162 = vpop.permute.xlu0 %1161
      %1163 = vrot.lane.b32.xlu0 %v800, 20
      %v1164 = vpop.permute.xlu0 %1163
      %1165 = vrot.lane.b32.xlu0 %v803, 20
      %v1166 = vpop.permute.xlu0 %1165
      %1167 = vrot.lane.b32.xlu0 %v805, 20
      %v1168 = vpop.permute.xlu0 %1167
      %1169 = vrot.lane.b32.xlu0 %v808, 20
      %v1170 = vpop.permute.xlu0 %1169
      %1171 = vrot.lane.b32.xlu0 %v810, 20
      %v1172 = vpop.permute.xlu0 %1171
      %1173 = vrot.lane.b32.xlu0 %v813, 20
      %v1174 = vpop.permute.xlu0 %1173
      %1175 = vrot.lane.b32.xlu0 %v815, 20
      %v1176 = vpop.permute.xlu0 %1175
      %1177 = vrot.lane.b32.xlu0 %v1114, 20
      %v1178 = vpop.permute.xlu0 %1177
      %1179 = vrot.lane.b32.xlu0 %v1116, 20
      %v1180 = vpop.permute.xlu0 %1179
      %1215 = vrot.lane.b32.xlu0 %v462, 24
      %v1216 = vpop.permute.xlu0 %1215
      %1217 = vrot.lane.b32.xlu0 %v463, 24
      %v1218 = vpop.permute.xlu0 %1217
      %1219 = vrot.lane.b32.xlu0 %v465, 24
      %v1220 = vpop.permute.xlu0 %1219
      %1221 = vrot.lane.b32.xlu0 %v466, 24
      %v1222 = vpop.permute.xlu0 %1221
      %1223 = vrot.lane.b32.xlu0 %v468, 24
      %v1224 = vpop.permute.xlu0 %1223
      %1225 = vrot.lane.b32.xlu0 %v469, 24
      %v1226 = vpop.permute.xlu0 %1225
      %1227 = vrot.lane.b32.xlu0 %v471, 24
      %v1228 = vpop.permute.xlu0 %1227
      %1229 = vrot.lane.b32.xlu0 %v472, 24
      %v1230 = vpop.permute.xlu0 %1229
      %1231 = vrot.lane.b32.xlu0 %v474, 24
      %v1232 = vpop.permute.xlu0 %1231
      %1233 = vrot.lane.b32.xlu0 %v475, 24
      %v1234 = vpop.permute.xlu0 %1233
      %1235 = vrot.lane.b32.xlu0 %v477, 24
      %v1236 = vpop.permute.xlu0 %1235
      %1237 = vrot.lane.b32.xlu0 %v478, 24
      %v1238 = vpop.permute.xlu0 %1237
      %1239 = vrot.lane.b32.xlu0 %v480, 24
      %v1240 = vpop.permute.xlu0 %1239
      %1241 = vrot.lane.b32.xlu0 %v481, 24
      %v1242 = vpop.permute.xlu0 %1241
      %1243 = vrot.lane.b32.xlu0 %v483, 24
      %v1244 = vpop.permute.xlu0 %1243
      %1245 = vrot.lane.b32.xlu0 %v484, 24
      %v1246 = vpop.permute.xlu0 %1245
      %1247 = vrot.lane.b32.xlu0 %v486, 24
      %v1248 = vpop.permute.xlu0 %1247
      %1249 = vrot.lane.b32.xlu0 %v487, 24
      %v1250 = vpop.permute.xlu0 %1249
      %1251 = vrot.lane.b32.xlu0 %v489, 24
      %v1252 = vpop.permute.xlu0 %1251
      %1253 = vrot.lane.b32.xlu0 %v490, 24
      %v1254 = vpop.permute.xlu0 %1253
      %1255 = vrot.lane.b32.xlu0 %v492, 24
      %v1256 = vpop.permute.xlu0 %1255
      %1257 = vrot.lane.b32.xlu0 %v493, 24
      %v1258 = vpop.permute.xlu0 %1257
      %1259 = vrot.lane.b32.xlu0 %v495, 24
      %v1260 = vpop.permute.xlu0 %1259
      %1261 = vrot.lane.b32.xlu0 %v496, 24
      %v1262 = vpop.permute.xlu0 %1261
      %1263 = vrot.lane.b32.xlu0 %v498, 24
      %v1264 = vpop.permute.xlu0 %1263
      %1265 = vrot.lane.b32.xlu0 %v499, 24
      %v1266 = vpop.permute.xlu0 %1265
      %1267 = vrot.lane.b32.xlu0 %v501, 24
      %v1268 = vpop.permute.xlu0 %1267
      %1269 = vrot.lane.b32.xlu0 %v502, 24
      %v1270 = vpop.permute.xlu0 %1269
      %1271 = vrot.lane.b32.xlu0 %v504, 24
      %v1272 = vpop.permute.xlu0 %1271
      %1273 = vrot.lane.b32.xlu0 %v505, 24
      %v1274 = vpop.permute.xlu0 %1273
      %1275 = vrot.lane.b32.xlu0 %v507, 24
      %v1276 = vpop.permute.xlu0 %1275
      %1277 = vrot.lane.b32.xlu0 %v508, 24
      %v1278 = vpop.permute.xlu0 %1277
      %v1312 = vrot.slane %v507, 1
      %v1313 = vrot.slane %v508, 1
      %v1314 = vsel %vm558, %v1312, %v1313
      %v1315 = vrot.slane %v509, 1
      %v1316 = vsel %vm558, %v1313, %v1315
      %1317 = vrot.lane.b32.xlu0 %v571, 28
      %v1318 = vpop.permute.xlu0 %1317
      %1319 = vrot.lane.b32.xlu0 %v573, 28
      %v1320 = vpop.permute.xlu0 %1319
      %1321 = vrot.lane.b32.xlu0 %v576, 28
      %v1322 = vpop.permute.xlu0 %1321
      %1323 = vrot.lane.b32.xlu0 %v578, 28
      %v1324 = vpop.permute.xlu0 %1323
      %1325 = vrot.lane.b32.xlu0 %v581, 28
      %v1326 = vpop.permute.xlu0 %1325
      %1327 = vrot.lane.b32.xlu0 %v583, 28
      %v1328 = vpop.permute.xlu0 %1327
      %1329 = vrot.lane.b32.xlu0 %v586, 28
      %v1330 = vpop.permute.xlu0 %1329
      %1331 = vrot.lane.b32.xlu0 %v588, 28
      %v1332 = vpop.permute.xlu0 %1331
      %1333 = vrot.lane.b32.xlu0 %v591, 28
      %v1334 = vpop.permute.xlu0 %1333
      %1335 = vrot.lane.b32.xlu0 %v593, 28
      %v1336 = vpop.permute.xlu0 %1335
      %1337 = vrot.lane.b32.xlu0 %v596, 28
      %v1338 = vpop.permute.xlu0 %1337
      %1339 = vrot.lane.b32.xlu0 %v598, 28
      %v1340 = vpop.permute.xlu0 %1339
      %1341 = vrot.lane.b32.xlu0 %v601, 28
      %v1342 = vpop.permute.xlu0 %1341
      %1343 = vrot.lane.b32.xlu0 %v603, 28
      %v1344 = vpop.permute.xlu0 %1343
      %1345 = vrot.lane.b32.xlu0 %v606, 28
      %v1346 = vpop.permute.xlu0 %1345
      %1347 = vrot.lane.b32.xlu0 %v608, 28
      %v1348 = vpop.permute.xlu0 %1347
      %1349 = vrot.lane.b32.xlu0 %v611, 28
      %v1350 = vpop.permute.xlu0 %1349
      %1351 = vrot.lane.b32.xlu0 %v613, 28
      %v1352 = vpop.permute.xlu0 %1351
      %1353 = vrot.lane.b32.xlu0 %v616, 28
      %v1354 = vpop.permute.xlu0 %1353
      %1355 = vrot.lane.b32.xlu0 %v618, 28
      %v1356 = vpop.permute.xlu0 %1355
      %1357 = vrot.lane.b32.xlu0 %v621, 28
      %v1358 = vpop.permute.xlu0 %1357
      %1359 = vrot.lane.b32.xlu0 %v623, 28
      %v1360 = vpop.permute.xlu0 %1359
      %1361 = vrot.lane.b32.xlu0 %v626, 28
      %v1362 = vpop.permute.xlu0 %1361
      %1363 = vrot.lane.b32.xlu0 %v628, 28
      %v1364 = vpop.permute.xlu0 %1363
      %1365 = vrot.lane.b32.xlu0 %v631, 28
      %v1366 = vpop.permute.xlu0 %1365
      %1367 = vrot.lane.b32.xlu0 %v633, 28
      %v1368 = vpop.permute.xlu0 %1367
      %1369 = vrot.lane.b32.xlu0 %v636, 28
      %v1370 = vpop.permute.xlu0 %1369
      %1371 = vrot.lane.b32.xlu0 %v638, 28
      %v1372 = vpop.permute.xlu0 %1371
      %1373 = vrot.lane.b32.xlu0 %v1013, 28
      %v1374 = vpop.permute.xlu0 %1373
      %1375 = vrot.lane.b32.xlu0 %v1015, 28
      %v1376 = vpop.permute.xlu0 %1375
      %1377 = vrot.lane.b32.xlu0 %v1314, 28
      %v1378 = vpop.permute.xlu0 %1377
      %1379 = vrot.lane.b32.xlu0 %v1316, 28
      %v1380 = vpop.permute.xlu0 %1379
      %v1413 = vrot.slane %v507, 2
      %v1414 = vrot.slane %v508, 2
      %v1415 = vsel %vm735, %v1413, %v1414
      %v1416 = vrot.slane %v509, 2
      %v1417 = vsel %vm735, %v1414, %v1416
      %1418 = vrot.lane.b32.xlu0 %v748, 32
      %v1419 = vpop.permute.xlu0 %1418
      %1420 = vrot.lane.b32.xlu0 %v750, 32
      %v1421 = vpop.permute.xlu0 %1420
      %1422 = vrot.lane.b32.xlu0 %v753, 32
      %v1423 = vpop.permute.xlu0 %1422
      %1424 = vrot.lane.b32.xlu0 %v755, 32
      %v1425 = vpop.permute.xlu0 %1424
      %1426 = vrot.lane.b32.xlu0 %v758, 32
      %v1427 = vpop.permute.xlu0 %1426
      %1428 = vrot.lane.b32.xlu0 %v760, 32
      %v1429 = vpop.permute.xlu0 %1428
      %1430 = vrot.lane.b32.xlu0 %v763, 32
      %v1431 = vpop.permute.xlu0 %1430
      %1432 = vrot.lane.b32.xlu0 %v765, 32
      %v1433 = vpop.permute.xlu0 %1432
      %1434 = vrot.lane.b32.xlu0 %v768, 32
      %v1435 = vpop.permute.xlu0 %1434
      %1436 = vrot.lane.b32.xlu0 %v770, 32
      %v1437 = vpop.permute.xlu0 %1436
      %1438 = vrot.lane.b32.xlu0 %v773, 32
      %v1439 = vpop.permute.xlu0 %1438
      %1440 = vrot.lane.b32.xlu0 %v775, 32
      %v1441 = vpop.permute.xlu0 %1440
      %1442 = vrot.lane.b32.xlu0 %v778, 32
      %v1443 = vpop.permute.xlu0 %1442
      %1444 = vrot.lane.b32.xlu0 %v780, 32
      %v1445 = vpop.permute.xlu0 %1444
      %1446 = vrot.lane.b32.xlu0 %v783, 32
      %v1447 = vpop.permute.xlu0 %1446
      %1448 = vrot.lane.b32.xlu0 %v785, 32
      %v1449 = vpop.permute.xlu0 %1448
      %1450 = vrot.lane.b32.xlu0 %v788, 32
      %v1451 = vpop.permute.xlu0 %1450
      %1452 = vrot.lane.b32.xlu0 %v790, 32
      %v1453 = vpop.permute.xlu0 %1452
      %1454 = vrot.lane.b32.xlu0 %v793, 32
      %v1455 = vpop.permute.xlu0 %1454
      %1456 = vrot.lane.b32.xlu0 %v795, 32
      %v1457 = vpop.permute.xlu0 %1456
      %1458 = vrot.lane.b32.xlu0 %v798, 32
      %v1459 = vpop.permute.xlu0 %1458
      %1460 = vrot.lane.b32.xlu0 %v800, 32
      %v1461 = vpop.permute.xlu0 %1460
      %1462 = vrot.lane.b32.xlu0 %v803, 32
      %v1463 = vpop.permute.xlu0 %1462
      %1464 = vrot.lane.b32.xlu0 %v805, 32
      %v1465 = vpop.permute.xlu0 %1464
      %1466 = vrot.lane.b32.xlu0 %v808, 32
      %v1467 = vpop.permute.xlu0 %1466
      %1468 = vrot.lane.b32.xlu0 %v810, 32
      %v1469 = vpop.permute.xlu0 %1468
      %1470 = vrot.lane.b32.xlu0 %v813, 32
      %v1471 = vpop.permute.xlu0 %1470
      %1472 = vrot.lane.b32.xlu0 %v815, 32
      %v1473 = vpop.permute.xlu0 %1472
      %1474 = vrot.lane.b32.xlu0 %v1114, 32
      %v1475 = vpop.permute.xlu0 %1474
      %1476 = vrot.lane.b32.xlu0 %v1116, 32
      %v1477 = vpop.permute.xlu0 %1476
      %1478 = vrot.lane.b32.xlu0 %v1415, 32
      %v1479 = vpop.permute.xlu0 %1478
      %1480 = vrot.lane.b32.xlu0 %v1417, 32
      %v1481 = vpop.permute.xlu0 %1480
      %v1514 = vsel %vm279, %v456, %v640
      %v1515 = vsel %vm279, %v457, %v642
      %v1516 = vsel %vm279, %v459, %v644
      %v1517 = vsel %vm279, %v460, %v646
      %v1518 = vsel %vm279, %v462, %v648
      %v1519 = vsel %vm279, %v463, %v650
      %v1520 = vsel %vm279, %v465, %v652
      %v1521 = vsel %vm279, %v466, %v654
      %v1522 = vsel %vm279, %v468, %v656
      %v1523 = vsel %vm279, %v469, %v658
      %v1524 = vsel %vm279, %v471, %v660
      %v1525 = vsel %vm279, %v472, %v662
      %v1526 = vsel %vm279, %v474, %v664
      %v1527 = vsel %vm279, %v475, %v666
      %v1528 = vsel %vm279, %v477, %v668
      %v1529 = vsel %vm279, %v478, %v670
      %v1530 = vsel %vm279, %v480, %v672
      %v1531 = vsel %vm279, %v481, %v674
      %v1532 = vsel %vm279, %v483, %v676
      %v1533 = vsel %vm279, %v484, %v678
      %v1534 = vsel %vm279, %v486, %v680
      %v1535 = vsel %vm279, %v487, %v682
      %v1536 = vsel %vm279, %v489, %v684
      %v1537 = vsel %vm279, %v490, %v686
      %v1538 = vsel %vm279, %v492, %v688
      %v1539 = vsel %vm279, %v493, %v690
      %v1540 = vsel %vm279, %v495, %v692
      %v1541 = vsel %vm279, %v496, %v694
      %v1542 = vsel %vm279, %v498, %v696
      %v1543 = vsel %vm279, %v499, %v698
      %v1544 = vsel %vm279, %v501, %v700
      %v1545 = vsel %vm279, %v502, %v702
      %v1546 = vsel %vm335, %v1514, %v817
      %v1547 = vsel %vm335, %v1515, %v819
      %v1548 = vsel %vm335, %v1516, %v821
      %v1549 = vsel %vm335, %v1517, %v823
      %v1550 = vsel %vm335, %v1518, %v825
      %v1551 = vsel %vm335, %v1519, %v827
      %v1552 = vsel %vm335, %v1520, %v829
      %v1553 = vsel %vm335, %v1521, %v831
      %v1554 = vsel %vm335, %v1522, %v833
      %v1555 = vsel %vm335, %v1523, %v835
      %v1556 = vsel %vm335, %v1524, %v837
      %v1557 = vsel %vm335, %v1525, %v839
      %v1558 = vsel %vm335, %v1526, %v841
      %v1559 = vsel %vm335, %v1527, %v843
      %v1560 = vsel %vm335, %v1528, %v845
      %v1561 = vsel %vm335, %v1529, %v847
      %v1562 = vsel %vm335, %v1530, %v849
      %v1563 = vsel %vm335, %v1531, %v851
      %v1564 = vsel %vm335, %v1532, %v853
      %v1565 = vsel %vm335, %v1533, %v855
      %v1566 = vsel %vm335, %v1534, %v857
      %v1567 = vsel %vm335, %v1535, %v859
      %v1568 = vsel %vm335, %v1536, %v861
      %v1569 = vsel %vm335, %v1537, %v863
      %v1570 = vsel %vm335, %v1538, %v865
      %v1571 = vsel %vm335, %v1539, %v867
      %v1572 = vsel %vm335, %v1540, %v869
      %v1573 = vsel %vm335, %v1541, %v871
      %v1574 = vsel %vm335, %v1542, %v873
      %v1575 = vsel %vm335, %v1543, %v875
      %v1576 = vsel %vm335, %v1544, %v877
      %v1577 = vsel %vm335, %v1545, %v879
      %vm1578 = vcmask 97280
      %v1579 = vsel %vm1578, %v1546, %v915
      %v1580 = vsel %vm1578, %v1547, %v917
      %v1581 = vsel %vm1578, %v1548, %v919
      %v1582 = vsel %vm1578, %v1549, %v921
      %v1583 = vsel %vm1578, %v1550, %v923
      %v1584 = vsel %vm1578, %v1551, %v925
      %v1585 = vsel %vm1578, %v1552, %v927
      %v1586 = vsel %vm1578, %v1553, %v929
      %v1587 = vsel %vm1578, %v1554, %v931
      %v1588 = vsel %vm1578, %v1555, %v933
      %v1589 = vsel %vm1578, %v1556, %v935
      %v1590 = vsel %vm1578, %v1557, %v937
      %v1591 = vsel %vm1578, %v1558, %v939
      %v1592 = vsel %vm1578, %v1559, %v941
      %v1593 = vsel %vm1578, %v1560, %v943
      %v1594 = vsel %vm1578, %v1561, %v945
      %v1595 = vsel %vm1578, %v1562, %v947
      %v1596 = vsel %vm1578, %v1563, %v949
      %v1597 = vsel %vm1578, %v1564, %v951
      %v1598 = vsel %vm1578, %v1565, %v953
      %v1599 = vsel %vm1578, %v1566, %v955
      %v1600 = vsel %vm1578, %v1567, %v957
      %v1601 = vsel %vm1578, %v1568, %v959
      %v1602 = vsel %vm1578, %v1569, %v961
      %v1603 = vsel %vm1578, %v1570, %v963
      %v1604 = vsel %vm1578, %v1571, %v965
      %v1605 = vsel %vm1578, %v1572, %v967
      %v1606 = vsel %vm1578, %v1573, %v969
      %v1607 = vsel %vm1578, %v1574, %v971
      %v1608 = vsel %vm1578, %v1575, %v973
      %v1609 = vsel %vm1578, %v1576, %v975
      %v1610 = vsel %vm1578, %v1577, %v977
      %vm1611 = vcmask 130048
      %v1612 = vsel %vm1611, %v1579, %v1017
      %v1613 = vsel %vm1611, %v1580, %v1019
      %v1614 = vsel %vm1611, %v1581, %v1021
      %v1615 = vsel %vm1611, %v1582, %v1023
      %v1616 = vsel %vm1611, %v1583, %v1025
      %v1617 = vsel %vm1611, %v1584, %v1027
      %v1618 = vsel %vm1611, %v1585, %v1029
      %v1619 = vsel %vm1611, %v1586, %v1031
      %v1620 = vsel %vm1611, %v1587, %v1033
      %v1621 = vsel %vm1611, %v1588, %v1035
      %v1622 = vsel %vm1611, %v1589, %v1037
      %v1623 = vsel %vm1611, %v1590, %v1039
      %v1624 = vsel %vm1611, %v1591, %v1041
      %v1625 = vsel %vm1611, %v1592, %v1043
      %v1626 = vsel %vm1611, %v1593, %v1045
      %v1627 = vsel %vm1611, %v1594, %v1047
      %v1628 = vsel %vm1611, %v1595, %v1049
      %v1629 = vsel %vm1611, %v1596, %v1051
      %v1630 = vsel %vm1611, %v1597, %v1053
      %v1631 = vsel %vm1611, %v1598, %v1055
      %v1632 = vsel %vm1611, %v1599, %v1057
      %v1633 = vsel %vm1611, %v1600, %v1059
      %v1634 = vsel %vm1611, %v1601, %v1061
      %v1635 = vsel %vm1611, %v1602, %v1063
      %v1636 = vsel %vm1611, %v1603, %v1065
      %v1637 = vsel %vm1611, %v1604, %v1067
      %v1638 = vsel %vm1611, %v1605, %v1069
      %v1639 = vsel %vm1611, %v1606, %v1071
      %v1640 = vsel %vm1611, %v1607, %v1073
      %v1641 = vsel %vm1611, %v1608, %v1075
      %v1642 = vsel %vm1611, %v1609, %v1077
      %v1643 = vsel %vm1611, %v1610, %v1079
      %vm1644 = vcmask 162816
      %v1645 = vsel %vm1644, %v1612, %v1118
      %v1646 = vsel %vm1644, %v1613, %v1120
      %v1647 = vsel %vm1644, %v1614, %v1122
      %v1648 = vsel %vm1644, %v1615, %v1124
      %v1649 = vsel %vm1644, %v1616, %v1126
      %v1650 = vsel %vm1644, %v1617, %v1128
      %v1651 = vsel %vm1644, %v1618, %v1130
      %v1652 = vsel %vm1644, %v1619, %v1132
      %v1653 = vsel %vm1644, %v1620, %v1134
      %v1654 = vsel %vm1644, %v1621, %v1136
      %v1655 = vsel %vm1644, %v1622, %v1138
      %v1656 = vsel %vm1644, %v1623, %v1140
      %v1657 = vsel %vm1644, %v1624, %v1142
      %v1658 = vsel %vm1644, %v1625, %v1144
      %v1659 = vsel %vm1644, %v1626, %v1146
      %v1660 = vsel %vm1644, %v1627, %v1148
      %v1661 = vsel %vm1644, %v1628, %v1150
      %v1662 = vsel %vm1644, %v1629, %v1152
      %v1663 = vsel %vm1644, %v1630, %v1154
      %v1664 = vsel %vm1644, %v1631, %v1156
      %v1665 = vsel %vm1644, %v1632, %v1158
      %v1666 = vsel %vm1644, %v1633, %v1160
      %v1667 = vsel %vm1644, %v1634, %v1162
      %v1668 = vsel %vm1644, %v1635, %v1164
      %v1669 = vsel %vm1644, %v1636, %v1166
      %v1670 = vsel %vm1644, %v1637, %v1168
      %v1671 = vsel %vm1644, %v1638, %v1170
      %v1672 = vsel %vm1644, %v1639, %v1172
      %v1673 = vsel %vm1644, %v1640, %v1174
      %v1674 = vsel %vm1644, %v1641, %v1176
      %v1675 = vsel %vm1644, %v1642, %v1178
      %v1676 = vsel %vm1644, %v1643, %v1180
      %vm1677 = vcmask 195584
      %v1678 = vsel %vm1677, %v1645, %v1216
      %v1679 = vsel %vm1677, %v1646, %v1218
      %v1680 = vsel %vm1677, %v1647, %v1220
      %v1681 = vsel %vm1677, %v1648, %v1222
      %v1682 = vsel %vm1677, %v1649, %v1224
      %v1683 = vsel %vm1677, %v1650, %v1226
      %v1684 = vsel %vm1677, %v1651, %v1228
      %v1685 = vsel %vm1677, %v1652, %v1230
      %v1686 = vsel %vm1677, %v1653, %v1232
      %v1687 = vsel %vm1677, %v1654, %v1234
      %v1688 = vsel %vm1677, %v1655, %v1236
      %v1689 = vsel %vm1677, %v1656, %v1238
      %v1690 = vsel %vm1677, %v1657, %v1240
      %v1691 = vsel %vm1677, %v1658, %v1242
      %v1692 = vsel %vm1677, %v1659, %v1244
      %v1693 = vsel %vm1677, %v1660, %v1246
      %v1694 = vsel %vm1677, %v1661, %v1248
      %v1695 = vsel %vm1677, %v1662, %v1250
      %v1696 = vsel %vm1677, %v1663, %v1252
      %v1697 = vsel %vm1677, %v1664, %v1254
      %v1698 = vsel %vm1677, %v1665, %v1256
      %v1699 = vsel %vm1677, %v1666, %v1258
      %v1700 = vsel %vm1677, %v1667, %v1260
      %v1701 = vsel %vm1677, %v1668, %v1262
      %v1702 = vsel %vm1677, %v1669, %v1264
      %v1703 = vsel %vm1677, %v1670, %v1266
      %v1704 = vsel %vm1677, %v1671, %v1268
      %v1705 = vsel %vm1677, %v1672, %v1270
      %v1706 = vsel %vm1677, %v1673, %v1272
      %v1707 = vsel %vm1677, %v1674, %v1274
      %v1708 = vsel %vm1677, %v1675, %v1276
      %v1709 = vsel %vm1677, %v1676, %v1278
      %vm1710 = vcmask 228352
      %v1711 = vsel %vm1710, %v1678, %v1318
      %v1712 = vsel %vm1710, %v1679, %v1320
      %v1713 = vsel %vm1710, %v1680, %v1322
      %v1714 = vsel %vm1710, %v1681, %v1324
      %v1715 = vsel %vm1710, %v1682, %v1326
      %v1716 = vsel %vm1710, %v1683, %v1328
      %v1717 = vsel %vm1710, %v1684, %v1330
      %v1718 = vsel %vm1710, %v1685, %v1332
      %v1719 = vsel %vm1710, %v1686, %v1334
      %v1720 = vsel %vm1710, %v1687, %v1336
      %v1721 = vsel %vm1710, %v1688, %v1338
      %v1722 = vsel %vm1710, %v1689, %v1340
      %v1723 = vsel %vm1710, %v1690, %v1342
      %v1724 = vsel %vm1710, %v1691, %v1344
      %v1725 = vsel %vm1710, %v1692, %v1346
      %v1726 = vsel %vm1710, %v1693, %v1348
      %v1727 = vsel %vm1710, %v1694, %v1350
      %v1728 = vsel %vm1710, %v1695, %v1352
      %v1729 = vsel %vm1710, %v1696, %v1354
      %v1730 = vsel %vm1710, %v1697, %v1356
      %v1731 = vsel %vm1710, %v1698, %v1358
      %v1732 = vsel %vm1710, %v1699, %v1360
      %v1733 = vsel %vm1710, %v1700, %v1362
      %v1734 = vsel %vm1710, %v1701, %v1364
      %v1735 = vsel %vm1710, %v1702, %v1366
      %v1736 = vsel %vm1710, %v1703, %v1368
      %v1737 = vsel %vm1710, %v1704, %v1370
      %v1738 = vsel %vm1710, %v1705, %v1372
      %v1739 = vsel %vm1710, %v1706, %v1374
      %v1740 = vsel %vm1710, %v1707, %v1376
      %v1741 = vsel %vm1710, %v1708, %v1378
      %v1742 = vsel %vm1710, %v1709, %v1380
      %vm1743 = vcmask 261120
      %v1744 = vsel %vm1743, %v1711, %v1419
      %v1745 = vsel %vm1743, %v1712, %v1421
      %v1746 = vsel %vm1743, %v1713, %v1423
      %v1747 = vsel %vm1743, %v1714, %v1425
      %v1748 = vsel %vm1743, %v1715, %v1427
      %v1749 = vsel %vm1743, %v1716, %v1429
      %v1750 = vsel %vm1743, %v1717, %v1431
      %v1751 = vsel %vm1743, %v1718, %v1433
      %v1752 = vsel %vm1743, %v1719, %v1435
      %v1753 = vsel %vm1743, %v1720, %v1437
      %v1754 = vsel %vm1743, %v1721, %v1439
      %v1755 = vsel %vm1743, %v1722, %v1441
      %v1756 = vsel %vm1743, %v1723, %v1443
      %v1757 = vsel %vm1743, %v1724, %v1445
      %v1758 = vsel %vm1743, %v1725, %v1447
      %v1759 = vsel %vm1743, %v1726, %v1449
      %v1760 = vsel %vm1743, %v1727, %v1451
      %v1761 = vsel %vm1743, %v1728, %v1453
      %v1762 = vsel %vm1743, %v1729, %v1455
      %v1763 = vsel %vm1743, %v1730, %v1457
      %v1764 = vsel %vm1743, %v1731, %v1459
      %v1765 = vsel %vm1743, %v1732, %v1461
      %v1766 = vsel %vm1743, %v1733, %v1463
      %v1767 = vsel %vm1743, %v1734, %v1465
      %v1768 = vsel %vm1743, %v1735, %v1467
      %v1769 = vsel %vm1743, %v1736, %v1469
      %v1770 = vsel %vm1743, %v1737, %v1471
      %v1771 = vsel %vm1743, %v1738, %v1473
      %v1772 = vsel %vm1743, %v1739, %v1475
      %v1773 = vsel %vm1743, %v1740, %v1477
      %v1774 = vsel %vm1743, %v1741, %v1479
      %v1775 = vsel %vm1743, %v1742, %v1481
      %v1776 = vld [vmem:[%s1] sm:$0xff]
      %v1777 = vld [vmem:[%s1 + $0x8] sm:$0xff]
      %v1778 = vld [vmem:[%s1 + $0x10] sm:$0xff]
      %v1779 = vld [vmem:[%s1 + $0x18] sm:$0xff]
      %v1780 = vld [vmem:[%s1 + $0x20] sm:$0xf]
      %v1781 = vld [vmem:[%s2] sm:$0x1]
      %v1783 = vlaneseq
      %v1784 = vshrl.u32 %v1783, 7
      %v1785 = vsub.s32 0, %v1784
      %v1786 = vrot.slane %v1781, %v1785
      %vm1788 = vcmask 293888
      %v1790 = vsel %vm1788, %v1744, 0
      %v1793 = vsel %vm1788, %v1745, 0
      %v1796 = vsel %vm1788, %v1746, 0
      %v1799 = vsel %vm1788, %v1747, 0
      %v1802 = vsel %vm1788, %v1748, 0
      %v1805 = vsel %vm1788, %v1749, 0
      %v1808 = vsel %vm1788, %v1750, 0
      %v1811 = vsel %vm1788, %v1751, 0
      %v1814 = vsel %vm1788, %v1752, 0
      %v1817 = vsel %vm1788, %v1753, 0
      %v1820 = vsel %vm1788, %v1754, 0
      %v1823 = vsel %vm1788, %v1755, 0
      %v1826 = vsel %vm1788, %v1756, 0
      %v1829 = vsel %vm1788, %v1757, 0
      %v1832 = vsel %vm1788, %v1758, 0
      %v1835 = vsel %vm1788, %v1759, 0
      %v1838 = vsel %vm1788, %v1760, 0
      %v1841 = vsel %vm1788, %v1761, 0
      %v1844 = vsel %vm1788, %v1762, 0
      %v1847 = vsel %vm1788, %v1763, 0
      %v1850 = vsel %vm1788, %v1764, 0
      %v1853 = vsel %vm1788, %v1765, 0
      %v1856 = vsel %vm1788, %v1766, 0
      %v1859 = vsel %vm1788, %v1767, 0
      %v1862 = vsel %vm1788, %v1768, 0
      %v1865 = vsel %vm1788, %v1769, 0
      %v1868 = vsel %vm1788, %v1770, 0
      %v1871 = vsel %vm1788, %v1771, 0
      %v1874 = vsel %vm1788, %v1772, 0
      %v1877 = vsel %vm1788, %v1773, 0
      %v1880 = vsel %vm1788, %v1774, 0
      %v1883 = vsel %vm1788, %v1775, 0
      %vm1885 = vcmask 1043456
      %v1887 = vsel %vm1885, %v1780, 0
      %1889 = vmatprep.subr.mxu0 0.0
      %1890 = vmatpush1.msra.mxu0 %v1776
      %1891 = vmatprep.subr.mxu0 0.0
      %1892 = vmatpush1.msra.mxu0 %v1777
      %1893 = vmatprep.subr.mxu0 0.0
      %1894 = vmatpush1.msra.mxu0 %v1778
      %1895 = vmatprep.subr.mxu0 0.0
      %1896 = vmatpush1.msra.mxu0 %v1779
      %1897 = vmatprep.subr.mxu0 0.0
      %1898 = vmatpush1.msra.mxu0 %v1887
      %1899 = vmatprep.subr.mxu0 0.0
      %1900 = vmatpush1.msra.mxu0 0.0
      %1901 = vmatprep.subr.mxu0 0.0
      %1902 = vmatpush1.msra.mxu0 0.0
      %1903 = vmatprep.subr.mxu0 0.0
      %1904 = vmatpush1.msra.mxu0 0.0
      %1905 = vmatprep.subr.mxu0 0.0
      %1906 = vmatpush1.msra.mxu0 0.0
      %1907 = vmatprep.subr.mxu0 0.0
      %1908 = vmatpush1.msra.mxu0 0.0
      %1909 = vmatprep.subr.mxu0 0.0
      %1910 = vmatpush1.msra.mxu0 0.0
      %1911 = vmatprep.subr.mxu0 0.0
      %1912 = vmatpush1.msra.mxu0 0.0
      %1913 = vmatprep.subr.mxu0 0.0
      %1914 = vmatpush1.msra.mxu0 0.0
      %1915 = vmatprep.subr.mxu0 0.0
      %1916 = vmatpush1.msra.mxu0 0.0
      %1917 = vmatprep.subr.mxu0 0.0
      %1918 = vmatpush1.msra.mxu0 0.0
      %1919 = vmatprep.subr.mxu0 0.0
      %1920 = vmatpush1.msra.mxu0 0.0
      %1921 = vmatprep.subr.mxu0 0.0
      %1922 = vmatpush1.msra.mxu0 0.0
      %1923 = vmatprep.subr.mxu0 0.0
      %1924 = vmatpush1.msra.mxu0 0.0
      %1925 = vmatprep.subr.mxu0 0.0
      %1926 = vmatpush1.msra.mxu0 0.0
      %1927 = vmatprep.subr.mxu0 0.0
      %1928 = vmatpush1.msra.mxu0 0.0
      %1929 = vmatprep.subr.mxu0 0.0
      %1930 = vmatpush1.msra.mxu0 0.0
      %1931 = vmatprep.subr.mxu0 0.0
      %1932 = vmatpush1.msra.mxu0 0.0
      %1933 = vmatprep.subr.mxu0 0.0
      %1934 = vmatpush1.msra.mxu0 0.0
      %1935 = vmatprep.subr.mxu0 0.0
      %1936 = vmatpush1.msra.mxu0 0.0
      %1937 = vmatprep.subr.mxu0 0.0
      %1938 = vmatpush1.msra.mxu0 0.0
      %1939 = vmatprep.subr.mxu0 0.0
      %1940 = vmatpush1.msra.mxu0 0.0
      %1941 = vmatprep.subr.mxu0 0.0
      %1942 = vmatpush1.msra.mxu0 0.0
      %1943 = vmatprep.subr.mxu0 0.0
      %1944 = vmatpush1.msra.mxu0 0.0
      %1945 = vmatprep.subr.mxu0 0.0
      %1946 = vmatpush1.msra.mxu0 0.0
      %1947 = vmatprep.subr.mxu0 0.0
      %1948 = vmatpush1.msra.mxu0 0.0
      %1949 = vmatprep.subr.mxu0 0.0
      %1950 = vmatpush1.msra.mxu0 0.0
      %1951 = vmatprep.subr.mxu0 0.0
      %1952 = vmatpush1.msra.mxu0 0.0
      %1953 = vmatprep.mubr.f32.mxu0 0.0
      %1954 = vmatmul.mubr.f32.gmra.mrb[0].mxu0 %v1790
      %v1955 = vpop.f32.mrb[0].mxu0
      %v1956 = vadd.f32 %v1786, %v1955
      %v1957 = vpop.f32.mrb[0].mxu0
      %1958 = vmatprep.mubr.f32.mxu0 0.0
      %1959 = vmatmul.mubr.f32.gmra.mrb[0].mxu0 %v1793
      %v1960 = vpop.f32.mrb[0].mxu0
      %v1961 = vadd.f32 %v1786, %v1960
      %v1962 = vpop.f32.mrb[0].mxu0
      %1963 = vmatprep.mubr.f32.mxu0 0.0
      %1964 = vmatmul.mubr.f32.gmra.mrb[0].mxu0 %v1796
      %v1965 = vpop.f32.mrb[0].mxu0
      %v1966 = vadd.f32 %v1786, %v1965
      %v1967 = vpop.f32.mrb[0].mxu0
      %1968 = vmatprep.mubr.f32.mxu0 0.0
      %1969 = vmatmul.mubr.f32.gmra.mrb[0].mxu0 %v1799
      %v1970 = vpop.f32.mrb[0].mxu0
      %v1971 = vadd.f32 %v1786, %v1970
      %v1972 = vpop.f32.mrb[0].mxu0
      %1973 = vmatprep.mubr.f32.mxu0 0.0
      %1974 = vmatmul.mubr.f32.gmra.mrb[0].mxu0 %v1802
      %v1975 = vpop.f32.mrb[0].mxu0
      %v1976 = vadd.f32 %v1786, %v1975
      %v1977 = vpop.f32.mrb[0].mxu0
      %1978 = vmatprep.mubr.f32.mxu0 0.0
      %1979 = vmatmul.mubr.f32.gmra.mrb[0].mxu0 %v1805
      %v1980 = vpop.f32.mrb[0].mxu0
      %v1981 = vadd.f32 %v1786, %v1980
      %v1982 = vpop.f32.mrb[0].mxu0
      %1983 = vmatprep.mubr.f32.mxu0 0.0
      %1984 = vmatmul.mubr.f32.gmra.mrb[0].mxu0 %v1808
      %v1985 = vpop.f32.mrb[0].mxu0
      %v1986 = vadd.f32 %v1786, %v1985
      %v1987 = vpop.f32.mrb[0].mxu0
      %1988 = vmatprep.mubr.f32.mxu0 0.0
      %1989 = vmatmul.mubr.f32.gmra.mrb[0].mxu0 %v1811
      %v1990 = vpop.f32.mrb[0].mxu0
      %v1991 = vadd.f32 %v1786, %v1990
      %v1992 = vpop.f32.mrb[0].mxu0
      %1993 = vmatprep.mubr.f32.mxu0 0.0
      %1994 = vmatmul.mubr.f32.gmra.mrb[0].mxu0 %v1814
      %v1995 = vpop.f32.mrb[0].mxu0
      %v1996 = vadd.f32 %v1786, %v1995
      %v1997 = vpop.f32.mrb[0].mxu0
      %1998 = vmatprep.mubr.f32.mxu0 0.0
      %1999 = vmatmul.mubr.f32.gmra.mrb[0].mxu0 %v1817
      %v2000 = vpop.f32.mrb[0].mxu0
      %v2001 = vadd.f32 %v1786, %v2000
      %v2002 = vpop.f32.mrb[0].mxu0
      %2003 = vmatprep.mubr.f32.mxu0 0.0
      %2004 = vmatmul.mubr.f32.gmra.mrb[0].mxu0 %v1820
      %v2005 = vpop.f32.mrb[0].mxu0
      %v2006 = vadd.f32 %v1786, %v2005
      %v2007 = vpop.f32.mrb[0].mxu0
      %2008 = vmatprep.mubr.f32.mxu0 0.0
      %2009 = vmatmul.mubr.f32.gmra.mrb[0].mxu0 %v1823
      %v2010 = vpop.f32.mrb[0].mxu0
      %v2011 = vadd.f32 %v1786, %v2010
      %v2012 = vpop.f32.mrb[0].mxu0
      %2013 = vmatprep.mubr.f32.mxu0 0.0
      %2014 = vmatmul.mubr.f32.gmra.mrb[0].mxu0 %v1826
      %v2015 = vpop.f32.mrb[0].mxu0
      %v2016 = vadd.f32 %v1786, %v2015
      %v2017 = vpop.f32.mrb[0].mxu0
      %2018 = vmatprep.mubr.f32.mxu0 0.0
      %2019 = vmatmul.mubr.f32.gmra.mrb[0].mxu0 %v1829
      %v2020 = vpop.f32.mrb[0].mxu0
      %v2021 = vadd.f32 %v1786, %v2020
      %v2022 = vpop.f32.mrb[0].mxu0
      %2023 = vmatprep.mubr.f32.mxu0 0.0
      %2024 = vmatmul.mubr.f32.gmra.mrb[0].mxu0 %v1832
      %v2025 = vpop.f32.mrb[0].mxu0
      %v2026 = vadd.f32 %v1786, %v2025
      %v2027 = vpop.f32.mrb[0].mxu0
      %2028 = vmatprep.mubr.f32.mxu0 0.0
      %2029 = vmatmul.mubr.f32.gmra.mrb[0].mxu0 %v1835
      %v2030 = vpop.f32.mrb[0].mxu0
      %v2031 = vadd.f32 %v1786, %v2030
      %v2032 = vpop.f32.mrb[0].mxu0
      %2033 = vmatprep.mubr.f32.mxu0 0.0
      %2034 = vmatmul.mubr.f32.gmra.mrb[0].mxu0 %v1838
      %v2035 = vpop.f32.mrb[0].mxu0
      %v2036 = vadd.f32 %v1786, %v2035
      %v2037 = vpop.f32.mrb[0].mxu0
      %2038 = vmatprep.mubr.f32.mxu0 0.0
      %2039 = vmatmul.mubr.f32.gmra.mrb[0].mxu0 %v1841
      %v2040 = vpop.f32.mrb[0].mxu0
      %v2041 = vadd.f32 %v1786, %v2040
      %v2042 = vpop.f32.mrb[0].mxu0
      %2043 = vmatprep.mubr.f32.mxu0 0.0
      %2044 = vmatmul.mubr.f32.gmra.mrb[0].mxu0 %v1844
      %v2045 = vpop.f32.mrb[0].mxu0
      %v2046 = vadd.f32 %v1786, %v2045
      %v2047 = vpop.f32.mrb[0].mxu0
      %2048 = vmatprep.mubr.f32.mxu0 0.0
      %2049 = vmatmul.mubr.f32.gmra.mrb[0].mxu0 %v1847
      %v2050 = vpop.f32.mrb[0].mxu0
      %v2051 = vadd.f32 %v1786, %v2050
      %v2052 = vpop.f32.mrb[0].mxu0
      %2053 = vmatprep.mubr.f32.mxu0 0.0
      %2054 = vmatmul.mubr.f32.gmra.mrb[0].mxu0 %v1850
      %v2055 = vpop.f32.mrb[0].mxu0
      %v2056 = vadd.f32 %v1786, %v2055
      %v2057 = vpop.f32.mrb[0].mxu0
      %2058 = vmatprep.mubr.f32.mxu0 0.0
      %2059 = vmatmul.mubr.f32.gmra.mrb[0].mxu0 %v1853
      %v2060 = vpop.f32.mrb[0].mxu0
      %v2061 = vadd.f32 %v1786, %v2060
      %v2062 = vpop.f32.mrb[0].mxu0
      %2063 = vmatprep.mubr.f32.mxu0 0.0
      %2064 = vmatmul.mubr.f32.gmra.mrb[0].mxu0 %v1856
      %v2065 = vpop.f32.mrb[0].mxu0
      %v2066 = vadd.f32 %v1786, %v2065
      %v2067 = vpop.f32.mrb[0].mxu0
      %2068 = vmatprep.mubr.f32.mxu0 0.0
      %2069 = vmatmul.mubr.f32.gmra.mrb[0].mxu0 %v1859
      %v2070 = vpop.f32.mrb[0].mxu0
      %v2071 = vadd.f32 %v1786, %v2070
      %v2072 = vpop.f32.mrb[0].mxu0
      %2073 = vmatprep.mubr.f32.mxu0 0.0
      %2074 = vmatmul.mubr.f32.gmra.mrb[0].mxu0 %v1862
      %v2075 = vpop.f32.mrb[0].mxu0
      %v2076 = vadd.f32 %v1786, %v2075
      %v2077 = vpop.f32.mrb[0].mxu0
      %2078 = vmatprep.mubr.f32.mxu0 0.0
      %2079 = vmatmul.mubr.f32.gmra.mrb[0].mxu0 %v1865
      %v2080 = vpop.f32.mrb[0].mxu0
      %v2081 = vadd.f32 %v1786, %v2080
      %v2082 = vpop.f32.mrb[0].mxu0
      %2083 = vmatprep.mubr.f32.mxu0 0.0
      %2084 = vmatmul.mubr.f32.gmra.mrb[0].mxu0 %v1868
      %v2085 = vpop.f32.mrb[0].mxu0
      %v2086 = vadd.f32 %v1786, %v2085
      %v2087 = vpop.f32.mrb[0].mxu0
      %2088 = vmatprep.mubr.f32.mxu0 0.0
      %2089 = vmatmul.mubr.f32.gmra.mrb[0].mxu0 %v1871
      %v2090 = vpop.f32.mrb[0].mxu0
      %v2091 = vadd.f32 %v1786, %v2090
      %v2092 = vpop.f32.mrb[0].mxu0
      %2093 = vmatprep.mubr.f32.mxu0 0.0
      %2094 = vmatmul.mubr.f32.gmra.mrb[0].mxu0 %v1874
      %v2095 = vpop.f32.mrb[0].mxu0
      %v2096 = vadd.f32 %v1786, %v2095
      %v2097 = vpop.f32.mrb[0].mxu0
      %2098 = vmatprep.mubr.f32.mxu0 0.0
      %2099 = vmatmul.mubr.f32.gmra.mrb[0].mxu0 %v1877
      %v2100 = vpop.f32.mrb[0].mxu0
      %v2101 = vadd.f32 %v1786, %v2100
      %v2102 = vpop.f32.mrb[0].mxu0
      %2103 = vmatprep.mubr.f32.mxu0 0.0
      %2104 = vmatmul.mubr.f32.gmra.mrb[0].mxu0 %v1880
      %v2105 = vpop.f32.mrb[0].mxu0
      %v2106 = vadd.f32 %v1786, %v2105
      %v2107 = vpop.f32.mrb[0].mxu0
      %2108 = vmatprep.mubr.f32.mxu0 0.0
      %2109 = vmatmul.mubr.f32.gmra.mrb[0].mxu0 %v1883
      %v2110 = vpop.f32.mrb[0].mxu0
      %v2111 = vadd.f32 %v1786, %v2110
      %v2112 = vpop.f32.mrb[0].mxu0
      %2113 = vdwg.mxu0
      %v2114 = vmax.f32 %v1956, 0.0
      %v2115 = vmax.f32 %v1961, 0.0
      %v2116 = vmax.f32 %v1966, 0.0
      %v2117 = vmax.f32 %v1971, 0.0
      %v2118 = vmax.f32 %v1976, 0.0
      %v2119 = vmax.f32 %v1981, 0.0
      %v2120 = vmax.f32 %v1986, 0.0
      %v2121 = vmax.f32 %v1991, 0.0
      %v2122 = vmax.f32 %v1996, 0.0
      %v2123 = vmax.f32 %v2001, 0.0
      %v2124 = vmax.f32 %v2006, 0.0
      %v2125 = vmax.f32 %v2011, 0.0
      %v2126 = vmax.f32 %v2016, 0.0
      %v2127 = vmax.f32 %v2021, 0.0
      %v2128 = vmax.f32 %v2026, 0.0
      %v2129 = vmax.f32 %v2031, 0.0
      %v2130 = vmax.f32 %v2036, 0.0
      %v2131 = vmax.f32 %v2041, 0.0
      %v2132 = vmax.f32 %v2046, 0.0
      %v2133 = vmax.f32 %v2051, 0.0
      %v2134 = vmax.f32 %v2056, 0.0
      %v2135 = vmax.f32 %v2061, 0.0
      %v2136 = vmax.f32 %v2066, 0.0
      %v2137 = vmax.f32 %v2071, 0.0
      %v2138 = vmax.f32 %v2076, 0.0
      %v2139 = vmax.f32 %v2081, 0.0
      %v2140 = vmax.f32 %v2086, 0.0
      %v2141 = vmax.f32 %v2091, 0.0
      %v2142 = vmax.f32 %v2096, 0.0
      %v2143 = vmax.f32 %v2101, 0.0
      %v2144 = vmax.f32 %v2106, 0.0
      %v2145 = vmax.f32 %v2111, 0.0
      %s2146 = scalar_lea.vmem [#allocation3], 24
      %2147 = vst.msk [vmem:[%s2146 + $0x1] sm:$0xff] %vm335, %v2114
      %2148 = vst.msk [vmem:[%s2146 + $0x9] sm:$0xff] %vm335, %v2115
      %2149 = vst.msk [vmem:[%s2146 + $0x19] sm:$0xff] %vm335, %v2116
      %2150 = vst.msk [vmem:[%s2146 + $0x21] sm:$0xff] %vm335, %v2117
      %2151 = vst.msk [vmem:[%s2146 + $0x31] sm:$0xff] %vm335, %v2118
      %2152 = vst.msk [vmem:[%s2146 + $0x39] sm:$0xff] %vm335, %v2119
      %2153 = vst.msk [vmem:[%s2146 + $0x49] sm:$0xff] %vm335, %v2120
      %2154 = vst.msk [vmem:[%s2146 + $0x51] sm:$0xff] %vm335, %v2121
      %2155 = vst.msk [vmem:[%s2146 + $0x61] sm:$0xff] %vm335, %v2122
      %2156 = vst.msk [vmem:[%s2146 + $0x69] sm:$0xff] %vm335, %v2123
      %2157 = vst.msk [vmem:[%s2146 + $0x79] sm:$0xff] %vm335, %v2124
      %2158 = vst.msk [vmem:[%s2146 + $0x81] sm:$0xff] %vm335, %v2125
      %2159 = vst.msk [vmem:[%s2146 + $0x91] sm:$0xff] %vm335, %v2126
      %2160 = vst.msk [vmem:[%s2146 + $0x99] sm:$0xff] %vm335, %v2127
      %2161 = vst.msk [vmem:[%s2146 + $0xa9] sm:$0xff] %vm335, %v2128
      %2162 = vst.msk [vmem:[%s2146 + $0xb1] sm:$0xff] %vm335, %v2129
      %2163 = vst.msk [vmem:[%s2146 + $0xc1] sm:$0xff] %vm335, %v2130
      %2164 = vst.msk [vmem:[%s2146 + $0xc9] sm:$0xff] %vm335, %v2131
      %2165 = vst.msk [vmem:[%s2146 + $0xd9] sm:$0xff] %vm335, %v2132
      %2166 = vst.msk [vmem:[%s2146 + $0xe1] sm:$0xff] %vm335, %v2133
      %2167 = vst.msk [vmem:[%s2146 + $0xf1] sm:$0xff] %vm335, %v2134
      %2168 = vst.msk [vmem:[%s2146 + $0xf9] sm:$0xff] %vm335, %v2135
      %2169 = vst.msk [vmem:[%s2146 + $0x109] sm:$0xff] %vm335, %v2136
      %2170 = vst.msk [vmem:[%s2146 + $0x111] sm:$0xff] %vm335, %v2137
      %2171 = vst.msk [vmem:[%s2146 + $0x121] sm:$0xff] %vm335, %v2138
      %2172 = vst.msk [vmem:[%s2146 + $0x129] sm:$0xff] %vm335, %v2139
      %2173 = vst.msk [vmem:[%s2146 + $0x139] sm:$0xff] %vm335, %v2140
      %2174 = vst.msk [vmem:[%s2146 + $0x141] sm:$0xff] %vm335, %v2141
      %2175 = vst.msk [vmem:[%s2146 + $0x151] sm:$0xff] %vm335, %v2142
      %2176 = vst.msk [vmem:[%s2146 + $0x159] sm:$0xff] %vm335, %v2143
      %2177 = vst.msk [vmem:[%s2146 + $0x169] sm:$0xff] %vm335, %v2144
      %2178 = vst.msk [vmem:[%s2146 + $0x171] sm:$0xff] %vm335, %v2145
      %v2179 = vld [vmem:[%s5] sm:$0xf]
      %v2180 = vld [vmem:[%s6] sm:$0x1]
      %v2182 = vlaneseq
      %v2183 = vshrl.u32 %v2182, 7
      %v2184 = vsub.s32 0, %v2183
      %v2185 = vrot.slane %v2180, %v2184
      %v2188 = vsel %vm279, %v391, 0
      %v2191 = vsel %vm279, %v392, 0
      %v2194 = vsel %vm279, %v393, 0
      %v2197 = vsel %vm279, %v394, 0
      %v2200 = vsel %vm279, %v395, 0
      %v2203 = vsel %vm279, %v396, 0
      %v2206 = vsel %vm279, %v397, 0
      %v2209 = vsel %vm279, %v398, 0
      %v2212 = vsel %vm279, %v399, 0
      %v2215 = vsel %vm279, %v400, 0
      %v2218 = vsel %vm279, %v401, 0
      %v2221 = vsel %vm279, %v402, 0
      %v2224 = vsel %vm279, %v403, 0
      %v2227 = vsel %vm279, %v404, 0
      %v2230 = vsel %vm279, %v405, 0
      %v2233 = vsel %vm279, %v406, 0
      %v2236 = vsel %vm279, %v407, 0
      %v2239 = vsel %vm279, %v408, 0
      %v2242 = vsel %vm279, %v409, 0
      %v2245 = vsel %vm279, %v410, 0
      %v2248 = vsel %vm279, %v411, 0
      %v2251 = vsel %vm279, %v412, 0
      %v2254 = vsel %vm279, %v413, 0
      %v2257 = vsel %vm279, %v414, 0
      %v2260 = vsel %vm279, %v415, 0
      %v2263 = vsel %vm279, %v416, 0
      %v2266 = vsel %vm279, %v417, 0
      %v2269 = vsel %vm279, %v418, 0
      %v2272 = vsel %vm279, %v419, 0
      %v2275 = vsel %vm279, %v420, 0
      %v2278 = vsel %vm279, %v421, 0
      %v2281 = vsel %vm279, %v422, 0
      %v2284 = vsel %vm1885, %v2179, 0
      %2286 = vmatprep.subr.mxu0 0.0
      %2287 = vmatpush1.msra.mxu0 %v2284
      %2288 = vmatprep.subr.mxu0 0.0
      %2289 = vmatpush1.msra.mxu0 0.0
      %2290 = vmatprep.subr.mxu0 0.0
      %2291 = vmatpush1.msra.mxu0 0.0
      %2292 = vmatprep.subr.mxu0 0.0
      %2293 = vmatpush1.msra.mxu0 0.0
      %2294 = vmatprep.subr.mxu0 0.0
      %2295 = vmatpush1.msra.mxu0 0.0
      %2296 = vmatprep.subr.mxu0 0.0
      %2297 = vmatpush1.msra.mxu0 0.0
      %2298 = vmatprep.subr.mxu0 0.0
      %2299 = vmatpush1.msra.mxu0 0.0
      %2300 = vmatprep.subr.mxu0 0.0
      %2301 = vmatpush1.msra.mxu0 0.0
      %2302 = vmatprep.subr.mxu0 0.0
      %2303 = vmatpush1.msra.mxu0 0.0
      %2304 = vmatprep.subr.mxu0 0.0
      %2305 = vmatpush1.msra.mxu0 0.0
      %2306 = vmatprep.subr.mxu0 0.0
      %2307 = vmatpush1.msra.mxu0 0.0
      %2308 = vmatprep.subr.mxu0 0.0
      %2309 = vmatpush1.msra.mxu0 0.0
      %2310 = vmatprep.subr.mxu0 0.0
      %2311 = vmatpush1.msra.mxu0 0.0
      %2312 = vmatprep.subr.mxu0 0.0
      %2313 = vmatpush1.msra.mxu0 0.0
      %2314 = vmatprep.subr.mxu0 0.0
      %2315 = vmatpush1.msra.mxu0 0.0
      %2316 = vmatprep.subr.mxu0 0.0
      %2317 = vmatpush1.msra.mxu0 0.0
      %2318 = vmatprep.subr.mxu0 0.0
      %2319 = vmatpush1.msra.mxu0 0.0
      %2320 = vmatprep.subr.mxu0 0.0
      %2321 = vmatpush1.msra.mxu0 0.0
      %2322 = vmatprep.subr.mxu0 0.0
      %2323 = vmatpush1.msra.mxu0 0.0
      %2324 = vmatprep.subr.mxu0 0.0
      %2325 = vmatpush1.msra.mxu0 0.0
      %2326 = vmatprep.subr.mxu0 0.0
      %2327 = vmatpush1.msra.mxu0 0.0
      %2328 = vmatprep.subr.mxu0 0.0
      %2329 = vmatpush1.msra.mxu0 0.0
      %2330 = vmatprep.subr.mxu0 0.0
      %2331 = vmatpush1.msra.mxu0 0.0
      %2332 = vmatprep.subr.mxu0 0.0
      %2333 = vmatpush1.msra.mxu0 0.0
      %2334 = vmatprep.subr.mxu0 0.0
      %2335 = vmatpush1.msra.mxu0 0.0
      %2336 = vmatprep.subr.mxu0 0.0
      %2337 = vmatpush1.msra.mxu0 0.0
      %2338 = vmatprep.subr.mxu0 0.0
      %2339 = vmatpush1.msra.mxu0 0.0
      %2340 = vmatprep.subr.mxu0 0.0
      %2341 = vmatpush1.msra.mxu0 0.0
      %2342 = vmatprep.subr.mxu0 0.0
      %2343 = vmatpush1.msra.mxu0 0.0
      %2344 = vmatprep.subr.mxu0 0.0
      %2345 = vmatpush1.msra.mxu0 0.0
      %2346 = vmatprep.subr.mxu0 0.0
      %2347 = vmatpush1.msra.mxu0 0.0
      %2348 = vmatprep.subr.mxu0 0.0
      %2349 = vmatpush1.msra.mxu0 0.0
      %2350 = vmatprep.mubr.f32.mxu0 0.0
      %2351 = vmatmul.mubr.f32.gmra.mrb[0].mxu0 %v2188
      %v2352 = vpop.f32.mrb[0].mxu0
      %v2353 = vadd.f32 %v2185, %v2352
      %v2354 = vpop.f32.mrb[0].mxu0
      %2355 = vmatprep.mubr.f32.mxu0 0.0
      %2356 = vmatmul.mubr.f32.gmra.mrb[0].mxu0 %v2191
      %v2357 = vpop.f32.mrb[0].mxu0
      %v2358 = vadd.f32 %v2185, %v2357
      %v2359 = vpop.f32.mrb[0].mxu0
      %2360 = vmatprep.mubr.f32.mxu0 0.0
      %2361 = vmatmul.mubr.f32.gmra.mrb[0].mxu0 %v2194
      %v2362 = vpop.f32.mrb[0].mxu0
      %v2363 = vadd.f32 %v2185, %v2362
      %v2364 = vpop.f32.mrb[0].mxu0
      %2365 = vmatprep.mubr.f32.mxu0 0.0
      %2366 = vmatmul.mubr.f32.gmra.mrb[0].mxu0 %v2197
      %v2367 = vpop.f32.mrb[0].mxu0
      %v2368 = vadd.f32 %v2185, %v2367
      %v2369 = vpop.f32.mrb[0].mxu0
      %2370 = vmatprep.mubr.f32.mxu0 0.0
      %2371 = vmatmul.mubr.f32.gmra.mrb[0].mxu0 %v2200
      %v2372 = vpop.f32.mrb[0].mxu0
      %v2373 = vadd.f32 %v2185, %v2372
      %v2374 = vpop.f32.mrb[0].mxu0
      %2375 = vmatprep.mubr.f32.mxu0 0.0
      %2376 = vmatmul.mubr.f32.gmra.mrb[0].mxu0 %v2203
      %v2377 = vpop.f32.mrb[0].mxu0
      %v2378 = vadd.f32 %v2185, %v2377
      %v2379 = vpop.f32.mrb[0].mxu0
      %2380 = vmatprep.mubr.f32.mxu0 0.0
      %2381 = vmatmul.mubr.f32.gmra.mrb[0].mxu0 %v2206
      %v2382 = vpop.f32.mrb[0].mxu0
      %v2383 = vadd.f32 %v2185, %v2382
      %v2384 = vpop.f32.mrb[0].mxu0
      %2385 = vmatprep.mubr.f32.mxu0 0.0
      %2386 = vmatmul.mubr.f32.gmra.mrb[0].mxu0 %v2209
      %v2387 = vpop.f32.mrb[0].mxu0
      %v2388 = vadd.f32 %v2185, %v2387
      %v2389 = vpop.f32.mrb[0].mxu0
      %2390 = vmatprep.mubr.f32.mxu0 0.0
      %2391 = vmatmul.mubr.f32.gmra.mrb[0].mxu0 %v2212
      %v2392 = vpop.f32.mrb[0].mxu0
      %v2393 = vadd.f32 %v2185, %v2392
      %v2394 = vpop.f32.mrb[0].mxu0
      %2395 = vmatprep.mubr.f32.mxu0 0.0
      %2396 = vmatmul.mubr.f32.gmra.mrb[0].mxu0 %v2215
      %v2397 = vpop.f32.mrb[0].mxu0
      %v2398 = vadd.f32 %v2185, %v2397
      %v2399 = vpop.f32.mrb[0].mxu0
      %2400 = vmatprep.mubr.f32.mxu0 0.0
      %2401 = vmatmul.mubr.f32.gmra.mrb[0].mxu0 %v2218
      %v2402 = vpop.f32.mrb[0].mxu0
      %v2403 = vadd.f32 %v2185, %v2402
      %v2404 = vpop.f32.mrb[0].mxu0
      %2405 = vmatprep.mubr.f32.mxu0 0.0
      %2406 = vmatmul.mubr.f32.gmra.mrb[0].mxu0 %v2221
      %v2407 = vpop.f32.mrb[0].mxu0
      %v2408 = vadd.f32 %v2185, %v2407
      %v2409 = vpop.f32.mrb[0].mxu0
      %2410 = vmatprep.mubr.f32.mxu0 0.0
      %2411 = vmatmul.mubr.f32.gmra.mrb[0].mxu0 %v2224
      %v2412 = vpop.f32.mrb[0].mxu0
      %v2413 = vadd.f32 %v2185, %v2412
      %v2414 = vpop.f32.mrb[0].mxu0
      %2415 = vmatprep.mubr.f32.mxu0 0.0
      %2416 = vmatmul.mubr.f32.gmra.mrb[0].mxu0 %v2227
      %v2417 = vpop.f32.mrb[0].mxu0
      %v2418 = vadd.f32 %v2185, %v2417
      %v2419 = vpop.f32.mrb[0].mxu0
      %2420 = vmatprep.mubr.f32.mxu0 0.0
      %2421 = vmatmul.mubr.f32.gmra.mrb[0].mxu0 %v2230
      %v2422 = vpop.f32.mrb[0].mxu0
      %v2423 = vadd.f32 %v2185, %v2422
      %v2424 = vpop.f32.mrb[0].mxu0
      %2425 = vmatprep.mubr.f32.mxu0 0.0
      %2426 = vmatmul.mubr.f32.gmra.mrb[0].mxu0 %v2233
      %v2427 = vpop.f32.mrb[0].mxu0
      %v2428 = vadd.f32 %v2185, %v2427
      %v2429 = vpop.f32.mrb[0].mxu0
      %2430 = vmatprep.mubr.f32.mxu0 0.0
      %2431 = vmatmul.mubr.f32.gmra.mrb[0].mxu0 %v2236
      %v2432 = vpop.f32.mrb[0].mxu0
      %v2433 = vadd.f32 %v2185, %v2432
      %v2434 = vpop.f32.mrb[0].mxu0
      %2435 = vmatprep.mubr.f32.mxu0 0.0
      %2436 = vmatmul.mubr.f32.gmra.mrb[0].mxu0 %v2239
      %v2437 = vpop.f32.mrb[0].mxu0
      %v2438 = vadd.f32 %v2185, %v2437
      %v2439 = vpop.f32.mrb[0].mxu0
      %2440 = vmatprep.mubr.f32.mxu0 0.0
      %2441 = vmatmul.mubr.f32.gmra.mrb[0].mxu0 %v2242
      %v2442 = vpop.f32.mrb[0].mxu0
      %v2443 = vadd.f32 %v2185, %v2442
      %v2444 = vpop.f32.mrb[0].mxu0
      %2445 = vmatprep.mubr.f32.mxu0 0.0
      %2446 = vmatmul.mubr.f32.gmra.mrb[0].mxu0 %v2245
      %v2447 = vpop.f32.mrb[0].mxu0
      %v2448 = vadd.f32 %v2185, %v2447
      %v2449 = vpop.f32.mrb[0].mxu0
      %2450 = vmatprep.mubr.f32.mxu0 0.0
      %2451 = vmatmul.mubr.f32.gmra.mrb[0].mxu0 %v2248
      %v2452 = vpop.f32.mrb[0].mxu0
      %v2453 = vadd.f32 %v2185, %v2452
      %v2454 = vpop.f32.mrb[0].mxu0
      %2455 = vmatprep.mubr.f32.mxu0 0.0
      %2456 = vmatmul.mubr.f32.gmra.mrb[0].mxu0 %v2251
      %v2457 = vpop.f32.mrb[0].mxu0
      %v2458 = vadd.f32 %v2185, %v2457
      %v2459 = vpop.f32.mrb[0].mxu0
      %2460 = vmatprep.mubr.f32.mxu0 0.0
      %2461 = vmatmul.mubr.f32.gmra.mrb[0].mxu0 %v2254
      %v2462 = vpop.f32.mrb[0].mxu0
      %v2463 = vadd.f32 %v2185, %v2462
      %v2464 = vpop.f32.mrb[0].mxu0
      %2465 = vmatprep.mubr.f32.mxu0 0.0
      %2466 = vmatmul.mubr.f32.gmra.mrb[0].mxu0 %v2257
      %v2467 = vpop.f32.mrb[0].mxu0
      %v2468 = vadd.f32 %v2185, %v2467
      %v2469 = vpop.f32.mrb[0].mxu0
      %2470 = vmatprep.mubr.f32.mxu0 0.0
      %2471 = vmatmul.mubr.f32.gmra.mrb[0].mxu0 %v2260
      %v2472 = vpop.f32.mrb[0].mxu0
      %v2473 = vadd.f32 %v2185, %v2472
      %v2474 = vpop.f32.mrb[0].mxu0
      %2475 = vmatprep.mubr.f32.mxu0 0.0
      %2476 = vmatmul.mubr.f32.gmra.mrb[0].mxu0 %v2263
      %v2477 = vpop.f32.mrb[0].mxu0
      %v2478 = vadd.f32 %v2185, %v2477
      %v2479 = vpop.f32.mrb[0].mxu0
      %2480 = vmatprep.mubr.f32.mxu0 0.0
      %2481 = vmatmul.mubr.f32.gmra.mrb[0].mxu0 %v2266
      %v2482 = vpop.f32.mrb[0].mxu0
      %v2483 = vadd.f32 %v2185, %v2482
      %v2484 = vpop.f32.mrb[0].mxu0
      %2485 = vmatprep.mubr.f32.mxu0 0.0
      %2486 = vmatmul.mubr.f32.gmra.mrb[0].mxu0 %v2269
      %v2487 = vpop.f32.mrb[0].mxu0
      %v2488 = vadd.f32 %v2185, %v2487
      %v2489 = vpop.f32.mrb[0].mxu0
      %2490 = vmatprep.mubr.f32.mxu0 0.0
      %2491 = vmatmul.mubr.f32.gmra.mrb[0].mxu0 %v2272
      %v2492 = vpop.f32.mrb[0].mxu0
      %v2493 = vadd.f32 %v2185, %v2492
      %v2494 = vpop.f32.mrb[0].mxu0
      %2495 = vmatprep.mubr.f32.mxu0 0.0
      %2496 = vmatmul.mubr.f32.gmra.mrb[0].mxu0 %v2275
      %v2497 = vpop.f32.mrb[0].mxu0
      %v2498 = vadd.f32 %v2185, %v2497
      %v2499 = vpop.f32.mrb[0].mxu0
      %2500 = vmatprep.mubr.f32.mxu0 0.0
      %2501 = vmatmul.mubr.f32.gmra.mrb[0].mxu0 %v2278
      %v2502 = vpop.f32.mrb[0].mxu0
      %v2503 = vadd.f32 %v2185, %v2502
      %v2504 = vpop.f32.mrb[0].mxu0
      %2505 = vmatprep.mubr.f32.mxu0 0.0
      %2506 = vmatmul.mubr.f32.gmra.mrb[0].mxu0 %v2281
      %v2507 = vpop.f32.mrb[0].mxu0
      %v2508 = vadd.f32 %v2185, %v2507
      %v2509 = vpop.f32.mrb[0].mxu0
      %2510 = vdwg.mxu0
      %v2511 = vld [vmem:[#allocation3] sm:$0xff]
      %v2512 = vld [vmem:[#allocation3 + $0x8] sm:$0xff]
      %v2513 = vld [vmem:[#allocation3 + $0x10] sm:$0x3]
      %v2514 = vld [vmem:[#allocation3 + $0x18] sm:$0xff]
      %v2515 = vld [vmem:[#allocation3 + $0x20] sm:$0xff]
      %v2516 = vld [vmem:[#allocation3 + $0x28] sm:$0x3]
      %v2517 = vld [vmem:[#allocation3 + $0x30] sm:$0xff]
      %v2518 = vld [vmem:[#allocation3 + $0x38] sm:$0xff]
      %v2519 = vld [vmem:[#allocation3 + $0x40] sm:$0x3]
      %v2520 = vld [vmem:[#allocation3 + $0x48] sm:$0xff]
      %v2521 = vld [vmem:[#allocation3 + $0x50] sm:$0xff]
      %v2522 = vld [vmem:[#allocation3 + $0x58] sm:$0x3]
      %v2523 = vld [vmem:[#allocation3 + $0x60] sm:$0xff]
      %v2524 = vld [vmem:[#allocation3 + $0x68] sm:$0xff]
      %v2525 = vld [vmem:[#allocation3 + $0x70] sm:$0x3]
      %v2526 = vld [vmem:[#allocation3 + $0x78] sm:$0xff]
      %v2527 = vld [vmem:[#allocation3 + $0x80] sm:$0xff]
      %v2528 = vld [vmem:[#allocation3 + $0x88] sm:$0x3]
      %v2529 = vld [vmem:[#allocation3 + $0x90] sm:$0xff]
      %v2530 = vld [vmem:[#allocation3 + $0x98] sm:$0xff]
      %v2531 = vld [vmem:[#allocation3 + $0xa0] sm:$0x3]
      %v2532 = vld [vmem:[#allocation3 + $0xa8] sm:$0xff]
      %v2533 = vld [vmem:[#allocation3 + $0xb0] sm:$0xff]
      %v2534 = vld [vmem:[#allocation3 + $0xb8] sm:$0x3]
      %v2535 = vld [vmem:[#allocation3 + $0xc0] sm:$0xff]
      %v2536 = vld [vmem:[#allocation3 + $0xc8] sm:$0xff]
      %v2537 = vld [vmem:[#allocation3 + $0xd0] sm:$0x3]
      %v2538 = vld [vmem:[#allocation3 + $0xd8] sm:$0xff]
      %v2539 = vld [vmem:[#allocation3 + $0xe0] sm:$0xff]
      %v2540 = vld [vmem:[#allocation3 + $0xe8] sm:$0x3]
      %v2541 = vld [vmem:[#allocation3 + $0xf0] sm:$0xff]
      %v2542 = vld [vmem:[#allocation3 + $0xf8] sm:$0xff]
      %v2543 = vld [vmem:[#allocation3 + $0x100] sm:$0x3]
      %v2544 = vld [vmem:[#allocation3 + $0x108] sm:$0xff]
      %v2545 = vld [vmem:[#allocation3 + $0x110] sm:$0xff]
      %v2546 = vld [vmem:[#allocation3 + $0x118] sm:$0x3]
      %v2547 = vld [vmem:[#allocation3 + $0x120] sm:$0xff]
      %v2548 = vld [vmem:[#allocation3 + $0x128] sm:$0xff]
      %v2549 = vld [vmem:[#allocation3 + $0x130] sm:$0x3]
      %v2550 = vld [vmem:[#allocation3 + $0x138] sm:$0xff]
      %v2551 = vld [vmem:[#allocation3 + $0x140] sm:$0xff]
      %v2552 = vld [vmem:[#allocation3 + $0x148] sm:$0x3]
      %v2553 = vld [vmem:[#allocation3 + $0x150] sm:$0xff]
      %v2554 = vld [vmem:[#allocation3 + $0x158] sm:$0xff]
      %v2555 = vld [vmem:[#allocation3 + $0x160] sm:$0x3]
      %v2556 = vld [vmem:[#allocation3 + $0x168] sm:$0xff]
      %v2557 = vld [vmem:[#allocation3 + $0x170] sm:$0xff]
      %v2558 = vld [vmem:[#allocation3 + $0x178] sm:$0x3]
      %v2559 = vld [vmem:[#allocation3 + $0x180] sm:$0xff]
      %v2560 = vld [vmem:[#allocation3 + $0x188] sm:$0xff]
      %v2561 = vld [vmem:[#allocation3 + $0x190] sm:$0x3]
      %v2562 = vld [vmem:[#allocation3 + $0x198] sm:$0xff]
      %v2563 = vld [vmem:[#allocation3 + $0x1a0] sm:$0xff]
      %v2564 = vld [vmem:[#allocation3 + $0x1a8] sm:$0x3]
      %v2613 = vrot.slane %v2511, 1
      %v2614 = vrot.slane %v2512, 1
      %v2615 = vsel %vm558, %v2613, %v2614
      %v2616 = vrot.slane %v2513, 1
      %v2617 = vsel %vm558, %v2614, %v2616
      %v2618 = vrot.slane %v2514, 1
      %v2619 = vrot.slane %v2515, 1
      %v2620 = vsel %vm558, %v2618, %v2619
      %v2621 = vrot.slane %v2516, 1
      %v2622 = vsel %vm558, %v2619, %v2621
      %v2623 = vrot.slane %v2517, 1
      %v2624 = vrot.slane %v2518, 1
      %v2625 = vsel %vm558, %v2623, %v2624
      %v2626 = vrot.slane %v2519, 1
      %v2627 = vsel %vm558, %v2624, %v2626
      %v2628 = vrot.slane %v2520, 1
      %v2629 = vrot.slane %v2521, 1
      %v2630 = vsel %vm558, %v2628, %v2629
      %v2631 = vrot.slane %v2522, 1
      %v2632 = vsel %vm558, %v2629, %v2631
      %v2633 = vrot.slane %v2523, 1
      %v2634 = vrot.slane %v2524, 1
      %v2635 = vsel %vm558, %v2633, %v2634
      %v2636 = vrot.slane %v2525, 1
      %v2637 = vsel %vm558, %v2634, %v2636
      %v2638 = vrot.slane %v2526, 1
      %v2639 = vrot.slane %v2527, 1
      %v2640 = vsel %vm558, %v2638, %v2639
      %v2641 = vrot.slane %v2528, 1
      %v2642 = vsel %vm558, %v2639, %v2641
      %v2643 = vrot.slane %v2529, 1
      %v2644 = vrot.slane %v2530, 1
      %v2645 = vsel %vm558, %v2643, %v2644
      %v2646 = vrot.slane %v2531, 1
      %v2647 = vsel %vm558, %v2644, %v2646
      %v2648 = vrot.slane %v2532, 1
      %v2649 = vrot.slane %v2533, 1
      %v2650 = vsel %vm558, %v2648, %v2649
      %v2651 = vrot.slane %v2534, 1
      %v2652 = vsel %vm558, %v2649, %v2651
      %v2653 = vrot.slane %v2535, 1
      %v2654 = vrot.slane %v2536, 1
      %v2655 = vsel %vm558, %v2653, %v2654
      %v2656 = vrot.slane %v2537, 1
      %v2657 = vsel %vm558, %v2654, %v2656
      %v2658 = vrot.slane %v2538, 1
      %v2659 = vrot.slane %v2539, 1
      %v2660 = vsel %vm558, %v2658, %v2659
      %v2661 = vrot.slane %v2540, 1
      %v2662 = vsel %vm558, %v2659, %v2661
      %v2663 = vrot.slane %v2541, 1
      %v2664 = vrot.slane %v2542, 1
      %v2665 = vsel %vm558, %v2663, %v2664
      %v2666 = vrot.slane %v2543, 1
      %v2667 = vsel %vm558, %v2664, %v2666
      %v2668 = vrot.slane %v2544, 1
      %v2669 = vrot.slane %v2545, 1
      %v2670 = vsel %vm558, %v2668, %v2669
      %v2671 = vrot.slane %v2546, 1
      %v2672 = vsel %vm558, %v2669, %v2671
      %v2673 = vrot.slane %v2547, 1
      %v2674 = vrot.slane %v2548, 1
      %v2675 = vsel %vm558, %v2673, %v2674
      %v2676 = vrot.slane %v2549, 1
      %v2677 = vsel %vm558, %v2674, %v2676
      %v2678 = vrot.slane %v2550, 1
      %v2679 = vrot.slane %v2551, 1
      %v2680 = vsel %vm558, %v2678, %v2679
      %v2681 = vrot.slane %v2552, 1
      %v2682 = vsel %vm558, %v2679, %v2681
      %v2683 = vrot.slane %v2553, 1
      %v2684 = vrot.slane %v2554, 1
      %v2685 = vsel %vm558, %v2683, %v2684
      %v2686 = vrot.slane %v2555, 1
      %v2687 = vsel %vm558, %v2684, %v2686
      %v2688 = vrot.slane %v2556, 1
      %v2689 = vrot.slane %v2557, 1
      %v2690 = vsel %vm558, %v2688, %v2689
      %v2691 = vrot.slane %v2558, 1
      %v2692 = vsel %vm558, %v2689, %v2691
      %2693 = vrot.lane.b32.xlu0 %v2615, 8
      %v2694 = vpop.permute.xlu0 %2693
      %2695 = vrot.lane.b32.xlu0 %v2617, 8
      %v2696 = vpop.permute.xlu0 %2695
      %2697 = vrot.lane.b32.xlu0 %v2620, 8
      %v2698 = vpop.permute.xlu0 %2697
      %2699 = vrot.lane.b32.xlu0 %v2622, 8
      %v2700 = vpop.permute.xlu0 %2699
      %2701 = vrot.lane.b32.xlu0 %v2625, 8
      %v2702 = vpop.permute.xlu0 %2701
      %2703 = vrot.lane.b32.xlu0 %v2627, 8
      %v2704 = vpop.permute.xlu0 %2703
      %2705 = vrot.lane.b32.xlu0 %v2630, 8
      %v2706 = vpop.permute.xlu0 %2705
      %2707 = vrot.lane.b32.xlu0 %v2632, 8
      %v2708 = vpop.permute.xlu0 %2707
      %2709 = vrot.lane.b32.xlu0 %v2635, 8
      %v2710 = vpop.permute.xlu0 %2709
      %2711 = vrot.lane.b32.xlu0 %v2637, 8
      %v2712 = vpop.permute.xlu0 %2711
      %2713 = vrot.lane.b32.xlu0 %v2640, 8
      %v2714 = vpop.permute.xlu0 %2713
      %2715 = vrot.lane.b32.xlu0 %v2642, 8
      %v2716 = vpop.permute.xlu0 %2715
      %2717 = vrot.lane.b32.xlu0 %v2645, 8
      %v2718 = vpop.permute.xlu0 %2717
      %2719 = vrot.lane.b32.xlu0 %v2647, 8
      %v2720 = vpop.permute.xlu0 %2719
      %2721 = vrot.lane.b32.xlu0 %v2650, 8
      %v2722 = vpop.permute.xlu0 %2721
      %2723 = vrot.lane.b32.xlu0 %v2652, 8
      %v2724 = vpop.permute.xlu0 %2723
      %2725 = vrot.lane.b32.xlu0 %v2655, 8
      %v2726 = vpop.permute.xlu0 %2725
      %2727 = vrot.lane.b32.xlu0 %v2657, 8
      %v2728 = vpop.permute.xlu0 %2727
      %2729 = vrot.lane.b32.xlu0 %v2660, 8
      %v2730 = vpop.permute.xlu0 %2729
      %2731 = vrot.lane.b32.xlu0 %v2662, 8
      %v2732 = vpop.permute.xlu0 %2731
      %2733 = vrot.lane.b32.xlu0 %v2665, 8
      %v2734 = vpop.permute.xlu0 %2733
      %2735 = vrot.lane.b32.xlu0 %v2667, 8
      %v2736 = vpop.permute.xlu0 %2735
      %2737 = vrot.lane.b32.xlu0 %v2670, 8
      %v2738 = vpop.permute.xlu0 %2737
      %2739 = vrot.lane.b32.xlu0 %v2672, 8
      %v2740 = vpop.permute.xlu0 %2739
      %2741 = vrot.lane.b32.xlu0 %v2675, 8
      %v2742 = vpop.permute.xlu0 %2741
      %2743 = vrot.lane.b32.xlu0 %v2677, 8
      %v2744 = vpop.permute.xlu0 %2743
      %2745 = vrot.lane.b32.xlu0 %v2680, 8
      %v2746 = vpop.permute.xlu0 %2745
      %2747 = vrot.lane.b32.xlu0 %v2682, 8
      %v2748 = vpop.permute.xlu0 %2747
      %2749 = vrot.lane.b32.xlu0 %v2685, 8
      %v2750 = vpop.permute.xlu0 %2749
      %2751 = vrot.lane.b32.xlu0 %v2687, 8
      %v2752 = vpop.permute.xlu0 %2751
      %2753 = vrot.lane.b32.xlu0 %v2690, 8
      %v2754 = vpop.permute.xlu0 %2753
      %2755 = vrot.lane.b32.xlu0 %v2692, 8
      %v2756 = vpop.permute.xlu0 %2755
      %v2789 = vrot.slane %v2511, 2
      %v2790 = vrot.slane %v2512, 2
      %v2791 = vsel %vm735, %v2789, %v2790
      %v2792 = vrot.slane %v2513, 2
      %v2793 = vsel %vm735, %v2790, %v2792
      %v2794 = vrot.slane %v2514, 2
      %v2795 = vrot.slane %v2515, 2
      %v2796 = vsel %vm735, %v2794, %v2795
      %v2797 = vrot.slane %v2516, 2
      %v2798 = vsel %vm735, %v2795, %v2797
      %v2799 = vrot.slane %v2517, 2
      %v2800 = vrot.slane %v2518, 2
      %v2801 = vsel %vm735, %v2799, %v2800
      %v2802 = vrot.slane %v2519, 2
      %v2803 = vsel %vm735, %v2800, %v2802
      %v2804 = vrot.slane %v2520, 2
      %v2805 = vrot.slane %v2521, 2
      %v2806 = vsel %vm735, %v2804, %v2805
      %v2807 = vrot.slane %v2522, 2
      %v2808 = vsel %vm735, %v2805, %v2807
      %v2809 = vrot.slane %v2523, 2
      %v2810 = vrot.slane %v2524, 2
      %v2811 = vsel %vm735, %v2809, %v2810
      %v2812 = vrot.slane %v2525, 2
      %v2813 = vsel %vm735, %v2810, %v2812
      %v2814 = vrot.slane %v2526, 2
      %v2815 = vrot.slane %v2527, 2
      %v2816 = vsel %vm735, %v2814, %v2815
      %v2817 = vrot.slane %v2528, 2
      %v2818 = vsel %vm735, %v2815, %v2817
      %v2819 = vrot.slane %v2529, 2
      %v2820 = vrot.slane %v2530, 2
      %v2821 = vsel %vm735, %v2819, %v2820
      %v2822 = vrot.slane %v2531, 2
      %v2823 = vsel %vm735, %v2820, %v2822
      %v2824 = vrot.slane %v2532, 2
      %v2825 = vrot.slane %v2533, 2
      %v2826 = vsel %vm735, %v2824, %v2825
      %v2827 = vrot.slane %v2534, 2
      %v2828 = vsel %vm735, %v2825, %v2827
      %v2829 = vrot.slane %v2535, 2
      %v2830 = vrot.slane %v2536, 2
      %v2831 = vsel %vm735, %v2829, %v2830
      %v2832 = vrot.slane %v2537, 2
      %v2833 = vsel %vm735, %v2830, %v2832
      %v2834 = vrot.slane %v2538, 2
      %v2835 = vrot.slane %v2539, 2
      %v2836 = vsel %vm735, %v2834, %v2835
      %v2837 = vrot.slane %v2540, 2
      %v2838 = vsel %vm735, %v2835, %v2837
      %v2839 = vrot.slane %v2541, 2
      %v2840 = vrot.slane %v2542, 2
      %v2841 = vsel %vm735, %v2839, %v2840
      %v2842 = vrot.slane %v2543, 2
      %v2843 = vsel %vm735, %v2840, %v2842
      %v2844 = vrot.slane %v2544, 2
      %v2845 = vrot.slane %v2545, 2
      %v2846 = vsel %vm735, %v2844, %v2845
      %v2847 = vrot.slane %v2546, 2
      %v2848 = vsel %vm735, %v2845, %v2847
      %v2849 = vrot.slane %v2547, 2
      %v2850 = vrot.slane %v2548, 2
      %v2851 = vsel %vm735, %v2849, %v2850
      %v2852 = vrot.slane %v2549, 2
      %v2853 = vsel %vm735, %v2850, %v2852
      %v2854 = vrot.slane %v2550, 2
      %v2855 = vrot.slane %v2551, 2
      %v2856 = vsel %vm735, %v2854, %v2855
      %v2857 = vrot.slane %v2552, 2
      %v2858 = vsel %vm735, %v2855, %v2857
      %v2859 = vrot.slane %v2553, 2
      %v2860 = vrot.slane %v2554, 2
      %v2861 = vsel %vm735, %v2859, %v2860
      %v2862 = vrot.slane %v2555, 2
      %v2863 = vsel %vm735, %v2860, %v2862
      %v2864 = vrot.slane %v2556, 2
      %v2865 = vrot.slane %v2557, 2
      %v2866 = vsel %vm735, %v2864, %v2865
      %v2867 = vrot.slane %v2558, 2
      %v2868 = vsel %vm735, %v2865, %v2867
      %2869 = vrot.lane.b32.xlu0 %v2791, 16
      %v2870 = vpop.permute.xlu0 %2869
      %2871 = vrot.lane.b32.xlu0 %v2793, 16
      %v2872 = vpop.permute.xlu0 %2871
      %2873 = vrot.lane.b32.xlu0 %v2796, 16
      %v2874 = vpop.permute.xlu0 %2873
      %2875 = vrot.lane.b32.xlu0 %v2798, 16
      %v2876 = vpop.permute.xlu0 %2875
      %2877 = vrot.lane.b32.xlu0 %v2801, 16
      %v2878 = vpop.permute.xlu0 %2877
      %2879 = vrot.lane.b32.xlu0 %v2803, 16
      %v2880 = vpop.permute.xlu0 %2879
      %2881 = vrot.lane.b32.xlu0 %v2806, 16
      %v2882 = vpop.permute.xlu0 %2881
      %2883 = vrot.lane.b32.xlu0 %v2808, 16
      %v2884 = vpop.permute.xlu0 %2883
      %2885 = vrot.lane.b32.xlu0 %v2811, 16
      %v2886 = vpop.permute.xlu0 %2885
      %2887 = vrot.lane.b32.xlu0 %v2813, 16
      %v2888 = vpop.permute.xlu0 %2887
      %2889 = vrot.lane.b32.xlu0 %v2816, 16
      %v2890 = vpop.permute.xlu0 %2889
      %2891 = vrot.lane.b32.xlu0 %v2818, 16
      %v2892 = vpop.permute.xlu0 %2891
      %2893 = vrot.lane.b32.xlu0 %v2821, 16
      %v2894 = vpop.permute.xlu0 %2893
      %2895 = vrot.lane.b32.xlu0 %v2823, 16
      %v2896 = vpop.permute.xlu0 %2895
      %2897 = vrot.lane.b32.xlu0 %v2826, 16
      %v2898 = vpop.permute.xlu0 %2897
      %2899 = vrot.lane.b32.xlu0 %v2828, 16
      %v2900 = vpop.permute.xlu0 %2899
      %2901 = vrot.lane.b32.xlu0 %v2831, 16
      %v2902 = vpop.permute.xlu0 %2901
      %2903 = vrot.lane.b32.xlu0 %v2833, 16
      %v2904 = vpop.permute.xlu0 %2903
      %2905 = vrot.lane.b32.xlu0 %v2836, 16
      %v2906 = vpop.permute.xlu0 %2905
      %2907 = vrot.lane.b32.xlu0 %v2838, 16
      %v2908 = vpop.permute.xlu0 %2907
      %2909 = vrot.lane.b32.xlu0 %v2841, 16
      %v2910 = vpop.permute.xlu0 %2909
      %2911 = vrot.lane.b32.xlu0 %v2843, 16
      %v2912 = vpop.permute.xlu0 %2911
      %2913 = vrot.lane.b32.xlu0 %v2846, 16
      %v2914 = vpop.permute.xlu0 %2913
      %2915 = vrot.lane.b32.xlu0 %v2848, 16
      %v2916 = vpop.permute.xlu0 %2915
      %2917 = vrot.lane.b32.xlu0 %v2851, 16
      %v2918 = vpop.permute.xlu0 %2917
      %2919 = vrot.lane.b32.xlu0 %v2853, 16
      %v2920 = vpop.permute.xlu0 %2919
      %2921 = vrot.lane.b32.xlu0 %v2856, 16
      %v2922 = vpop.permute.xlu0 %2921
      %2923 = vrot.lane.b32.xlu0 %v2858, 16
      %v2924 = vpop.permute.xlu0 %2923
      %2925 = vrot.lane.b32.xlu0 %v2861, 16
      %v2926 = vpop.permute.xlu0 %2925
      %2927 = vrot.lane.b32.xlu0 %v2863, 16
      %v2928 = vpop.permute.xlu0 %2927
      %2929 = vrot.lane.b32.xlu0 %v2866, 16
      %v2930 = vpop.permute.xlu0 %2929
      %2931 = vrot.lane.b32.xlu0 %v2868, 16
      %v2932 = vpop.permute.xlu0 %2931
      %2967 = vrot.lane.b32.xlu0 %v2514, 24
      %v2968 = vpop.permute.xlu0 %2967
      %2969 = vrot.lane.b32.xlu0 %v2515, 24
      %v2970 = vpop.permute.xlu0 %2969
      %2971 = vrot.lane.b32.xlu0 %v2517, 24
      %v2972 = vpop.permute.xlu0 %2971
      %2973 = vrot.lane.b32.xlu0 %v2518, 24
      %v2974 = vpop.permute.xlu0 %2973
      %2975 = vrot.lane.b32.xlu0 %v2520, 24
      %v2976 = vpop.permute.xlu0 %2975
      %2977 = vrot.lane.b32.xlu0 %v2521, 24
      %v2978 = vpop.permute.xlu0 %2977
      %2979 = vrot.lane.b32.xlu0 %v2523, 24
      %v2980 = vpop.permute.xlu0 %2979
      %2981 = vrot.lane.b32.xlu0 %v2524, 24
      %v2982 = vpop.permute.xlu0 %2981
      %2983 = vrot.lane.b32.xlu0 %v2526, 24
      %v2984 = vpop.permute.xlu0 %2983
      %2985 = vrot.lane.b32.xlu0 %v2527, 24
      %v2986 = vpop.permute.xlu0 %2985
      %2987 = vrot.lane.b32.xlu0 %v2529, 24
      %v2988 = vpop.permute.xlu0 %2987
      %2989 = vrot.lane.b32.xlu0 %v2530, 24
      %v2990 = vpop.permute.xlu0 %2989
      %2991 = vrot.lane.b32.xlu0 %v2532, 24
      %v2992 = vpop.permute.xlu0 %2991
      %2993 = vrot.lane.b32.xlu0 %v2533, 24
      %v2994 = vpop.permute.xlu0 %2993
      %2995 = vrot.lane.b32.xlu0 %v2535, 24
      %v2996 = vpop.permute.xlu0 %2995
      %2997 = vrot.lane.b32.xlu0 %v2536, 24
      %v2998 = vpop.permute.xlu0 %2997
      %2999 = vrot.lane.b32.xlu0 %v2538, 24
      %v3000 = vpop.permute.xlu0 %2999
      %3001 = vrot.lane.b32.xlu0 %v2539, 24
      %v3002 = vpop.permute.xlu0 %3001
      %3003 = vrot.lane.b32.xlu0 %v2541, 24
      %v3004 = vpop.permute.xlu0 %3003
      %3005 = vrot.lane.b32.xlu0 %v2542, 24
      %v3006 = vpop.permute.xlu0 %3005
      %3007 = vrot.lane.b32.xlu0 %v2544, 24
      %v3008 = vpop.permute.xlu0 %3007
      %3009 = vrot.lane.b32.xlu0 %v2545, 24
      %v3010 = vpop.permute.xlu0 %3009
      %3011 = vrot.lane.b32.xlu0 %v2547, 24
      %v3012 = vpop.permute.xlu0 %3011
      %3013 = vrot.lane.b32.xlu0 %v2548, 24
      %v3014 = vpop.permute.xlu0 %3013
      %3015 = vrot.lane.b32.xlu0 %v2550, 24
      %v3016 = vpop.permute.xlu0 %3015
      %3017 = vrot.lane.b32.xlu0 %v2551, 24
      %v3018 = vpop.permute.xlu0 %3017
      %3019 = vrot.lane.b32.xlu0 %v2553, 24
      %v3020 = vpop.permute.xlu0 %3019
      %3021 = vrot.lane.b32.xlu0 %v2554, 24
      %v3022 = vpop.permute.xlu0 %3021
      %3023 = vrot.lane.b32.xlu0 %v2556, 24
      %v3024 = vpop.permute.xlu0 %3023
      %3025 = vrot.lane.b32.xlu0 %v2557, 24
      %v3026 = vpop.permute.xlu0 %3025
      %3027 = vrot.lane.b32.xlu0 %v2559, 24
      %v3028 = vpop.permute.xlu0 %3027
      %3029 = vrot.lane.b32.xlu0 %v2560, 24
      %v3030 = vpop.permute.xlu0 %3029
      %v3064 = vrot.slane %v2559, 1
      %v3065 = vrot.slane %v2560, 1
      %v3066 = vsel %vm558, %v3064, %v3065
      %v3067 = vrot.slane %v2561, 1
      %v3068 = vsel %vm558, %v3065, %v3067
      %3069 = vrot.lane.b32.xlu0 %v2620, 32
      %v3070 = vpop.permute.xlu0 %3069
      %3071 = vrot.lane.b32.xlu0 %v2622, 32
      %v3072 = vpop.permute.xlu0 %3071
      %3073 = vrot.lane.b32.xlu0 %v2625, 32
      %v3074 = vpop.permute.xlu0 %3073
      %3075 = vrot.lane.b32.xlu0 %v2627, 32
      %v3076 = vpop.permute.xlu0 %3075
      %3077 = vrot.lane.b32.xlu0 %v2630, 32
      %v3078 = vpop.permute.xlu0 %3077
      %3079 = vrot.lane.b32.xlu0 %v2632, 32
      %v3080 = vpop.permute.xlu0 %3079
      %3081 = vrot.lane.b32.xlu0 %v2635, 32
      %v3082 = vpop.permute.xlu0 %3081
      %3083 = vrot.lane.b32.xlu0 %v2637, 32
      %v3084 = vpop.permute.xlu0 %3083
      %3085 = vrot.lane.b32.xlu0 %v2640, 32
      %v3086 = vpop.permute.xlu0 %3085
      %3087 = vrot.lane.b32.xlu0 %v2642, 32
      %v3088 = vpop.permute.xlu0 %3087
      %3089 = vrot.lane.b32.xlu0 %v2645, 32
      %v3090 = vpop.permute.xlu0 %3089
      %3091 = vrot.lane.b32.xlu0 %v2647, 32
      %v3092 = vpop.permute.xlu0 %3091
      %3093 = vrot.lane.b32.xlu0 %v2650, 32
      %v3094 = vpop.permute.xlu0 %3093
      %3095 = vrot.lane.b32.xlu0 %v2652, 32
      %v3096 = vpop.permute.xlu0 %3095
      %3097 = vrot.lane.b32.xlu0 %v2655, 32
      %v3098 = vpop.permute.xlu0 %3097
      %3099 = vrot.lane.b32.xlu0 %v2657, 32
      %v3100 = vpop.permute.xlu0 %3099
      %3101 = vrot.lane.b32.xlu0 %v2660, 32
      %v3102 = vpop.permute.xlu0 %3101
      %3103 = vrot.lane.b32.xlu0 %v2662, 32
      %v3104 = vpop.permute.xlu0 %3103
      %3105 = vrot.lane.b32.xlu0 %v2665, 32
      %v3106 = vpop.permute.xlu0 %3105
      %3107 = vrot.lane.b32.xlu0 %v2667, 32
      %v3108 = vpop.permute.xlu0 %3107
      %3109 = vrot.lane.b32.xlu0 %v2670, 32
      %v3110 = vpop.permute.xlu0 %3109
      %3111 = vrot.lane.b32.xlu0 %v2672, 32
      %v3112 = vpop.permute.xlu0 %3111
      %3113 = vrot.lane.b32.xlu0 %v2675, 32
      %v3114 = vpop.permute.xlu0 %3113
      %3115 = vrot.lane.b32.xlu0 %v2677, 32
      %v3116 = vpop.permute.xlu0 %3115
      %3117 = vrot.lane.b32.xlu0 %v2680, 32
      %v3118 = vpop.permute.xlu0 %3117
      %3119 = vrot.lane.b32.xlu0 %v2682, 32
      %v3120 = vpop.permute.xlu0 %3119
      %3121 = vrot.lane.b32.xlu0 %v2685, 32
      %v3122 = vpop.permute.xlu0 %3121
      %3123 = vrot.lane.b32.xlu0 %v2687, 32
      %v3124 = vpop.permute.xlu0 %3123
      %3125 = vrot.lane.b32.xlu0 %v2690, 32
      %v3126 = vpop.permute.xlu0 %3125
      %3127 = vrot.lane.b32.xlu0 %v2692, 32
      %v3128 = vpop.permute.xlu0 %3127
      %3129 = vrot.lane.b32.xlu0 %v3066, 32
      %v3130 = vpop.permute.xlu0 %3129
      %3131 = vrot.lane.b32.xlu0 %v3068, 32
      %v3132 = vpop.permute.xlu0 %3131
      %v3165 = vrot.slane %v2559, 2
      %v3166 = vrot.slane %v2560, 2
      %v3167 = vsel %vm735, %v3165, %v3166
      %v3168 = vrot.slane %v2561, 2
      %v3169 = vsel %vm735, %v3166, %v3168
      %3170 = vrot.lane.b32.xlu0 %v2796, 40
      %v3171 = vpop.permute.xlu0 %3170
      %3172 = vrot.lane.b32.xlu0 %v2798, 40
      %v3173 = vpop.permute.xlu0 %3172
      %3174 = vrot.lane.b32.xlu0 %v2801, 40
      %v3175 = vpop.permute.xlu0 %3174
      %3176 = vrot.lane.b32.xlu0 %v2803, 40
      %v3177 = vpop.permute.xlu0 %3176
      %3178 = vrot.lane.b32.xlu0 %v2806, 40
      %v3179 = vpop.permute.xlu0 %3178
      %3180 = vrot.lane.b32.xlu0 %v2808, 40
      %v3181 = vpop.permute.xlu0 %3180
      %3182 = vrot.lane.b32.xlu0 %v2811, 40
      %v3183 = vpop.permute.xlu0 %3182
      %3184 = vrot.lane.b32.xlu0 %v2813, 40
      %v3185 = vpop.permute.xlu0 %3184
      %3186 = vrot.lane.b32.xlu0 %v2816, 40
      %v3187 = vpop.permute.xlu0 %3186
      %3188 = vrot.lane.b32.xlu0 %v2818, 40
      %v3189 = vpop.permute.xlu0 %3188
      %3190 = vrot.lane.b32.xlu0 %v2821, 40
      %v3191 = vpop.permute.xlu0 %3190
      %3192 = vrot.lane.b32.xlu0 %v2823, 40
      %v3193 = vpop.permute.xlu0 %3192
      %3194 = vrot.lane.b32.xlu0 %v2826, 40
      %v3195 = vpop.permute.xlu0 %3194
      %3196 = vrot.lane.b32.xlu0 %v2828, 40
      %v3197 = vpop.permute.xlu0 %3196
      %3198 = vrot.lane.b32.xlu0 %v2831, 40
      %v3199 = vpop.permute.xlu0 %3198
      %3200 = vrot.lane.b32.xlu0 %v2833, 40
      %v3201 = vpop.permute.xlu0 %3200
      %3202 = vrot.lane.b32.xlu0 %v2836, 40
      %v3203 = vpop.permute.xlu0 %3202
      %3204 = vrot.lane.b32.xlu0 %v2838, 40
      %v3205 = vpop.permute.xlu0 %3204
      %3206 = vrot.lane.b32.xlu0 %v2841, 40
      %v3207 = vpop.permute.xlu0 %3206
      %3208 = vrot.lane.b32.xlu0 %v2843, 40
      %v3209 = vpop.permute.xlu0 %3208
      %3210 = vrot.lane.b32.xlu0 %v2846, 40
      %v3211 = vpop.permute.xlu0 %3210
      %3212 = vrot.lane.b32.xlu0 %v2848, 40
      %v3213 = vpop.permute.xlu0 %3212
      %3214 = vrot.lane.b32.xlu0 %v2851, 40
      %v3215 = vpop.permute.xlu0 %3214
      %3216 = vrot.lane.b32.xlu0 %v2853, 40
      %v3217 = vpop.permute.xlu0 %3216
      %3218 = vrot.lane.b32.xlu0 %v2856, 40
      %v3219 = vpop.permute.xlu0 %3218
      %3220 = vrot.lane.b32.xlu0 %v2858, 40
      %v3221 = vpop.permute.xlu0 %3220
      %3222 = vrot.lane.b32.xlu0 %v2861, 40
      %v3223 = vpop.permute.xlu0 %3222
      %3224 = vrot.lane.b32.xlu0 %v2863, 40
      %v3225 = vpop.permute.xlu0 %3224
      %3226 = vrot.lane.b32.xlu0 %v2866, 40
      %v3227 = vpop.permute.xlu0 %3226
      %3228 = vrot.lane.b32.xlu0 %v2868, 40
      %v3229 = vpop.permute.xlu0 %3228
      %3230 = vrot.lane.b32.xlu0 %v3167, 40
      %v3231 = vpop.permute.xlu0 %3230
      %3232 = vrot.lane.b32.xlu0 %v3169, 40
      %v3233 = vpop.permute.xlu0 %3232
      %3268 = vrot.lane.b32.xlu0 %v2517, 48
      %v3269 = vpop.permute.xlu0 %3268
      %3270 = vrot.lane.b32.xlu0 %v2518, 48
      %v3271 = vpop.permute.xlu0 %3270
      %3272 = vrot.lane.b32.xlu0 %v2520, 48
      %v3273 = vpop.permute.xlu0 %3272
      %3274 = vrot.lane.b32.xlu0 %v2521, 48
      %v3275 = vpop.permute.xlu0 %3274
      %3276 = vrot.lane.b32.xlu0 %v2523, 48
      %v3277 = vpop.permute.xlu0 %3276
      %3278 = vrot.lane.b32.xlu0 %v2524, 48
      %v3279 = vpop.permute.xlu0 %3278
      %3280 = vrot.lane.b32.xlu0 %v2526, 48
      %v3281 = vpop.permute.xlu0 %3280
      %3282 = vrot.lane.b32.xlu0 %v2527, 48
      %v3283 = vpop.permute.xlu0 %3282
      %3284 = vrot.lane.b32.xlu0 %v2529, 48
      %v3285 = vpop.permute.xlu0 %3284
      %3286 = vrot.lane.b32.xlu0 %v2530, 48
      %v3287 = vpop.permute.xlu0 %3286
      %3288 = vrot.lane.b32.xlu0 %v2532, 48
      %v3289 = vpop.permute.xlu0 %3288
      %3290 = vrot.lane.b32.xlu0 %v2533, 48
      %v3291 = vpop.permute.xlu0 %3290
      %3292 = vrot.lane.b32.xlu0 %v2535, 48
      %v3293 = vpop.permute.xlu0 %3292
      %3294 = vrot.lane.b32.xlu0 %v2536, 48
      %v3295 = vpop.permute.xlu0 %3294
      %3296 = vrot.lane.b32.xlu0 %v2538, 48
      %v3297 = vpop.permute.xlu0 %3296
      %3298 = vrot.lane.b32.xlu0 %v2539, 48
      %v3299 = vpop.permute.xlu0 %3298
      %3300 = vrot.lane.b32.xlu0 %v2541, 48
      %v3301 = vpop.permute.xlu0 %3300
      %3302 = vrot.lane.b32.xlu0 %v2542, 48
      %v3303 = vpop.permute.xlu0 %3302
      %3304 = vrot.lane.b32.xlu0 %v2544, 48
      %v3305 = vpop.permute.xlu0 %3304
      %3306 = vrot.lane.b32.xlu0 %v2545, 48
      %v3307 = vpop.permute.xlu0 %3306
      %3308 = vrot.lane.b32.xlu0 %v2547, 48
      %v3309 = vpop.permute.xlu0 %3308
      %3310 = vrot.lane.b32.xlu0 %v2548, 48
      %v3311 = vpop.permute.xlu0 %3310
      %3312 = vrot.lane.b32.xlu0 %v2550, 48
      %v3313 = vpop.permute.xlu0 %3312
      %3314 = vrot.lane.b32.xlu0 %v2551, 48
      %v3315 = vpop.permute.xlu0 %3314
      %3316 = vrot.lane.b32.xlu0 %v2553, 48
      %v3317 = vpop.permute.xlu0 %3316
      %3318 = vrot.lane.b32.xlu0 %v2554, 48
      %v3319 = vpop.permute.xlu0 %3318
      %3320 = vrot.lane.b32.xlu0 %v2556, 48
      %v3321 = vpop.permute.xlu0 %3320
      %3322 = vrot.lane.b32.xlu0 %v2557, 48
      %v3323 = vpop.permute.xlu0 %3322
      %3324 = vrot.lane.b32.xlu0 %v2559, 48
      %v3325 = vpop.permute.xlu0 %3324
      %3326 = vrot.lane.b32.xlu0 %v2560, 48
      %v3327 = vpop.permute.xlu0 %3326
      %3328 = vrot.lane.b32.xlu0 %v2562, 48
      %v3329 = vpop.permute.xlu0 %3328
      %3330 = vrot.lane.b32.xlu0 %v2563, 48
      %v3331 = vpop.permute.xlu0 %3330
      %v3365 = vrot.slane %v2562, 1
      %v3366 = vrot.slane %v2563, 1
      %v3367 = vsel %vm558, %v3365, %v3366
      %v3368 = vrot.slane %v2564, 1
      %v3369 = vsel %vm558, %v3366, %v3368
      %3370 = vrot.lane.b32.xlu0 %v2625, 56
      %v3371 = vpop.permute.xlu0 %3370
      %3372 = vrot.lane.b32.xlu0 %v2627, 56
      %v3373 = vpop.permute.xlu0 %3372
      %3374 = vrot.lane.b32.xlu0 %v2630, 56
      %v3375 = vpop.permute.xlu0 %3374
      %3376 = vrot.lane.b32.xlu0 %v2632, 56
      %v3377 = vpop.permute.xlu0 %3376
      %3378 = vrot.lane.b32.xlu0 %v2635, 56
      %v3379 = vpop.permute.xlu0 %3378
      %3380 = vrot.lane.b32.xlu0 %v2637, 56
      %v3381 = vpop.permute.xlu0 %3380
      %3382 = vrot.lane.b32.xlu0 %v2640, 56
      %v3383 = vpop.permute.xlu0 %3382
      %3384 = vrot.lane.b32.xlu0 %v2642, 56
      %v3385 = vpop.permute.xlu0 %3384
      %3386 = vrot.lane.b32.xlu0 %v2645, 56
      %v3387 = vpop.permute.xlu0 %3386
      %3388 = vrot.lane.b32.xlu0 %v2647, 56
      %v3389 = vpop.permute.xlu0 %3388
      %3390 = vrot.lane.b32.xlu0 %v2650, 56
      %v3391 = vpop.permute.xlu0 %3390
      %3392 = vrot.lane.b32.xlu0 %v2652, 56
      %v3393 = vpop.permute.xlu0 %3392
      %3394 = vrot.lane.b32.xlu0 %v2655, 56
      %v3395 = vpop.permute.xlu0 %3394
      %3396 = vrot.lane.b32.xlu0 %v2657, 56
      %v3397 = vpop.permute.xlu0 %3396
      %3398 = vrot.lane.b32.xlu0 %v2660, 56
      %v3399 = vpop.permute.xlu0 %3398
      %3400 = vrot.lane.b32.xlu0 %v2662, 56
      %v3401 = vpop.permute.xlu0 %3400
      %3402 = vrot.lane.b32.xlu0 %v2665, 56
      %v3403 = vpop.permute.xlu0 %3402
      %3404 = vrot.lane.b32.xlu0 %v2667, 56
      %v3405 = vpop.permute.xlu0 %3404
      %3406 = vrot.lane.b32.xlu0 %v2670, 56
      %v3407 = vpop.permute.xlu0 %3406
      %3408 = vrot.lane.b32.xlu0 %v2672, 56
      %v3409 = vpop.permute.xlu0 %3408
      %3410 = vrot.lane.b32.xlu0 %v2675, 56
      %v3411 = vpop.permute.xlu0 %3410
      %3412 = vrot.lane.b32.xlu0 %v2677, 56
      %v3413 = vpop.permute.xlu0 %3412
      %3414 = vrot.lane.b32.xlu0 %v2680, 56
      %v3415 = vpop.permute.xlu0 %3414
      %3416 = vrot.lane.b32.xlu0 %v2682, 56
      %v3417 = vpop.permute.xlu0 %3416
      %3418 = vrot.lane.b32.xlu0 %v2685, 56
      %v3419 = vpop.permute.xlu0 %3418
      %3420 = vrot.lane.b32.xlu0 %v2687, 56
      %v3421 = vpop.permute.xlu0 %3420
      %3422 = vrot.lane.b32.xlu0 %v2690, 56
      %v3423 = vpop.permute.xlu0 %3422
      %3424 = vrot.lane.b32.xlu0 %v2692, 56
      %v3425 = vpop.permute.xlu0 %3424
      %3426 = vrot.lane.b32.xlu0 %v3066, 56
      %v3427 = vpop.permute.xlu0 %3426
      %3428 = vrot.lane.b32.xlu0 %v3068, 56
      %v3429 = vpop.permute.xlu0 %3428
      %3430 = vrot.lane.b32.xlu0 %v3367, 56
      %v3431 = vpop.permute.xlu0 %3430
      %3432 = vrot.lane.b32.xlu0 %v3369, 56
      %v3433 = vpop.permute.xlu0 %3432
      %v3466 = vrot.slane %v2562, 2
      %v3467 = vrot.slane %v2563, 2
      %v3468 = vsel %vm735, %v3466, %v3467
      %v3469 = vrot.slane %v2564, 2
      %v3470 = vsel %vm735, %v3467, %v3469
      %3471 = vrot.lane.b32.xlu0 %v2801, 64
      %v3472 = vpop.permute.xlu0 %3471
      %3473 = vrot.lane.b32.xlu0 %v2803, 64
      %v3474 = vpop.permute.xlu0 %3473
      %3475 = vrot.lane.b32.xlu0 %v2806, 64
      %v3476 = vpop.permute.xlu0 %3475
      %3477 = vrot.lane.b32.xlu0 %v2808, 64
      %v3478 = vpop.permute.xlu0 %3477
      %3479 = vrot.lane.b32.xlu0 %v2811, 64
      %v3480 = vpop.permute.xlu0 %3479
      %3481 = vrot.lane.b32.xlu0 %v2813, 64
      %v3482 = vpop.permute.xlu0 %3481
      %3483 = vrot.lane.b32.xlu0 %v2816, 64
      %v3484 = vpop.permute.xlu0 %3483
      %3485 = vrot.lane.b32.xlu0 %v2818, 64
      %v3486 = vpop.permute.xlu0 %3485
      %3487 = vrot.lane.b32.xlu0 %v2821, 64
      %v3488 = vpop.permute.xlu0 %3487
      %3489 = vrot.lane.b32.xlu0 %v2823, 64
      %v3490 = vpop.permute.xlu0 %3489
      %3491 = vrot.lane.b32.xlu0 %v2826, 64
      %v3492 = vpop.permute.xlu0 %3491
      %3493 = vrot.lane.b32.xlu0 %v2828, 64
      %v3494 = vpop.permute.xlu0 %3493
      %3495 = vrot.lane.b32.xlu0 %v2831, 64
      %v3496 = vpop.permute.xlu0 %3495
      %3497 = vrot.lane.b32.xlu0 %v2833, 64
      %v3498 = vpop.permute.xlu0 %3497
      %3499 = vrot.lane.b32.xlu0 %v2836, 64
      %v3500 = vpop.permute.xlu0 %3499
      %3501 = vrot.lane.b32.xlu0 %v2838, 64
      %v3502 = vpop.permute.xlu0 %3501
      %3503 = vrot.lane.b32.xlu0 %v2841, 64
      %v3504 = vpop.permute.xlu0 %3503
      %3505 = vrot.lane.b32.xlu0 %v2843, 64
      %v3506 = vpop.permute.xlu0 %3505
      %3507 = vrot.lane.b32.xlu0 %v2846, 64
      %v3508 = vpop.permute.xlu0 %3507
      %3509 = vrot.lane.b32.xlu0 %v2848, 64
      %v3510 = vpop.permute.xlu0 %3509
      %3511 = vrot.lane.b32.xlu0 %v2851, 64
      %v3512 = vpop.permute.xlu0 %3511
      %3513 = vrot.lane.b32.xlu0 %v2853, 64
      %v3514 = vpop.permute.xlu0 %3513
      %3515 = vrot.lane.b32.xlu0 %v2856, 64
      %v3516 = vpop.permute.xlu0 %3515
      %3517 = vrot.lane.b32.xlu0 %v2858, 64
      %v3518 = vpop.permute.xlu0 %3517
      %3519 = vrot.lane.b32.xlu0 %v2861, 64
      %v3520 = vpop.permute.xlu0 %3519
      %3521 = vrot.lane.b32.xlu0 %v2863, 64
      %v3522 = vpop.permute.xlu0 %3521
      %3523 = vrot.lane.b32.xlu0 %v2866, 64
      %v3524 = vpop.permute.xlu0 %3523
      %3525 = vrot.lane.b32.xlu0 %v2868, 64
      %v3526 = vpop.permute.xlu0 %3525
      %3527 = vrot.lane.b32.xlu0 %v3167, 64
      %v3528 = vpop.permute.xlu0 %3527
      %3529 = vrot.lane.b32.xlu0 %v3169, 64
      %v3530 = vpop.permute.xlu0 %3529
      %3531 = vrot.lane.b32.xlu0 %v3468, 64
      %v3532 = vpop.permute.xlu0 %3531
      %3533 = vrot.lane.b32.xlu0 %v3470, 64
      %v3534 = vpop.permute.xlu0 %3533
      %v3567 = vsel %vm335, %v2511, %v2694
      %v3568 = vsel %vm335, %v2512, %v2696
      %v3569 = vsel %vm335, %v2514, %v2698
      %v3570 = vsel %vm335, %v2515, %v2700
      %v3571 = vsel %vm335, %v2517, %v2702
      %v3572 = vsel %vm335, %v2518, %v2704
      %v3573 = vsel %vm335, %v2520, %v2706
      %v3574 = vsel %vm335, %v2521, %v2708
      %v3575 = vsel %vm335, %v2523, %v2710
      %v3576 = vsel %vm335, %v2524, %v2712
      %v3577 = vsel %vm335, %v2526, %v2714
      %v3578 = vsel %vm335, %v2527, %v2716
      %v3579 = vsel %vm335, %v2529, %v2718
      %v3580 = vsel %vm335, %v2530, %v2720
      %v3581 = vsel %vm335, %v2532, %v2722
      %v3582 = vsel %vm335, %v2533, %v2724
      %v3583 = vsel %vm335, %v2535, %v2726
      %v3584 = vsel %vm335, %v2536, %v2728
      %v3585 = vsel %vm335, %v2538, %v2730
      %v3586 = vsel %vm335, %v2539, %v2732
      %v3587 = vsel %vm335, %v2541, %v2734
      %v3588 = vsel %vm335, %v2542, %v2736
      %v3589 = vsel %vm335, %v2544, %v2738
      %v3590 = vsel %vm335, %v2545, %v2740
      %v3591 = vsel %vm335, %v2547, %v2742
      %v3592 = vsel %vm335, %v2548, %v2744
      %v3593 = vsel %vm335, %v2550, %v2746
      %v3594 = vsel %vm335, %v2551, %v2748
      %v3595 = vsel %vm335, %v2553, %v2750
      %v3596 = vsel %vm335, %v2554, %v2752
      %v3597 = vsel %vm335, %v2556, %v2754
      %v3598 = vsel %vm335, %v2557, %v2756
      %v3599 = vsel %vm1611, %v3567, %v2870
      %v3600 = vsel %vm1611, %v3568, %v2872
      %v3601 = vsel %vm1611, %v3569, %v2874
      %v3602 = vsel %vm1611, %v3570, %v2876
      %v3603 = vsel %vm1611, %v3571, %v2878
      %v3604 = vsel %vm1611, %v3572, %v2880
      %v3605 = vsel %vm1611, %v3573, %v2882
      %v3606 = vsel %vm1611, %v3574, %v2884
      %v3607 = vsel %vm1611, %v3575, %v2886
      %v3608 = vsel %vm1611, %v3576, %v2888
      %v3609 = vsel %vm1611, %v3577, %v2890
      %v3610 = vsel %vm1611, %v3578, %v2892
      %v3611 = vsel %vm1611, %v3579, %v2894
      %v3612 = vsel %vm1611, %v3580, %v2896
      %v3613 = vsel %vm1611, %v3581, %v2898
      %v3614 = vsel %vm1611, %v3582, %v2900
      %v3615 = vsel %vm1611, %v3583, %v2902
      %v3616 = vsel %vm1611, %v3584, %v2904
      %v3617 = vsel %vm1611, %v3585, %v2906
      %v3618 = vsel %vm1611, %v3586, %v2908
      %v3619 = vsel %vm1611, %v3587, %v2910
      %v3620 = vsel %vm1611, %v3588, %v2912
      %v3621 = vsel %vm1611, %v3589, %v2914
      %v3622 = vsel %vm1611, %v3590, %v2916
      %v3623 = vsel %vm1611, %v3591, %v2918
      %v3624 = vsel %vm1611, %v3592, %v2920
      %v3625 = vsel %vm1611, %v3593, %v2922
      %v3626 = vsel %vm1611, %v3594, %v2924
      %v3627 = vsel %vm1611, %v3595, %v2926
      %v3628 = vsel %vm1611, %v3596, %v2928
      %v3629 = vsel %vm1611, %v3597, %v2930
      %v3630 = vsel %vm1611, %v3598, %v2932
      %v3631 = vsel %vm1677, %v3599, %v2968
      %v3632 = vsel %vm1677, %v3600, %v2970
      %v3633 = vsel %vm1677, %v3601, %v2972
      %v3634 = vsel %vm1677, %v3602, %v2974
      %v3635 = vsel %vm1677, %v3603, %v2976
      %v3636 = vsel %vm1677, %v3604, %v2978
      %v3637 = vsel %vm1677, %v3605, %v2980
      %v3638 = vsel %vm1677, %v3606, %v2982
      %v3639 = vsel %vm1677, %v3607, %v2984
      %v3640 = vsel %vm1677, %v3608, %v2986
      %v3641 = vsel %vm1677, %v3609, %v2988
      %v3642 = vsel %vm1677, %v3610, %v2990
      %v3643 = vsel %vm1677, %v3611, %v2992
      %v3644 = vsel %vm1677, %v3612, %v2994
      %v3645 = vsel %vm1677, %v3613, %v2996
      %v3646 = vsel %vm1677, %v3614, %v2998
      %v3647 = vsel %vm1677, %v3615, %v3000
      %v3648 = vsel %vm1677, %v3616, %v3002
      %v3649 = vsel %vm1677, %v3617, %v3004
      %v3650 = vsel %vm1677, %v3618, %v3006
      %v3651 = vsel %vm1677, %v3619, %v3008
      %v3652 = vsel %vm1677, %v3620, %v3010
      %v3653 = vsel %vm1677, %v3621, %v3012
      %v3654 = vsel %vm1677, %v3622, %v3014
      %v3655 = vsel %vm1677, %v3623, %v3016
      %v3656 = vsel %vm1677, %v3624, %v3018
      %v3657 = vsel %vm1677, %v3625, %v3020
      %v3658 = vsel %vm1677, %v3626, %v3022
      %v3659 = vsel %vm1677, %v3627, %v3024
      %v3660 = vsel %vm1677, %v3628, %v3026
      %v3661 = vsel %vm1677, %v3629, %v3028
      %v3662 = vsel %vm1677, %v3630, %v3030
      %v3663 = vsel %vm1743, %v3631, %v3070
      %v3664 = vsel %vm1743, %v3632, %v3072
      %v3665 = vsel %vm1743, %v3633, %v3074
      %v3666 = vsel %vm1743, %v3634, %v3076
      %v3667 = vsel %vm1743, %v3635, %v3078
      %v3668 = vsel %vm1743, %v3636, %v3080
      %v3669 = vsel %vm1743, %v3637, %v3082
      %v3670 = vsel %vm1743, %v3638, %v3084
      %v3671 = vsel %vm1743, %v3639, %v3086
      %v3672 = vsel %vm1743, %v3640, %v3088
      %v3673 = vsel %vm1743, %v3641, %v3090
      %v3674 = vsel %vm1743, %v3642, %v3092
      %v3675 = vsel %vm1743, %v3643, %v3094
      %v3676 = vsel %vm1743, %v3644, %v3096
      %v3677 = vsel %vm1743, %v3645, %v3098
      %v3678 = vsel %vm1743, %v3646, %v3100
      %v3679 = vsel %vm1743, %v3647, %v3102
      %v3680 = vsel %vm1743, %v3648, %v3104
      %v3681 = vsel %vm1743, %v3649, %v3106
      %v3682 = vsel %vm1743, %v3650, %v3108
      %v3683 = vsel %vm1743, %v3651, %v3110
      %v3684 = vsel %vm1743, %v3652, %v3112
      %v3685 = vsel %vm1743, %v3653, %v3114
      %v3686 = vsel %vm1743, %v3654, %v3116
      %v3687 = vsel %vm1743, %v3655, %v3118
      %v3688 = vsel %vm1743, %v3656, %v3120
      %v3689 = vsel %vm1743, %v3657, %v3122
      %v3690 = vsel %vm1743, %v3658, %v3124
      %v3691 = vsel %vm1743, %v3659, %v3126
      %v3692 = vsel %vm1743, %v3660, %v3128
      %v3693 = vsel %vm1743, %v3661, %v3130
      %v3694 = vsel %vm1743, %v3662, %v3132
      %vm3695 = vcmask 326656
      %v3696 = vsel %vm3695, %v3663, %v3171
      %v3697 = vsel %vm3695, %v3664, %v3173
      %v3698 = vsel %vm3695, %v3665, %v3175
      %v3699 = vsel %vm3695, %v3666, %v3177
      %v3700 = vsel %vm3695, %v3667, %v3179
      %v3701 = vsel %vm3695, %v3668, %v3181
      %v3702 = vsel %vm3695, %v3669, %v3183
      %v3703 = vsel %vm3695, %v3670, %v3185
      %v3704 = vsel %vm3695, %v3671, %v3187
      %v3705 = vsel %vm3695, %v3672, %v3189
      %v3706 = vsel %vm3695, %v3673, %v3191
      %v3707 = vsel %vm3695, %v3674, %v3193
      %v3708 = vsel %vm3695, %v3675, %v3195
      %v3709 = vsel %vm3695, %v3676, %v3197
      %v3710 = vsel %vm3695, %v3677, %v3199
      %v3711 = vsel %vm3695, %v3678, %v3201
      %v3712 = vsel %vm3695, %v3679, %v3203
      %v3713 = vsel %vm3695, %v3680, %v3205
      %v3714 = vsel %vm3695, %v3681, %v3207
      %v3715 = vsel %vm3695, %v3682, %v3209
      %v3716 = vsel %vm3695, %v3683, %v3211
      %v3717 = vsel %vm3695, %v3684, %v3213
      %v3718 = vsel %vm3695, %v3685, %v3215
      %v3719 = vsel %vm3695, %v3686, %v3217
      %v3720 = vsel %vm3695, %v3687, %v3219
      %v3721 = vsel %vm3695, %v3688, %v3221
      %v3722 = vsel %vm3695, %v3689, %v3223
      %v3723 = vsel %vm3695, %v3690, %v3225
      %v3724 = vsel %vm3695, %v3691, %v3227
      %v3725 = vsel %vm3695, %v3692, %v3229
      %v3726 = vsel %vm3695, %v3693, %v3231
      %v3727 = vsel %vm3695, %v3694, %v3233
      %vm3728 = vcmask 392192
      %v3729 = vsel %vm3728, %v3696, %v3269
      %v3730 = vsel %vm3728, %v3697, %v3271
      %v3731 = vsel %vm3728, %v3698, %v3273
      %v3732 = vsel %vm3728, %v3699, %v3275
      %v3733 = vsel %vm3728, %v3700, %v3277
      %v3734 = vsel %vm3728, %v3701, %v3279
      %v3735 = vsel %vm3728, %v3702, %v3281
      %v3736 = vsel %vm3728, %v3703, %v3283
      %v3737 = vsel %vm3728, %v3704, %v3285
      %v3738 = vsel %vm3728, %v3705, %v3287
      %v3739 = vsel %vm3728, %v3706, %v3289
      %v3740 = vsel %vm3728, %v3707, %v3291
      %v3741 = vsel %vm3728, %v3708, %v3293
      %v3742 = vsel %vm3728, %v3709, %v3295
      %v3743 = vsel %vm3728, %v3710, %v3297
      %v3744 = vsel %vm3728, %v3711, %v3299
      %v3745 = vsel %vm3728, %v3712, %v3301
      %v3746 = vsel %vm3728, %v3713, %v3303
      %v3747 = vsel %vm3728, %v3714, %v3305
      %v3748 = vsel %vm3728, %v3715, %v3307
      %v3749 = vsel %vm3728, %v3716, %v3309
      %v3750 = vsel %vm3728, %v3717, %v3311
      %v3751 = vsel %vm3728, %v3718, %v3313
      %v3752 = vsel %vm3728, %v3719, %v3315
      %v3753 = vsel %vm3728, %v3720, %v3317
      %v3754 = vsel %vm3728, %v3721, %v3319
      %v3755 = vsel %vm3728, %v3722, %v3321
      %v3756 = vsel %vm3728, %v3723, %v3323
      %v3757 = vsel %vm3728, %v3724, %v3325
      %v3758 = vsel %vm3728, %v3725, %v3327
      %v3759 = vsel %vm3728, %v3726, %v3329
      %v3760 = vsel %vm3728, %v3727, %v3331
      %vm3761 = vcmask 457728
      %v3762 = vsel %vm3761, %v3729, %v3371
      %v3763 = vsel %vm3761, %v3730, %v3373
      %v3764 = vsel %vm3761, %v3731, %v3375
      %v3765 = vsel %vm3761, %v3732, %v3377
      %v3766 = vsel %vm3761, %v3733, %v3379
      %v3767 = vsel %vm3761, %v3734, %v3381
      %v3768 = vsel %vm3761, %v3735, %v3383
      %v3769 = vsel %vm3761, %v3736, %v3385
      %v3770 = vsel %vm3761, %v3737, %v3387
      %v3771 = vsel %vm3761, %v3738, %v3389
      %v3772 = vsel %vm3761, %v3739, %v3391
      %v3773 = vsel %vm3761, %v3740, %v3393
      %v3774 = vsel %vm3761, %v3741, %v3395
      %v3775 = vsel %vm3761, %v3742, %v3397
      %v3776 = vsel %vm3761, %v3743, %v3399
      %v3777 = vsel %vm3761, %v3744, %v3401
      %v3778 = vsel %vm3761, %v3745, %v3403
      %v3779 = vsel %vm3761, %v3746, %v3405
      %v3780 = vsel %vm3761, %v3747, %v3407
      %v3781 = vsel %vm3761, %v3748, %v3409
      %v3782 = vsel %vm3761, %v3749, %v3411
      %v3783 = vsel %vm3761, %v3750, %v3413
      %v3784 = vsel %vm3761, %v3751, %v3415
      %v3785 = vsel %vm3761, %v3752, %v3417
      %v3786 = vsel %vm3761, %v3753, %v3419
      %v3787 = vsel %vm3761, %v3754, %v3421
      %v3788 = vsel %vm3761, %v3755, %v3423
      %v3789 = vsel %vm3761, %v3756, %v3425
      %v3790 = vsel %vm3761, %v3757, %v3427
      %v3791 = vsel %vm3761, %v3758, %v3429
      %v3792 = vsel %vm3761, %v3759, %v3431
      %v3793 = vsel %vm3761, %v3760, %v3433
      %vm3794 = vcmask 523264
      %v3795 = vsel %vm3794, %v3762, %v3472
      %v3796 = vsel %vm3794, %v3763, %v3474
      %v3797 = vsel %vm3794, %v3764, %v3476
      %v3798 = vsel %vm3794, %v3765, %v3478
      %v3799 = vsel %vm3794, %v3766, %v3480
      %v3800 = vsel %vm3794, %v3767, %v3482
      %v3801 = vsel %vm3794, %v3768, %v3484
      %v3802 = vsel %vm3794, %v3769, %v3486
      %v3803 = vsel %vm3794, %v3770, %v3488
      %v3804 = vsel %vm3794, %v3771, %v3490
      %v3805 = vsel %vm3794, %v3772, %v3492
      %v3806 = vsel %vm3794, %v3773, %v3494
      %v3807 = vsel %vm3794, %v3774, %v3496
      %v3808 = vsel %vm3794, %v3775, %v3498
      %v3809 = vsel %vm3794, %v3776, %v3500
      %v3810 = vsel %vm3794, %v3777, %v3502
      %v3811 = vsel %vm3794, %v3778, %v3504
      %v3812 = vsel %vm3794, %v3779, %v3506
      %v3813 = vsel %vm3794, %v3780, %v3508
      %v3814 = vsel %vm3794, %v3781, %v3510
      %v3815 = vsel %vm3794, %v3782, %v3512
      %v3816 = vsel %vm3794, %v3783, %v3514
      %v3817 = vsel %vm3794, %v3784, %v3516
      %v3818 = vsel %vm3794, %v3785, %v3518
      %v3819 = vsel %vm3794, %v3786, %v3520
      %v3820 = vsel %vm3794, %v3787, %v3522
      %v3821 = vsel %vm3794, %v3788, %v3524
      %v3822 = vsel %vm3794, %v3789, %v3526
      %v3823 = vsel %vm3794, %v3790, %v3528
      %v3824 = vsel %vm3794, %v3791, %v3530
      %v3825 = vsel %vm3794, %v3792, %v3532
      %v3826 = vsel %vm3794, %v3793, %v3534
      %v3827 = vld [vmem:[%s3] sm:$0xff]
      %v3828 = vld [vmem:[%s3 + $0x8] sm:$0xff]
      %v3829 = vld [vmem:[%s3 + $0x10] sm:$0xff]
      %v3830 = vld [vmem:[%s3 + $0x18] sm:$0xff]
      %v3831 = vld [vmem:[%s3 + $0x20] sm:$0xff]
      %v3832 = vld [vmem:[%s3 + $0x28] sm:$0xff]
      %v3833 = vld [vmem:[%s3 + $0x30] sm:$0xff]
      %v3834 = vld [vmem:[%s3 + $0x38] sm:$0xff]
      %v3835 = vld [vmem:[%s3 + $0x40] sm:$0xff]
      %v3836 = vld [vmem:[%s4] sm:$0x1]
      %v3838 = vlaneseq
      %v3839 = vshrl.u32 %v3838, 7
      %v3840 = vsub.s32 0, %v3839
      %v3841 = vrot.slane %v3836, %v3840
      %vm3843 = vcmask 588800
      %v3845 = vsel %vm3843, %v3795, 0
      %v3848 = vsel %vm3843, %v3796, 0
      %v3851 = vsel %vm3843, %v3797, 0
      %v3854 = vsel %vm3843, %v3798, 0
      %v3857 = vsel %vm3843, %v3799, 0
      %v3860 = vsel %vm3843, %v3800, 0
      %v3863 = vsel %vm3843, %v3801, 0
      %v3866 = vsel %vm3843, %v3802, 0
      %v3869 = vsel %vm3843, %v3803, 0
      %v3872 = vsel %vm3843, %v3804, 0
      %v3875 = vsel %vm3843, %v3805, 0
      %v3878 = vsel %vm3843, %v3806, 0
      %v3881 = vsel %vm3843, %v3807, 0
      %v3884 = vsel %vm3843, %v3808, 0
      %v3887 = vsel %vm3843, %v3809, 0
      %v3890 = vsel %vm3843, %v3810, 0
      %v3893 = vsel %vm3843, %v3811, 0
      %v3896 = vsel %vm3843, %v3812, 0
      %v3899 = vsel %vm3843, %v3813, 0
      %v3902 = vsel %vm3843, %v3814, 0
      %v3905 = vsel %vm3843, %v3815, 0
      %v3908 = vsel %vm3843, %v3816, 0
      %v3911 = vsel %vm3843, %v3817, 0
      %v3914 = vsel %vm3843, %v3818, 0
      %v3917 = vsel %vm3843, %v3819, 0
      %v3920 = vsel %vm3843, %v3820, 0
      %v3923 = vsel %vm3843, %v3821, 0
      %v3926 = vsel %vm3843, %v3822, 0
      %v3929 = vsel %vm3843, %v3823, 0
      %v3932 = vsel %vm3843, %v3824, 0
      %v3935 = vsel %vm3843, %v3825, 0
      %v3938 = vsel %vm3843, %v3826, 0
      %3940 = vmatprep.subr.mxu0 0.0
      %3941 = vmatpush1.msra.mxu0 %v3827
      %3942 = vmatprep.subr.mxu0 0.0
      %3943 = vmatpush1.msra.mxu0 %v3828
      %3944 = vmatprep.subr.mxu0 0.0
      %3945 = vmatpush1.msra.mxu0 %v3829
      %3946 = vmatprep.subr.mxu0 0.0
      %3947 = vmatpush1.msra.mxu0 %v3830
      %3948 = vmatprep.subr.mxu0 0.0
      %3949 = vmatpush1.msra.mxu0 %v3831
      %3950 = vmatprep.subr.mxu0 0.0
      %3951 = vmatpush1.msra.mxu0 %v3832
      %3952 = vmatprep.subr.mxu0 0.0
      %3953 = vmatpush1.msra.mxu0 %v3833
      %3954 = vmatprep.subr.mxu0 0.0
      %3955 = vmatpush1.msra.mxu0 %v3834
      %3956 = vmatprep.subr.mxu0 0.0
      %3957 = vmatpush1.msra.mxu0 %v3835
      %3958 = vmatprep.subr.mxu0 0.0
      %3959 = vmatpush1.msra.mxu0 0.0
      %3960 = vmatprep.subr.mxu0 0.0
      %3961 = vmatpush1.msra.mxu0 0.0
      %3962 = vmatprep.subr.mxu0 0.0
      %3963 = vmatpush1.msra.mxu0 0.0
      %3964 = vmatprep.subr.mxu0 0.0
      %3965 = vmatpush1.msra.mxu0 0.0
      %3966 = vmatprep.subr.mxu0 0.0
      %3967 = vmatpush1.msra.mxu0 0.0
      %3968 = vmatprep.subr.mxu0 0.0
      %3969 = vmatpush1.msra.mxu0 0.0
      %3970 = vmatprep.subr.mxu0 0.0
      %3971 = vmatpush1.msra.mxu0 0.0
      %3972 = vmatprep.subr.mxu0 0.0
      %3973 = vmatpush1.msra.mxu0 0.0
      %3974 = vmatprep.subr.mxu0 0.0
      %3975 = vmatpush1.msra.mxu0 0.0
      %3976 = vmatprep.subr.mxu0 0.0
      %3977 = vmatpush1.msra.mxu0 0.0
      %3978 = vmatprep.subr.mxu0 0.0
      %3979 = vmatpush1.msra.mxu0 0.0
      %3980 = vmatprep.subr.mxu0 0.0
      %3981 = vmatpush1.msra.mxu0 0.0
      %3982 = vmatprep.subr.mxu0 0.0
      %3983 = vmatpush1.msra.mxu0 0.0
      %3984 = vmatprep.subr.mxu0 0.0
      %3985 = vmatpush1.msra.mxu0 0.0
      %3986 = vmatprep.subr.mxu0 0.0
      %3987 = vmatpush1.msra.mxu0 0.0
      %3988 = vmatprep.subr.mxu0 0.0
      %3989 = vmatpush1.msra.mxu0 0.0
      %3990 = vmatprep.subr.mxu0 0.0
      %3991 = vmatpush1.msra.mxu0 0.0
      %3992 = vmatprep.subr.mxu0 0.0
      %3993 = vmatpush1.msra.mxu0 0.0
      %3994 = vmatprep.subr.mxu0 0.0
      %3995 = vmatpush1.msra.mxu0 0.0
      %3996 = vmatprep.subr.mxu0 0.0
      %3997 = vmatpush1.msra.mxu0 0.0
      %3998 = vmatprep.subr.mxu0 0.0
      %3999 = vmatpush1.msra.mxu0 0.0
      %4000 = vmatprep.subr.mxu0 0.0
      %4001 = vmatpush1.msra.mxu0 0.0
      %4002 = vmatprep.subr.mxu0 0.0
      %4003 = vmatpush1.msra.mxu0 0.0
      %4004 = vmatprep.mubr.f32.mxu0 0.0
      %4005 = vmatmul.mubr.f32.gmra.mrb[0].mxu0 %v3845
      %v4006 = vpop.f32.mrb[0].mxu0
      %v4007 = vadd.f32 %v3841, %v4006
      %v4008 = vpop.f32.mrb[0].mxu0
      %4009 = vmatprep.mubr.f32.mxu0 0.0
      %4010 = vmatmul.mubr.f32.gmra.mrb[0].mxu0 %v3848
      %v4011 = vpop.f32.mrb[0].mxu0
      %v4012 = vadd.f32 %v3841, %v4011
      %v4013 = vpop.f32.mrb[0].mxu0
      %4014 = vmatprep.mubr.f32.mxu0 0.0
      %4015 = vmatmul.mubr.f32.gmra.mrb[0].mxu0 %v3851
      %v4016 = vpop.f32.mrb[0].mxu0
      %v4017 = vadd.f32 %v3841, %v4016
      %v4018 = vpop.f32.mrb[0].mxu0
      %4019 = vmatprep.mubr.f32.mxu0 0.0
      %4020 = vmatmul.mubr.f32.gmra.mrb[0].mxu0 %v3854
      %v4021 = vpop.f32.mrb[0].mxu0
      %v4022 = vadd.f32 %v3841, %v4021
      %v4023 = vpop.f32.mrb[0].mxu0
      %4024 = vmatprep.mubr.f32.mxu0 0.0
      %4025 = vmatmul.mubr.f32.gmra.mrb[0].mxu0 %v3857
      %v4026 = vpop.f32.mrb[0].mxu0
      %v4027 = vadd.f32 %v3841, %v4026
      %v4028 = vpop.f32.mrb[0].mxu0
      %4029 = vmatprep.mubr.f32.mxu0 0.0
      %4030 = vmatmul.mubr.f32.gmra.mrb[0].mxu0 %v3860
      %v4031 = vpop.f32.mrb[0].mxu0
      %v4032 = vadd.f32 %v3841, %v4031
      %v4033 = vpop.f32.mrb[0].mxu0
      %4034 = vmatprep.mubr.f32.mxu0 0.0
      %4035 = vmatmul.mubr.f32.gmra.mrb[0].mxu0 %v3863
      %v4036 = vpop.f32.mrb[0].mxu0
      %v4037 = vadd.f32 %v3841, %v4036
      %v4038 = vpop.f32.mrb[0].mxu0
      %4039 = vmatprep.mubr.f32.mxu0 0.0
      %4040 = vmatmul.mubr.f32.gmra.mrb[0].mxu0 %v3866
      %v4041 = vpop.f32.mrb[0].mxu0
      %v4042 = vadd.f32 %v3841, %v4041
      %v4043 = vpop.f32.mrb[0].mxu0
      %4044 = vmatprep.mubr.f32.mxu0 0.0
      %4045 = vmatmul.mubr.f32.gmra.mrb[0].mxu0 %v3869
      %v4046 = vpop.f32.mrb[0].mxu0
      %v4047 = vadd.f32 %v3841, %v4046
      %v4048 = vpop.f32.mrb[0].mxu0
      %4049 = vmatprep.mubr.f32.mxu0 0.0
      %4050 = vmatmul.mubr.f32.gmra.mrb[0].mxu0 %v3872
      %v4051 = vpop.f32.mrb[0].mxu0
      %v4052 = vadd.f32 %v3841, %v4051
      %v4053 = vpop.f32.mrb[0].mxu0
      %4054 = vmatprep.mubr.f32.mxu0 0.0
      %4055 = vmatmul.mubr.f32.gmra.mrb[0].mxu0 %v3875
      %v4056 = vpop.f32.mrb[0].mxu0
      %v4057 = vadd.f32 %v3841, %v4056
      %v4058 = vpop.f32.mrb[0].mxu0
      %4059 = vmatprep.mubr.f32.mxu0 0.0
      %4060 = vmatmul.mubr.f32.gmra.mrb[0].mxu0 %v3878
      %v4061 = vpop.f32.mrb[0].mxu0
      %v4062 = vadd.f32 %v3841, %v4061
      %v4063 = vpop.f32.mrb[0].mxu0
      %4064 = vmatprep.mubr.f32.mxu0 0.0
      %4065 = vmatmul.mubr.f32.gmra.mrb[0].mxu0 %v3881
      %v4066 = vpop.f32.mrb[0].mxu0
      %v4067 = vadd.f32 %v3841, %v4066
      %v4068 = vpop.f32.mrb[0].mxu0
      %4069 = vmatprep.mubr.f32.mxu0 0.0
      %4070 = vmatmul.mubr.f32.gmra.mrb[0].mxu0 %v3884
      %v4071 = vpop.f32.mrb[0].mxu0
      %v4072 = vadd.f32 %v3841, %v4071
      %v4073 = vpop.f32.mrb[0].mxu0
      %4074 = vmatprep.mubr.f32.mxu0 0.0
      %4075 = vmatmul.mubr.f32.gmra.mrb[0].mxu0 %v3887
      %v4076 = vpop.f32.mrb[0].mxu0
      %v4077 = vadd.f32 %v3841, %v4076
      %v4078 = vpop.f32.mrb[0].mxu0
      %4079 = vmatprep.mubr.f32.mxu0 0.0
      %4080 = vmatmul.mubr.f32.gmra.mrb[0].mxu0 %v3890
      %v4081 = vpop.f32.mrb[0].mxu0
      %v4082 = vadd.f32 %v3841, %v4081
      %v4083 = vpop.f32.mrb[0].mxu0
      %4084 = vmatprep.mubr.f32.mxu0 0.0
      %4085 = vmatmul.mubr.f32.gmra.mrb[0].mxu0 %v3893
      %v4086 = vpop.f32.mrb[0].mxu0
      %v4087 = vadd.f32 %v3841, %v4086
      %v4088 = vpop.f32.mrb[0].mxu0
      %4089 = vmatprep.mubr.f32.mxu0 0.0
      %4090 = vmatmul.mubr.f32.gmra.mrb[0].mxu0 %v3896
      %v4091 = vpop.f32.mrb[0].mxu0
      %v4092 = vadd.f32 %v3841, %v4091
      %v4093 = vpop.f32.mrb[0].mxu0
      %4094 = vmatprep.mubr.f32.mxu0 0.0
      %4095 = vmatmul.mubr.f32.gmra.mrb[0].mxu0 %v3899
      %v4096 = vpop.f32.mrb[0].mxu0
      %v4097 = vadd.f32 %v3841, %v4096
      %v4098 = vpop.f32.mrb[0].mxu0
      %4099 = vmatprep.mubr.f32.mxu0 0.0
      %4100 = vmatmul.mubr.f32.gmra.mrb[0].mxu0 %v3902
      %v4101 = vpop.f32.mrb[0].mxu0
      %v4102 = vadd.f32 %v3841, %v4101
      %v4103 = vpop.f32.mrb[0].mxu0
      %4104 = vmatprep.mubr.f32.mxu0 0.0
      %4105 = vmatmul.mubr.f32.gmra.mrb[0].mxu0 %v3905
      %v4106 = vpop.f32.mrb[0].mxu0
      %v4107 = vadd.f32 %v3841, %v4106
      %v4108 = vpop.f32.mrb[0].mxu0
      %4109 = vmatprep.mubr.f32.mxu0 0.0
      %4110 = vmatmul.mubr.f32.gmra.mrb[0].mxu0 %v3908
      %v4111 = vpop.f32.mrb[0].mxu0
      %v4112 = vadd.f32 %v3841, %v4111
      %v4113 = vpop.f32.mrb[0].mxu0
      %4114 = vmatprep.mubr.f32.mxu0 0.0
      %4115 = vmatmul.mubr.f32.gmra.mrb[0].mxu0 %v3911
      %v4116 = vpop.f32.mrb[0].mxu0
      %v4117 = vadd.f32 %v3841, %v4116
      %v4118 = vpop.f32.mrb[0].mxu0
      %4119 = vmatprep.mubr.f32.mxu0 0.0
      %4120 = vmatmul.mubr.f32.gmra.mrb[0].mxu0 %v3914
      %v4121 = vpop.f32.mrb[0].mxu0
      %v4122 = vadd.f32 %v3841, %v4121
      %v4123 = vpop.f32.mrb[0].mxu0
      %4124 = vmatprep.mubr.f32.mxu0 0.0
      %4125 = vmatmul.mubr.f32.gmra.mrb[0].mxu0 %v3917
      %v4126 = vpop.f32.mrb[0].mxu0
      %v4127 = vadd.f32 %v3841, %v4126
      %v4128 = vpop.f32.mrb[0].mxu0
      %4129 = vmatprep.mubr.f32.mxu0 0.0
      %4130 = vmatmul.mubr.f32.gmra.mrb[0].mxu0 %v3920
      %v4131 = vpop.f32.mrb[0].mxu0
      %v4132 = vadd.f32 %v3841, %v4131
      %v4133 = vpop.f32.mrb[0].mxu0
      %4134 = vmatprep.mubr.f32.mxu0 0.0
      %4135 = vmatmul.mubr.f32.gmra.mrb[0].mxu0 %v3923
      %v4136 = vpop.f32.mrb[0].mxu0
      %v4137 = vadd.f32 %v3841, %v4136
      %v4138 = vpop.f32.mrb[0].mxu0
      %4139 = vmatprep.mubr.f32.mxu0 0.0
      %4140 = vmatmul.mubr.f32.gmra.mrb[0].mxu0 %v3926
      %v4141 = vpop.f32.mrb[0].mxu0
      %v4142 = vadd.f32 %v3841, %v4141
      %v4143 = vpop.f32.mrb[0].mxu0
      %4144 = vmatprep.mubr.f32.mxu0 0.0
      %4145 = vmatmul.mubr.f32.gmra.mrb[0].mxu0 %v3929
      %v4146 = vpop.f32.mrb[0].mxu0
      %v4147 = vadd.f32 %v3841, %v4146
      %v4148 = vpop.f32.mrb[0].mxu0
      %4149 = vmatprep.mubr.f32.mxu0 0.0
      %4150 = vmatmul.mubr.f32.gmra.mrb[0].mxu0 %v3932
      %v4151 = vpop.f32.mrb[0].mxu0
      %v4152 = vadd.f32 %v3841, %v4151
      %v4153 = vpop.f32.mrb[0].mxu0
      %4154 = vmatprep.mubr.f32.mxu0 0.0
      %4155 = vmatmul.mubr.f32.gmra.mrb[0].mxu0 %v3935
      %v4156 = vpop.f32.mrb[0].mxu0
      %v4157 = vadd.f32 %v3841, %v4156
      %v4158 = vpop.f32.mrb[0].mxu0
      %4159 = vmatprep.mubr.f32.mxu0 0.0
      %4160 = vmatmul.mubr.f32.gmra.mrb[0].mxu0 %v3938
      %v4161 = vpop.f32.mrb[0].mxu0
      %v4162 = vadd.f32 %v3841, %v4161
      %v4163 = vpop.f32.mrb[0].mxu0
      %4164 = vdwg.mxu0
      %v4165 = vadd.f32 %v4007, %v2353
      %v4166 = vadd.f32 %v4012, %v2358
      %v4167 = vadd.f32 %v4017, %v2363
      %v4168 = vadd.f32 %v4022, %v2368
      %v4169 = vadd.f32 %v4027, %v2373
      %v4170 = vadd.f32 %v4032, %v2378
      %v4171 = vadd.f32 %v4037, %v2383
      %v4172 = vadd.f32 %v4042, %v2388
      %v4173 = vadd.f32 %v4047, %v2393
      %v4174 = vadd.f32 %v4052, %v2398
      %v4175 = vadd.f32 %v4057, %v2403
      %v4176 = vadd.f32 %v4062, %v2408
      %v4177 = vadd.f32 %v4067, %v2413
      %v4178 = vadd.f32 %v4072, %v2418
      %v4179 = vadd.f32 %v4077, %v2423
      %v4180 = vadd.f32 %v4082, %v2428
      %v4181 = vadd.f32 %v4087, %v2433
      %v4182 = vadd.f32 %v4092, %v2438
      %v4183 = vadd.f32 %v4097, %v2443
      %v4184 = vadd.f32 %v4102, %v2448
      %v4185 = vadd.f32 %v4107, %v2453
      %v4186 = vadd.f32 %v4112, %v2458
      %v4187 = vadd.f32 %v4117, %v2463
      %v4188 = vadd.f32 %v4122, %v2468
      %v4189 = vadd.f32 %v4127, %v2473
      %v4190 = vadd.f32 %v4132, %v2478
      %v4191 = vadd.f32 %v4137, %v2483
      %v4192 = vadd.f32 %v4142, %v2488
      %v4193 = vadd.f32 %v4147, %v2493
      %v4194 = vadd.f32 %v4152, %v2498
      %v4195 = vadd.f32 %v4157, %v2503
      %v4196 = vadd.f32 %v4162, %v2508
      %v4197 = vmax.f32 %v4165, 0.0
      %v4198 = vmax.f32 %v4166, 0.0
      %v4199 = vmax.f32 %v4167, 0.0
      %v4200 = vmax.f32 %v4168, 0.0
      %v4201 = vmax.f32 %v4169, 0.0
      %v4202 = vmax.f32 %v4170, 0.0
      %v4203 = vmax.f32 %v4171, 0.0
      %v4204 = vmax.f32 %v4172, 0.0
      %v4205 = vmax.f32 %v4173, 0.0
      %v4206 = vmax.f32 %v4174, 0.0
      %v4207 = vmax.f32 %v4175, 0.0
      %v4208 = vmax.f32 %v4176, 0.0
      %v4209 = vmax.f32 %v4177, 0.0
      %v4210 = vmax.f32 %v4178, 0.0
      %v4211 = vmax.f32 %v4179, 0.0
      %v4212 = vmax.f32 %v4180, 0.0
      %v4213 = vmax.f32 %v4181, 0.0
      %v4214 = vmax.f32 %v4182, 0.0
      %v4215 = vmax.f32 %v4183, 0.0
      %v4216 = vmax.f32 %v4184, 0.0
      %v4217 = vmax.f32 %v4185, 0.0
      %v4218 = vmax.f32 %v4186, 0.0
      %v4219 = vmax.f32 %v4187, 0.0
      %v4220 = vmax.f32 %v4188, 0.0
      %v4221 = vmax.f32 %v4189, 0.0
      %v4222 = vmax.f32 %v4190, 0.0
      %v4223 = vmax.f32 %v4191, 0.0
      %v4224 = vmax.f32 %v4192, 0.0
      %v4225 = vmax.f32 %v4193, 0.0
      %v4226 = vmax.f32 %v4194, 0.0
      %v4227 = vmax.f32 %v4195, 0.0
      %v4228 = vmax.f32 %v4196, 0.0
      %4229 = vst.msk [vmem:[%s278] sm:$0xff] %vm335, %v4197
      %4230 = vst.msk [vmem:[%s278 + $0x8] sm:$0xff] %vm335, %v4198
      %4231 = vst.msk [vmem:[%s278 + $0x10] sm:$0xff] %vm335, %v4199
      %4232 = vst.msk [vmem:[%s278 + $0x18] sm:$0xff] %vm335, %v4200
      %4233 = vst.msk [vmem:[%s278 + $0x20] sm:$0xff] %vm335, %v4201
      %4234 = vst.msk [vmem:[%s278 + $0x28] sm:$0xff] %vm335, %v4202
      %4235 = vst.msk [vmem:[%s278 + $0x30] sm:$0xff] %vm335, %v4203
      %4236 = vst.msk [vmem:[%s278 + $0x38] sm:$0xff] %vm335, %v4204
      %4237 = vst.msk [vmem:[%s278 + $0x40] sm:$0xff] %vm335, %v4205
      %4238 = vst.msk [vmem:[%s278 + $0x48] sm:$0xff] %vm335, %v4206
      %4239 = vst.msk [vmem:[%s278 + $0x50] sm:$0xff] %vm335, %v4207
      %4240 = vst.msk [vmem:[%s278 + $0x58] sm:$0xff] %vm335, %v4208
      %4241 = vst.msk [vmem:[%s278 + $0x60] sm:$0xff] %vm335, %v4209
      %4242 = vst.msk [vmem:[%s278 + $0x68] sm:$0xff] %vm335, %v4210
      %4243 = vst.msk [vmem:[%s278 + $0x70] sm:$0xff] %vm335, %v4211
      %4244 = vst.msk [vmem:[%s278 + $0x78] sm:$0xff] %vm335, %v4212
      %4245 = vst.msk [vmem:[%s278 + $0x80] sm:$0xff] %vm335, %v4213
      %4246 = vst.msk [vmem:[%s278 + $0x88] sm:$0xff] %vm335, %v4214
      %4247 = vst.msk [vmem:[%s278 + $0x90] sm:$0xff] %vm335, %v4215
      %4248 = vst.msk [vmem:[%s278 + $0x98] sm:$0xff] %vm335, %v4216
      %4249 = vst.msk [vmem:[%s278 + $0xa0] sm:$0xff] %vm335, %v4217
      %4250 = vst.msk [vmem:[%s278 + $0xa8] sm:$0xff] %vm335, %v4218
      %4251 = vst.msk [vmem:[%s278 + $0xb0] sm:$0xff] %vm335, %v4219
      %4252 = vst.msk [vmem:[%s278 + $0xb8] sm:$0xff] %vm335, %v4220
      %4253 = vst.msk [vmem:[%s278 + $0xc0] sm:$0xff] %vm335, %v4221
      %4254 = vst.msk [vmem:[%s278 + $0xc8] sm:$0xff] %vm335, %v4222
      %4255 = vst.msk [vmem:[%s278 + $0xd0] sm:$0xff] %vm335, %v4223
      %4256 = vst.msk [vmem:[%s278 + $0xd8] sm:$0xff] %vm335, %v4224
      %4257 = vst.msk [vmem:[%s278 + $0xe0] sm:$0xff] %vm335, %v4225
      %4258 = vst.msk [vmem:[%s278 + $0xe8] sm:$0xff] %vm335, %v4226
      %4259 = vst.msk [vmem:[%s278 + $0xf0] sm:$0xff] %vm335, %v4227
      %4260 = vst.msk [vmem:[%s278 + $0xf8] sm:$0xff] %vm335, %v4228
      %p4261 = scmp.lt.s32.totalorder %s18, 1
      %s4262 = scalar_select %p4261, %s18, 1
      %s4263 = smul.addr %s4262, 32
      %s4264 = smul.addr %s4263, 8
      %s4265 = scalar_lea.vmem %s7, %s4264
      // Predicated region
      $region49: #{tpu_custom_call.1} parent=47 // pred_check
        %p4266 = pneg %p188
      $region50: #{tpu_custom_call.1} parent=47 // pred_check_branch
        %4268 = sbr.rel (%p4266) target = $region52
      $region51: #{tpu_custom_call.1} parent=47 // pred_region
        _
      $region52: #{tpu_custom_call.1} parent=47 // pred_fallthru
        _
    $region48: #{tpu_custom_call.1} parent=5 // pred_fallthru
      _
    %p4269 = scmp.le.s32.totalorder 2, %s13
    // Predicated region
    $region53: #{tpu_custom_call.1} parent=5 // pred_check
      %p4270 = pneg %p4269
    $region54: #{tpu_custom_call.1} parent=5 // pred_check_branch
      %4272 = sbr.rel (%p4270) target = $region56
    $region55: #{tpu_custom_call.1} parent=5 // pred_region
      %s4273 = ssub.s32 %s13, 2
      // Predicated region
      $region57: #{tpu_custom_call.1} parent=55 // pred_check
        %p4274 = pneg %p194
      $region58: #{tpu_custom_call.1} parent=55 // pred_check_branch
        %4276 = sbr.rel (%p4274) target = $region60
      $region59: #{tpu_custom_call.1} parent=55 // pred_region
        %p4277 = scmp.lt.s32.totalorder %s19, 1
        %s4278 = scalar_select %p4277, %s19, 1
        %s4279 = smul.addr %s4278, 32
        %s4280 = smul.addr %s4279, 8
        %s4281 = scalar_lea.vmem %s7, %s4280
      $region60: #{tpu_custom_call.1} parent=55 // pred_fallthru
        _
    $region56: #{tpu_custom_call.1} parent=5 // pred_fallthru
      _
  $region6: #{tpu_custom_call.1} parent=0 // loop_footer
    %s17 = sadd.s32 1, %s13
  $region7: #{tpu_custom_call.1} parent=0 // loop_footer_branch
    %12 = sbr.rel target = $region3
  $region8: #{tpu_custom_call.1} parent=0 // loop_exit
    _

</llo_original>
